<compile_context>
chip_gen: v6e
topology: v6e:2x2x1
jax: 0.10.0
libtpu: 0.0.40
codegen_flags: <defaults>
</compile_context>

<pallas_src>
import functools
import math

import jax
import jax.numpy as jnp
from jax.experimental import pallas as pl
from jax.experimental.pallas import tpu as pltpu

# ----------------------------------------------------------------------------
# Model hyper-parameters (global N mirrors the module-level `N = 6` that the
# reference Encoder.forward actually uses).
# ----------------------------------------------------------------------------
N_LAYERS = 6
MODEL_DIM = 32
HEADS = 4
FF_DIM = 2048          # FeedForward default ff_dim=2048
SRC_VOCAB = 48
TGT_VOCAB = 50
PAD_VOCAB = 128        # lane-dense padded logits width (sliced back to 50)
BATCH = 2
SEQ = 8
MAX_SEQ_LEN = 80
EPS = 1e-6


# ----------------------------------------------------------------------------
# Fused whole-stack kernel: one grid step = one EncoderLayer of one stack.
# ----------------------------------------------------------------------------
def _fused_stack_kernel(x0_ref, mask_ref, wqkv_ref, bqkv_ref, wo_ref, bo_ref,
                        w1_ref, b1_ref, w2_ref, b2_ref, nrm_ref, fnrm_ref,
                        wout_ref, bout_ref,
                        logits_ref,
                        x_scr,
                        *, n_layers, heads, eps):
    l = pl.program_id(1)
    M, D = x_scr.shape
    B = mask_ref.shape[1]
    S = M // B
    dk = D // heads
    scale = 1.0 / math.sqrt(dk)

    def norm(x, alpha, bias):
        # alpha * (x - mean) / (std_unbiased + eps) + bias   (torch.std: n-1)
        mean = jnp.mean(x, axis=-1, keepdims=True)
        c = x - mean
        var = jnp.sum(c * c, axis=-1, keepdims=True) * (1.0 / (D - 1))
        inv = pl.reciprocal(jnp.sqrt(var) + eps, approx=True)   # EUP slot
        return alpha * c * inv + bias

    # --- initialize the residual carry from the embedded input at layer 0 ----
    @pl.when(l == 0)
    def _():
        x_scr[...] = x0_ref[0]

    x = x_scr[...]                                   # (M, D) f32 residual stream
    nrm = nrm_ref[0, 0]                              # (4, D): n1_a, n1_b, n2_a, n2_b

    # --- sub-layer 1: pre-norm multi-head self-attention + residual ----------
    xn = norm(x, nrm[0:1, :], nrm[1:2, :])           # (M, D)
    qkv = jnp.dot(xn, wqkv_ref[0, 0],
                  preferred_element_type=jnp.float32) + bqkv_ref[0, 0]   # (M, 3D)
    q = qkv[:, 0 * D:1 * D].reshape(B, S, D)
    k = qkv[:, 1 * D:2 * D].reshape(B, S, D)
    v = qkv[:, 2 * D:3 * D].reshape(B, S, D)
    mask3 = mask_ref[0][:, None, :]                  # (B, 1, S) key-padding mask
    wo = wo_ref[0, 0]                                # (D, D)

    attn_out = None
    for h in range(heads):                           # static unroll, H = 4
        sl = slice(h * dk, (h + 1) * dk)
        sc = jnp.einsum("bqd,bkd->bqk", q[:, :, sl], k[:, :, sl],
                        preferred_element_type=jnp.float32) * scale      # (B,S,S)
        sc = jnp.where(mask3 == 0.0, -1e9, sc)
        sc = sc - jnp.max(sc, axis=-1, keepdims=True)
        e = jnp.exp(sc)
        p = e * pl.reciprocal(jnp.sum(e, axis=-1, keepdims=True), approx=True)
        oh = jnp.einsum("bqk,bkd->bqd", p, v[:, :, sl],
                        preferred_element_type=jnp.float32).reshape(M, dk)
        # output projection folded per head:  concat @ Wo == sum_h oh @ Wo[h]
        contrib = jnp.dot(oh, wo[sl, :], preferred_element_type=jnp.float32)
        attn_out = contrib if attn_out is None else attn_out + contrib
    x = x + attn_out + bo_ref[0, 0]

    # --- sub-layer 2: pre-norm feed-forward + residual (intermediate in VMEM)-
    xn2 = norm(x, nrm[2:3, :], nrm[3:4, :])
    h1 = jnp.dot(xn2.astype(jnp.bfloat16), w1_ref[0, 0],
                 preferred_element_type=jnp.float32) + b1_ref[0, 0]      # (M, FF)
    h1 = jnp.maximum(h1, 0.0)
    y = jnp.dot(h1.astype(jnp.bfloat16), w2_ref[0, 0],
                preferred_element_type=jnp.float32) + b2_ref[0, 0]       # (M, D)
    x = x + y
    x_scr[...] = x

    # --- final Norm + (lane-padded) output projection at the last layer ------
    @pl.when(l == n_layers - 1)
    def _():
        fn = fnrm_ref[0]                             # (2, D): alpha, bias
        xf = norm(x, fn[0:1, :], fn[1:2, :])
        logits_ref[0] = (jnp.dot(xf, wout_ref[...],
                                 preferred_element_type=jnp.float32)
                         + bout_ref[...])            # (M, PAD_VOCAB), lane-dense


def fused_stacks(x0, masks, p):
    """Run encoder + decoder stacks (and the output head) in ONE pallas_call."""
    n_stack, M, D = x0.shape
    B, S = masks.shape[1], masks.shape[2]

    kernel = functools.partial(_fused_stack_kernel,
                               n_layers=N_LAYERS, heads=HEADS, eps=EPS)

    def per_layer(*tail):        # weights indexed by (stack, layer)
        return pl.BlockSpec((1, 1) + tail, lambda s, l, _t=len(tail): (s, l) + (0,) * _t)

    def per_stack(*tail):        # data indexed by stack only (resident across layers)
        return pl.BlockSpec((1,) + tail, lambda s, l, _t=len(tail): (s,) + (0,) * _t)

    def shared(*tail):           # shared across the whole grid
        return pl.BlockSpec(tail, lambda s, l, _t=len(tail): (0,) * _t)

    return pl.pallas_call(
        kernel,
        out_shape=jax.ShapeDtypeStruct((n_stack, M, PAD_VOCAB), jnp.float32),
        grid=(n_stack, N_LAYERS),
        in_specs=[
            per_stack(M, D),             # x0      : embedded + pos-enc input
            per_stack(B, S),             # masks   : key padding mask
            per_layer(D, 3 * D),         # W_QKV   (fused q/k/v projection)
            per_layer(1, 3 * D),         # B_QKV
            per_layer(D, D),             # W_O
            per_layer(1, D),             # B_O
            per_layer(D, FF_DIM),        # W1 (bf16)
            per_layer(1, FF_DIM),        # B1
            per_layer(FF_DIM, D),        # W2 (bf16)
            per_layer(1, D),             # B2
            per_layer(4, D),             # layer norm params [n1_a, n1_b, n2_a, n2_b]
            per_stack(2, D),             # final norm params [alpha, bias]
            shared(D, PAD_VOCAB),        # W_OUT (padded to 128 lanes)
            shared(1, PAD_VOCAB),        # B_OUT
        ],
        out_specs=pl.BlockSpec((1, M, PAD_VOCAB), lambda s, l: (s, 0, 0)),
        scratch_shapes=[pltpu.VMEM((M, D), jnp.float32)],   # residual carry
        compiler_params=pltpu.CompilerParams(
            # stack axis parallel (2 TCs on v7x), layer axis carries state
            dimension_semantics=("parallel", "arbitrary")),
    )(x0, masks, p["W_QKV"], p["B_QKV"], p["W_O"], p["B_O"],
      p["W1"], p["B1"], p["W2"], p["B2"], p["NORM"], p["FNORM"],
      p["W_OUT"], p["B_OUT"])


# ----------------------------------------------------------------------------
# Plain-JAX glue: embedding gather + positional encoding, then ONE kernel call.
# ----------------------------------------------------------------------------
def make_positional_encoding(max_len, d):
    # mirrors the (non-standard) exponent in the reference PositionalEncoder
    pe = [[0.0] * d for _ in range(max_len)]
    for pos in range(max_len):
        for i in range(0, d, 2):
            pe[pos][i] = math.sin(pos / 10000 ** (2 * i / d))
            pe[pos][i + 1] = math.cos(pos / 10000 ** (2 * (i + 1) / d))
    return jnp.asarray(pe, dtype=jnp.float32)[None]          # (1, max_len, d)


@jax.jit
def transformer_forward(params, source, target, source_mask, target_mask):
    B, S = source.shape
    D = MODEL_DIM
    # Embed + scale + positional encoding (gather stays in XLA).
    x_src = params["enc_embed"][source] * math.sqrt(D) + params["pe"][:, :S]
    x_tgt = params["dec_embed"][target] * math.sqrt(D) + params["pe"][:, :S]
    x0 = jnp.stack([x_src.reshape(B * S, D), x_tgt.reshape(B * S, D)], axis=0)
    masks = jnp.stack([source_mask.reshape(B, S),
                       target_mask.reshape(B, S)], axis=0).astype(jnp.float32)
    logits = fused_stacks(x0, masks, params)                 # (2, B*S, PAD_VOCAB)
    # decoder stack's logits, un-pad the vocab dimension
    return logits[1, :, :TGT_VOCAB].reshape(B, S, TGT_VOCAB)


# ----------------------------------------------------------------------------
# Deterministic parameter initialization (stacked per (stack, layer)).
# ----------------------------------------------------------------------------
def init_params(key):
    keys = iter(jax.random.split(key, 64))
    D, F_, NL = MODEL_DIM, FF_DIM, N_LAYERS

    def randn(shape, scale=1.0):
        return jax.random.normal(next(keys), shape, jnp.float32) * scale

    def stack_weights():
        s = 1.0 / math.sqrt(D)
        return dict(
            W_QKV=randn((NL, D, 3 * D), s),
            B_QKV=randn((NL, 1, 3 * D), 0.01),
            W_O=randn((NL, D, D), s),
            B_O=randn((NL, 1, D), 0.01),
            W1=randn((NL, D, F_), s),
            B1=randn((NL, 1, F_), 0.01),
            W2=randn((NL, F_, D), 1.0 / math.sqrt(F_)),
            B2=randn((NL, 1, D), 0.01),
            NORM=jnp.ones((NL, 4, D), jnp.float32),   # n1_a, n1_b, n2_a, n2_b (ones)
        )

    enc, dec = stack_weights(), stack_weights()
    params = {k: jnp.stack([enc[k], dec[k]], axis=0) for k in enc}
    # bf16 for the FFN weights (the dominant HBM bytes); matmuls accumulate f32
    params["W1"] = params["W1"].astype(jnp.bfloat16)
    params["W2"] = params["W2"].astype(jnp.bfloat16)
    params["FNORM"] = jnp.ones((2, 2, D), jnp.float32)        # final Norm per stack
    params["enc_embed"] = randn((SRC_VOCAB, D))
    params["dec_embed"] = randn((TGT_VOCAB, D))
    params["pe"] = make_positional_encoding(MAX_SEQ_LEN, D)
    w_out = randn((D, TGT_VOCAB), 1.0 / math.sqrt(D))
    b_out = randn((1, TGT_VOCAB), 0.01)
    params["W_OUT"] = jnp.zeros((D, PAD_VOCAB), jnp.float32).at[:, :TGT_VOCAB].set(w_out)
    params["B_OUT"] = jnp.zeros((1, PAD_VOCAB), jnp.float32).at[:, :TGT_VOCAB].set(b_out)
    return params


# ----------------------------------------------------------------------------
# Main
# ----------------------------------------------------------------------------
if __name__ == "__main__":
    root = jax.random.PRNGKey(0)
    k_params, k_src, k_tgt = jax.random.split(root, 3)

    params = init_params(k_params)

    source = jax.random.randint(k_src, (BATCH, SEQ), 0, SRC_VOCAB, dtype=jnp.int32)
    target = jax.random.randint(k_tgt, (BATCH, SEQ), 0, TGT_VOCAB, dtype=jnp.int32)

    source_mask = jnp.ones((BATCH, 1, SEQ), jnp.int32)
    target_mask = jnp.ones((BATCH, 1, SEQ), jnp.int32).at[:, :, -2:].set(0)

    out = transformer_forward(params, source, target, source_mask, target_mask)
    out = jax.block_until_ready(out)

    assert out.shape == (BATCH, SEQ, TGT_VOCAB), out.shape
    assert bool(jnp.all(jnp.isfinite(out)))
    print("KERNEL_OK")
</pallas_src>

<mosaic_0001>
module attributes {stable_mosaic.version = 11 : i64} {
  func.func @_fused_stack_kernel(%arg0: i32, %arg1: i32, %arg2: memref<1x16x32xf32, #tpu.memory_space<vmem>>, %arg3: memref<1x2x8xf32, #tpu.memory_space<vmem>>, %arg4: memref<1x1x32x96xf32, #tpu.memory_space<vmem>>, %arg5: memref<1x1x1x96xf32, #tpu.memory_space<vmem>>, %arg6: memref<1x1x32x32xf32, #tpu.memory_space<vmem>>, %arg7: memref<1x1x1x32xf32, #tpu.memory_space<vmem>>, %arg8: memref<1x1x32x2048xbf16, #tpu.memory_space<vmem>>, %arg9: memref<1x1x1x2048xf32, #tpu.memory_space<vmem>>, %arg10: memref<1x1x2048x32xbf16, #tpu.memory_space<vmem>>, %arg11: memref<1x1x1x32xf32, #tpu.memory_space<vmem>>, %arg12: memref<1x1x4x32xf32, #tpu.memory_space<vmem>>, %arg13: memref<1x2x32xf32, #tpu.memory_space<vmem>>, %arg14: memref<32x128xf32, #tpu.memory_space<vmem>>, %arg15: memref<1x128xf32, #tpu.memory_space<vmem>>, %arg16: memref<1x16x128xf32, #tpu.memory_space<vmem>>, %arg17: memref<16x32xf32, #tpu.memory_space<vmem>>) attributes {dimension_semantics = [#tpu.dimension_semantics<parallel>, #tpu.dimension_semantics<arbitrary>], iteration_bounds = array<i64: 2, 6>, scalar_prefetch = 0 : i64, scratch_operands = 1 : i64, tpu.core_type = #tpu.core_type<tc>, window_params = [{transform_indices = @transform_0, window_bounds = array<i64: 1, 16, 32>}, {transform_indices = @transform_1, window_bounds = array<i64: 1, 2, 8>}, {transform_indices = @transform_2, window_bounds = array<i64: 1, 1, 32, 96>}, {transform_indices = @transform_3, window_bounds = array<i64: 1, 1, 1, 96>}, {transform_indices = @transform_4, window_bounds = array<i64: 1, 1, 32, 32>}, {transform_indices = @transform_5, window_bounds = array<i64: 1, 1, 1, 32>}, {transform_indices = @transform_6, window_bounds = array<i64: 1, 1, 32, 2048>}, {transform_indices = @transform_7, window_bounds = array<i64: 1, 1, 1, 2048>}, {transform_indices = @transform_8, window_bounds = array<i64: 1, 1, 2048, 32>}, {transform_indices = @transform_9, window_bounds = array<i64: 1, 1, 1, 32>}, {transform_indices = @transform_10, window_bounds = array<i64: 1, 1, 4, 32>}, {transform_indices = @transform_11, window_bounds = array<i64: 1, 2, 32>}, {pipeline_mode = #tpu.pipeline_mode<synchronous>, transform_indices = @transform_12, window_bounds = array<i64: 32, 128>}, {pipeline_mode = #tpu.pipeline_mode<synchronous>, transform_indices = @transform_13, window_bounds = array<i64: 1, 128>}, {transform_indices = @transform_14, window_bounds = array<i64: 1, 16, 128>}]} {
    %c0_i32 = arith.constant 0 : i32
    %0 = arith.cmpi eq, %arg1, %c0_i32 : i32
    %1 = arith.extui %0 : i1 to i32
    %c0_i32_0 = arith.constant 0 : i32
    %2 = arith.cmpi ne, %1, %c0_i32_0 : i32
    scf.if %2 {
      %c0_89 = arith.constant 0 : index
      %c0_90 = arith.constant 0 : index
      %c0_91 = arith.constant 0 : index
      %205 = vector.load %arg2[%c0_89, %c0_90, %c0_91] : memref<1x16x32xf32, #tpu.memory_space<vmem>>, vector<1x16x32xf32>
      %206 = vector.shape_cast %205 : vector<1x16x32xf32> to vector<16x32xf32>
      %c0_92 = arith.constant 0 : index
      %c0_93 = arith.constant 0 : index
      %207 = vector.load %arg17[%c0_92, %c0_93] : memref<16x32xf32, #tpu.memory_space<vmem>>, vector<16x32xf32>
      tpu.vector_store %arg17[%c0_92, %c0_93], %206 {strides = array<i32>} : memref<16x32xf32, #tpu.memory_space<vmem>>, vector<16x32xf32>,
    } else {
    }
    %c0 = arith.constant 0 : index
    %c0_1 = arith.constant 0 : index
    %3 = vector.load %arg17[%c0, %c0_1] : memref<16x32xf32, #tpu.memory_space<vmem>>, vector<16x32xf32>
    %c0_2 = arith.constant 0 : index
    %c0_3 = arith.constant 0 : index
    %c0_4 = arith.constant 0 : index
    %c0_5 = arith.constant 0 : index
    %4 = vector.load %arg12[%c0_2, %c0_3, %c0_4, %c0_5] : memref<1x1x4x32xf32, #tpu.memory_space<vmem>>, vector<1x1x4x32xf32>
    %5 = vector.shape_cast %4 : vector<1x1x4x32xf32> to vector<4x32xf32>
    %6 = vector.extract_strided_slice %5 {offsets = [0, 0], sizes = [1, 32], strides = [1, 1]} : vector<4x32xf32> to vector<1x32xf32>
    %7 = vector.extract_strided_slice %5 {offsets = [1, 0], sizes = [1, 32], strides = [1, 1]} : vector<4x32xf32> to vector<1x32xf32>
    %cst = arith.constant dense<0.000000e+00> : vector<16xf32>
    %8 = vector.multi_reduction <add>, %3, %cst [1] : vector<16x32xf32> to vector<16xf32>
    %9 = vector.shape_cast %8 : vector<16xf32> to vector<16x1xf32>
    %cst_6 = arith.constant 3.200000e+01 : f32
    %10 = vector.broadcast %cst_6 : f32 to vector<16x1xf32>
    %11 = arith.divf %9, %10 : vector<16x1xf32>
    %12 = vector.broadcast %11 : vector<16x1xf32> to vector<16x32xf32>
    %13 = arith.subf %3, %12 : vector<16x32xf32>
    %14 = arith.mulf %13, %13 : vector<16x32xf32>
    %cst_7 = arith.constant dense<0.000000e+00> : vector<16xf32>
    %15 = vector.multi_reduction <add>, %14, %cst_7 [1] : vector<16x32xf32> to vector<16xf32>
    %16 = vector.shape_cast %15 : vector<16xf32> to vector<16x1xf32>
    %cst_8 = arith.constant 0.0322580636 : f32
    %17 = vector.broadcast %cst_8 : f32 to vector<16x1xf32>
    %18 = arith.mulf %16, %17 : vector<16x1xf32>
    %19 = math.sqrt %18 : vector<16x1xf32>
    %cst_9 = arith.constant 9.99999997E-7 : f32
    %20 = vector.broadcast %cst_9 : f32 to vector<16x1xf32>
    %21 = arith.addf %19, %20 : vector<16x1xf32>
    %22 = tpu.reciprocal %21 {approx = true} : vector<16x1xf32> -> vector<16x1xf32>
    %23 = vector.broadcast %6 : vector<1x32xf32> to vector<16x32xf32>
    %24 = arith.mulf %23, %13 : vector<16x32xf32>
    %25 = vector.broadcast %22 : vector<16x1xf32> to vector<16x32xf32>
    %26 = arith.mulf %24, %25 : vector<16x32xf32>
    %27 = vector.broadcast %7 : vector<1x32xf32> to vector<16x32xf32>
    %28 = arith.addf %26, %27 : vector<16x32xf32>
    %c0_10 = arith.constant 0 : index
    %c0_11 = arith.constant 0 : index
    %c0_12 = arith.constant 0 : index
    %c0_13 = arith.constant 0 : index
    %29 = vector.load %arg4[%c0_10, %c0_11, %c0_12, %c0_13] : memref<1x1x32x96xf32, #tpu.memory_space<vmem>>, vector<1x1x32x96xf32>
    %30 = vector.shape_cast %29 : vector<1x1x32x96xf32> to vector<32x96xf32>
    %cst_14 = arith.constant dense<0.000000e+00> : vector<16x96xf32>
    %31 = tpu.matmul %28, %30, %cst_14 {dimension_numbers = #tpu.dot_dimension_numbers<[1], [0], [0], [1], [0, 0, 1, 1], [], []>} : vector<16x32xf32>, vector<32x96xf32>, vector<16x96xf32> -> vector<16x96xf32>
    %c0_15 = arith.constant 0 : index
    %c0_16 = arith.constant 0 : index
    %c0_17 = arith.constant 0 : index
    %c0_18 = arith.constant 0 : index
    %32 = vector.load %arg5[%c0_15, %c0_16, %c0_17, %c0_18] : memref<1x1x1x96xf32, #tpu.memory_space<vmem>>, vector<1x1x1x96xf32>
    %33 = vector.shape_cast %32 : vector<1x1x1x96xf32> to vector<1x96xf32>
    %34 = vector.broadcast %33 : vector<1x96xf32> to vector<16x96xf32>
    %35 = arith.addf %31, %34 : vector<16x96xf32>
    %36 = vector.extract_strided_slice %35 {offsets = [0, 0], sizes = [16, 32], strides = [1, 1]} : vector<16x96xf32> to vector<16x32xf32>
    %37 = vector.shape_cast %36 : vector<16x32xf32> to vector<2x8x32xf32>
    %38 = vector.extract_strided_slice %35 {offsets = [0, 32], sizes = [16, 32], strides = [1, 1]} : vector<16x96xf32> to vector<16x32xf32>
    %39 = vector.shape_cast %38 : vector<16x32xf32> to vector<2x8x32xf32>
    %40 = vector.extract_strided_slice %35 {offsets = [0, 64], sizes = [16, 32], strides = [1, 1]} : vector<16x96xf32> to vector<16x32xf32>
    %41 = vector.shape_cast %40 : vector<16x32xf32> to vector<2x8x32xf32>
    %c0_19 = arith.constant 0 : index
    %c0_20 = arith.constant 0 : index
    %c0_21 = arith.constant 0 : index
    %42 = vector.load %arg3[%c0_19, %c0_20, %c0_21] : memref<1x2x8xf32, #tpu.memory_space<vmem>>, vector<1x2x8xf32>
    %43 = vector.shape_cast %42 : vector<1x2x8xf32> to vector<2x8xf32>
    %44 = vector.shape_cast %43 : vector<2x8xf32> to vector<2x1x8xf32>
    %c0_22 = arith.constant 0 : index
    %c0_23 = arith.constant 0 : index
    %c0_24 = arith.constant 0 : index
    %c0_25 = arith.constant 0 : index
    %45 = vector.load %arg6[%c0_22, %c0_23, %c0_24, %c0_25] : memref<1x1x32x32xf32, #tpu.memory_space<vmem>>, vector<1x1x32x32xf32>
    %46 = vector.shape_cast %45 : vector<1x1x32x32xf32> to vector<32x32xf32>
    %47 = vector.extract_strided_slice %37 {offsets = [0, 0, 0], sizes = [2, 8, 8], strides = [1, 1, 1]} : vector<2x8x32xf32> to vector<2x8x8xf32>
    %48 = vector.extract_strided_slice %39 {offsets = [0, 0, 0], sizes = [2, 8, 8], strides = [1, 1, 1]} : vector<2x8x32xf32> to vector<2x8x8xf32>
    "tpu.trace_start"() <{level = 10 : i32, message = "bqd,bkd->bqk"}> : () -> ()
    %cst_26 = arith.constant dense<0.000000e+00> : vector<2x8x8xf32>
    %49 = tpu.matmul %47, %48, %cst_26 {dimension_numbers = #tpu.dot_dimension_numbers<[2], [2], [1], [1], [0, 0, 0, 1, 1, 1], [0], [0]>} : vector<2x8x8xf32>, vector<2x8x8xf32>, vector<2x8x8xf32> -> vector<2x8x8xf32>
    "tpu.trace_stop"() : () -> ()
    %cst_27 = arith.constant 0.353553385 : f32
    %50 = vector.broadcast %cst_27 : f32 to vector<2x8x8xf32>
    %51 = arith.mulf %49, %50 : vector<2x8x8xf32>
    %cst_28 = arith.constant 0.000000e+00 : f32
    %52 = vector.broadcast %cst_28 : f32 to vector<2x1x8xf32>
    %53 = arith.cmpf oeq, %44, %52 : vector<2x1x8xf32>
    %cst_29 = arith.constant -1.000000e+09 : f32
    %54 = vector.shape_cast %53 : vector<2x1x8xi1> to vector<2x1x8xi1>
    %55 = vector.broadcast %54 : vector<2x1x8xi1> to vector<2x8x8xi1>
    %56 = vector.broadcast %cst_29 : f32 to vector<2x8x8xf32>
    %57 = arith.select %55, %56, %51 : vector<2x8x8xi1>, vector<2x8x8xf32>
    %cst_30 = arith.constant dense<0xFF800000> : vector<2x8xf32>
    %58 = vector.multi_reduction <maximumf>, %57, %cst_30 [2] : vector<2x8x8xf32> to vector<2x8xf32>
    %59 = vector.shape_cast %58 : vector<2x8xf32> to vector<2x8x1xf32>
    %60 = vector.broadcast %59 : vector<2x8x1xf32> to vector<2x8x8xf32>
    %61 = arith.subf %57, %60 : vector<2x8x8xf32>
    %62 = math.exp %61 : vector<2x8x8xf32>
    %cst_31 = arith.constant dense<0.000000e+00> : vector<2x8xf32>
    %63 = vector.multi_reduction <add>, %62, %cst_31 [2] : vector<2x8x8xf32> to vector<2x8xf32>
    %64 = vector.shape_cast %63 : vector<2x8xf32> to vector<2x8x1xf32>
    %65 = tpu.reciprocal %64 {approx = true} : vector<2x8x1xf32> -> vector<2x8x1xf32>
    %66 = vector.broadcast %65 : vector<2x8x1xf32> to vector<2x8x8xf32>
    %67 = arith.mulf %62, %66 : vector<2x8x8xf32>
    %68 = vector.extract_strided_slice %41 {offsets = [0, 0, 0], sizes = [2, 8, 8], strides = [1, 1, 1]} : vector<2x8x32xf32> to vector<2x8x8xf32>
    "tpu.trace_start"() <{level = 10 : i32, message = "bqk,bkd->bqd"}> : () -> ()
    %cst_32 = arith.constant dense<0.000000e+00> : vector<2x8x8xf32>
    %69 = tpu.matmul %67, %68, %cst_32 {dimension_numbers = #tpu.dot_dimension_numbers<[2], [1], [1], [2], [0, 0, 0, 1, 1, 2], [0], [0]>} : vector<2x8x8xf32>, vector<2x8x8xf32>, vector<2x8x8xf32> -> vector<2x8x8xf32>
    "tpu.trace_stop"() : () -> ()
    %70 = vector.shape_cast %69 : vector<2x8x8xf32> to vector<16x8xf32>
    %71 = vector.extract_strided_slice %46 {offsets = [0, 0], sizes = [8, 32], strides = [1, 1]} : vector<32x32xf32> to vector<8x32xf32>
    %cst_33 = arith.constant dense<0.000000e+00> : vector<16x32xf32>
    %72 = tpu.matmul %70, %71, %cst_33 {dimension_numbers = #tpu.dot_dimension_numbers<[1], [0], [0], [1], [0, 0, 1, 1], [], []>} : vector<16x8xf32>, vector<8x32xf32>, vector<16x32xf32> -> vector<16x32xf32>
    %73 = vector.extract_strided_slice %37 {offsets = [0, 0, 8], sizes = [2, 8, 8], strides = [1, 1, 1]} : vector<2x8x32xf32> to vector<2x8x8xf32>
    %74 = vector.extract_strided_slice %39 {offsets = [0, 0, 8], sizes = [2, 8, 8], strides = [1, 1, 1]} : vector<2x8x32xf32> to vector<2x8x8xf32>
    "tpu.trace_start"() <{level = 10 : i32, message = "bqd,bkd->bqk"}> : () -> ()
    %cst_34 = arith.constant dense<0.000000e+00> : vector<2x8x8xf32>
    %75 = tpu.matmul %73, %74, %cst_34 {dimension_numbers = #tpu.dot_dimension_numbers<[2], [2], [1], [1], [0, 0, 0, 1, 1, 1], [0], [0]>} : vector<2x8x8xf32>, vector<2x8x8xf32>, vector<2x8x8xf32> -> vector<2x8x8xf32>
    "tpu.trace_stop"() : () -> ()
    %cst_35 = arith.constant 0.353553385 : f32
    %76 = vector.broadcast %cst_35 : f32 to vector<2x8x8xf32>
    %77 = arith.mulf %75, %76 : vector<2x8x8xf32>
    %cst_36 = arith.constant 0.000000e+00 : f32
    %78 = vector.broadcast %cst_36 : f32 to vector<2x1x8xf32>
    %79 = arith.cmpf oeq, %44, %78 : vector<2x1x8xf32>
    %cst_37 = arith.constant -1.000000e+09 : f32
    %80 = vector.shape_cast %79 : vector<2x1x8xi1> to vector<2x1x8xi1>
    %81 = vector.broadcast %80 : vector<2x1x8xi1> to vector<2x8x8xi1>
    %82 = vector.broadcast %cst_37 : f32 to vector<2x8x8xf32>
    %83 = arith.select %81, %82, %77 : vector<2x8x8xi1>, vector<2x8x8xf32>
    %cst_38 = arith.constant dense<0xFF800000> : vector<2x8xf32>
    %84 = vector.multi_reduction <maximumf>, %83, %cst_38 [2] : vector<2x8x8xf32> to vector<2x8xf32>
    %85 = vector.shape_cast %84 : vector<2x8xf32> to vector<2x8x1xf32>
    %86 = vector.broadcast %85 : vector<2x8x1xf32> to vector<2x8x8xf32>
    %87 = arith.subf %83, %86 : vector<2x8x8xf32>
    %88 = math.exp %87 : vector<2x8x8xf32>
    %cst_39 = arith.constant dense<0.000000e+00> : vector<2x8xf32>
    %89 = vector.multi_reduction <add>, %88, %cst_39 [2] : vector<2x8x8xf32> to vector<2x8xf32>
    %90 = vector.shape_cast %89 : vector<2x8xf32> to vector<2x8x1xf32>
    %91 = tpu.reciprocal %90 {approx = true} : vector<2x8x1xf32> -> vector<2x8x1xf32>
    %92 = vector.broadcast %91 : vector<2x8x1xf32> to vector<2x8x8xf32>
    %93 = arith.mulf %88, %92 : vector<2x8x8xf32>
    %94 = vector.extract_strided_slice %41 {offsets = [0, 0, 8], sizes = [2, 8, 8], strides = [1, 1, 1]} : vector<2x8x32xf32> to vector<2x8x8xf32>
    "tpu.trace_start"() <{level = 10 : i32, message = "bqk,bkd->bqd"}> : () -> ()
    %cst_40 = arith.constant dense<0.000000e+00> : vector<2x8x8xf32>
    %95 = tpu.matmul %93, %94, %cst_40 {dimension_numbers = #tpu.dot_dimension_numbers<[2], [1], [1], [2], [0, 0, 0, 1, 1, 2], [0], [0]>} : vector<2x8x8xf32>, vector<2x8x8xf32>, vector<2x8x8xf32> -> vector<2x8x8xf32>
    "tpu.trace_stop"() : () -> ()
    %96 = vector.shape_cast %95 : vector<2x8x8xf32> to vector<16x8xf32>
    %97 = vector.extract_strided_slice %46 {offsets = [8, 0], sizes = [8, 32], strides = [1, 1]} : vector<32x32xf32> to vector<8x32xf32>
    %cst_41 = arith.constant dense<0.000000e+00> : vector<16x32xf32>
    %98 = tpu.matmul %96, %97, %cst_41 {dimension_numbers = #tpu.dot_dimension_numbers<[1], [0], [0], [1], [0, 0, 1, 1], [], []>} : vector<16x8xf32>, vector<8x32xf32>, vector<16x32xf32> -> vector<16x32xf32>
    %99 = arith.addf %72, %98 : vector<16x32xf32>
    %100 = vector.extract_strided_slice %37 {offsets = [0, 0, 16], sizes = [2, 8, 8], strides = [1, 1, 1]} : vector<2x8x32xf32> to vector<2x8x8xf32>
    %101 = vector.extract_strided_slice %39 {offsets = [0, 0, 16], sizes = [2, 8, 8], strides = [1, 1, 1]} : vector<2x8x32xf32> to vector<2x8x8xf32>
    "tpu.trace_start"() <{level = 10 : i32, message = "bqd,bkd->bqk"}> : () -> ()
    %cst_42 = arith.constant dense<0.000000e+00> : vector<2x8x8xf32>
    %102 = tpu.matmul %100, %101, %cst_42 {dimension_numbers = #tpu.dot_dimension_numbers<[2], [2], [1], [1], [0, 0, 0, 1, 1, 1], [0], [0]>} : vector<2x8x8xf32>, vector<2x8x8xf32>, vector<2x8x8xf32> -> vector<2x8x8xf32>
    "tpu.trace_stop"() : () -> ()
    %cst_43 = arith.constant 0.353553385 : f32
    %103 = vector.broadcast %cst_43 : f32 to vector<2x8x8xf32>
    %104 = arith.mulf %102, %103 : vector<2x8x8xf32>
    %cst_44 = arith.constant 0.000000e+00 : f32
    %105 = vector.broadcast %cst_44 : f32 to vector<2x1x8xf32>
    %106 = arith.cmpf oeq, %44, %105 : vector<2x1x8xf32>
    %cst_45 = arith.constant -1.000000e+09 : f32
    %107 = vector.shape_cast %106 : vector<2x1x8xi1> to vector<2x1x8xi1>
    %108 = vector.broadcast %107 : vector<2x1x8xi1> to vector<2x8x8xi1>
    %109 = vector.broadcast %cst_45 : f32 to vector<2x8x8xf32>
    %110 = arith.select %108, %109, %104 : vector<2x8x8xi1>, vector<2x8x8xf32>
    %cst_46 = arith.constant dense<0xFF800000> : vector<2x8xf32>
    %111 = vector.multi_reduction <maximumf>, %110, %cst_46 [2] : vector<2x8x8xf32> to vector<2x8xf32>
    %112 = vector.shape_cast %111 : vector<2x8xf32> to vector<2x8x1xf32>
    %113 = vector.broadcast %112 : vector<2x8x1xf32> to vector<2x8x8xf32>
    %114 = arith.subf %110, %113 : vector<2x8x8xf32>
    %115 = math.exp %114 : vector<2x8x8xf32>
    %cst_47 = arith.constant dense<0.000000e+00> : vector<2x8xf32>
    %116 = vector.multi_reduction <add>, %115, %cst_47 [2] : vector<2x8x8xf32> to vector<2x8xf32>
    %117 = vector.shape_cast %116 : vector<2x8xf32> to vector<2x8x1xf32>
    %118 = tpu.reciprocal %117 {approx = true} : vector<2x8x1xf32> -> vector<2x8x1xf32>
    %119 = vector.broadcast %118 : vector<2x8x1xf32> to vector<2x8x8xf32>
    %120 = arith.mulf %115, %119 : vector<2x8x8xf32>
    %121 = vector.extract_strided_slice %41 {offsets = [0, 0, 16], sizes = [2, 8, 8], strides = [1, 1, 1]} : vector<2x8x32xf32> to vector<2x8x8xf32>
    "tpu.trace_start"() <{level = 10 : i32, message = "bqk,bkd->bqd"}> : () -> ()
    %cst_48 = arith.constant dense<0.000000e+00> : vector<2x8x8xf32>
    %122 = tpu.matmul %120, %121, %cst_48 {dimension_numbers = #tpu.dot_dimension_numbers<[2], [1], [1], [2], [0, 0, 0, 1, 1, 2], [0], [0]>} : vector<2x8x8xf32>, vector<2x8x8xf32>, vector<2x8x8xf32> -> vector<2x8x8xf32>
    "tpu.trace_stop"() : () -> ()
    %123 = vector.shape_cast %122 : vector<2x8x8xf32> to vector<16x8xf32>
    %124 = vector.extract_strided_slice %46 {offsets = [16, 0], sizes = [8, 32], strides = [1, 1]} : vector<32x32xf32> to vector<8x32xf32>
    %cst_49 = arith.constant dense<0.000000e+00> : vector<16x32xf32>
    %125 = tpu.matmul %123, %124, %cst_49 {dimension_numbers = #tpu.dot_dimension_numbers<[1], [0], [0], [1], [0, 0, 1, 1], [], []>} : vector<16x8xf32>, vector<8x32xf32>, vector<16x32xf32> -> vector<16x32xf32>
    %126 = arith.addf %99, %125 : vector<16x32xf32>
    %127 = vector.extract_strided_slice %37 {offsets = [0, 0, 24], sizes = [2, 8, 8], strides = [1, 1, 1]} : vector<2x8x32xf32> to vector<2x8x8xf32>
    %128 = vector.extract_strided_slice %39 {offsets = [0, 0, 24], sizes = [2, 8, 8], strides = [1, 1, 1]} : vector<2x8x32xf32> to vector<2x8x8xf32>
    "tpu.trace_start"() <{level = 10 : i32, message = "bqd,bkd->bqk"}> : () -> ()
    %cst_50 = arith.constant dense<0.000000e+00> : vector<2x8x8xf32>
    %129 = tpu.matmul %127, %128, %cst_50 {dimension_numbers = #tpu.dot_dimension_numbers<[2], [2], [1], [1], [0, 0, 0, 1, 1, 1], [0], [0]>} : vector<2x8x8xf32>, vector<2x8x8xf32>, vector<2x8x8xf32> -> vector<2x8x8xf32>
    "tpu.trace_stop"() : () -> ()
    %cst_51 = arith.constant 0.353553385 : f32
    %130 = vector.broadcast %cst_51 : f32 to vector<2x8x8xf32>
    %131 = arith.mulf %129, %130 : vector<2x8x8xf32>
    %cst_52 = arith.constant 0.000000e+00 : f32
    %132 = vector.broadcast %cst_52 : f32 to vector<2x1x8xf32>
    %133 = arith.cmpf oeq, %44, %132 : vector<2x1x8xf32>
    %cst_53 = arith.constant -1.000000e+09 : f32
    %134 = vector.shape_cast %133 : vector<2x1x8xi1> to vector<2x1x8xi1>
    %135 = vector.broadcast %134 : vector<2x1x8xi1> to vector<2x8x8xi1>
    %136 = vector.broadcast %cst_53 : f32 to vector<2x8x8xf32>
    %137 = arith.select %135, %136, %131 : vector<2x8x8xi1>, vector<2x8x8xf32>
    %cst_54 = arith.constant dense<0xFF800000> : vector<2x8xf32>
    %138 = vector.multi_reduction <maximumf>, %137, %cst_54 [2] : vector<2x8x8xf32> to vector<2x8xf32>
    %139 = vector.shape_cast %138 : vector<2x8xf32> to vector<2x8x1xf32>
    %140 = vector.broadcast %139 : vector<2x8x1xf32> to vector<2x8x8xf32>
    %141 = arith.subf %137, %140 : vector<2x8x8xf32>
    %142 = math.exp %141 : vector<2x8x8xf32>
    %cst_55 = arith.constant dense<0.000000e+00> : vector<2x8xf32>
    %143 = vector.multi_reduction <add>, %142, %cst_55 [2] : vector<2x8x8xf32> to vector<2x8xf32>
    %144 = vector.shape_cast %143 : vector<2x8xf32> to vector<2x8x1xf32>
    %145 = tpu.reciprocal %144 {approx = true} : vector<2x8x1xf32> -> vector<2x8x1xf32>
    %146 = vector.broadcast %145 : vector<2x8x1xf32> to vector<2x8x8xf32>
    %147 = arith.mulf %142, %146 : vector<2x8x8xf32>
    %148 = vector.extract_strided_slice %41 {offsets = [0, 0, 24], sizes = [2, 8, 8], strides = [1, 1, 1]} : vector<2x8x32xf32> to vector<2x8x8xf32>
    "tpu.trace_start"() <{level = 10 : i32, message = "bqk,bkd->bqd"}> : () -> ()
    %cst_56 = arith.constant dense<0.000000e+00> : vector<2x8x8xf32>
    %149 = tpu.matmul %147, %148, %cst_56 {dimension_numbers = #tpu.dot_dimension_numbers<[2], [1], [1], [2], [0, 0, 0, 1, 1, 2], [0], [0]>} : vector<2x8x8xf32>, vector<2x8x8xf32>, vector<2x8x8xf32> -> vector<2x8x8xf32>
    "tpu.trace_stop"() : () -> ()
    %150 = vector.shape_cast %149 : vector<2x8x8xf32> to vector<16x8xf32>
    %151 = vector.extract_strided_slice %46 {offsets = [24, 0], sizes = [8, 32], strides = [1, 1]} : vector<32x32xf32> to vector<8x32xf32>
    %cst_57 = arith.constant dense<0.000000e+00> : vector<16x32xf32>
    %152 = tpu.matmul %150, %151, %cst_57 {dimension_numbers = #tpu.dot_dimension_numbers<[1], [0], [0], [1], [0, 0, 1, 1], [], []>} : vector<16x8xf32>, vector<8x32xf32>, vector<16x32xf32> -> vector<16x32xf32>
    %153 = arith.addf %126, %152 : vector<16x32xf32>
    %154 = arith.addf %3, %153 : vector<16x32xf32>
    %c0_58 = arith.constant 0 : index
    %c0_59 = arith.constant 0 : index
    %c0_60 = arith.constant 0 : index
    %c0_61 = arith.constant 0 : index
    %155 = vector.load %arg7[%c0_58, %c0_59, %c0_60, %c0_61] : memref<1x1x1x32xf32, #tpu.memory_space<vmem>>, vector<1x1x1x32xf32>
    %156 = vector.shape_cast %155 : vector<1x1x1x32xf32> to vector<1x32xf32>
    %157 = vector.broadcast %156 : vector<1x32xf32> to vector<16x32xf32>
    %158 = arith.addf %154, %157 : vector<16x32xf32>
    %159 = vector.extract_strided_slice %5 {offsets = [2, 0], sizes = [1, 32], strides = [1, 1]} : vector<4x32xf32> to vector<1x32xf32>
    %160 = vector.extract_strided_slice %5 {offsets = [3, 0], sizes = [1, 32], strides = [1, 1]} : vector<4x32xf32> to vector<1x32xf32>
    %cst_62 = arith.constant dense<0.000000e+00> : vector<16xf32>
    %161 = vector.multi_reduction <add>, %158, %cst_62 [1] : vector<16x32xf32> to vector<16xf32>
    %162 = vector.shape_cast %161 : vector<16xf32> to vector<16x1xf32>
    %cst_63 = arith.constant 3.200000e+01 : f32
    %163 = vector.broadcast %cst_63 : f32 to vector<16x1xf32>
    %164 = arith.divf %162, %163 : vector<16x1xf32>
    %165 = vector.broadcast %164 : vector<16x1xf32> to vector<16x32xf32>
    %166 = arith.subf %158, %165 : vector<16x32xf32>
    %167 = arith.mulf %166, %166 : vector<16x32xf32>
    %cst_64 = arith.constant dense<0.000000e+00> : vector<16xf32>
    %168 = vector.multi_reduction <add>, %167, %cst_64 [1] : vector<16x32xf32> to vector<16xf32>
    %169 = vector.shape_cast %168 : vector<16xf32> to vector<16x1xf32>
    %cst_65 = arith.constant 0.0322580636 : f32
    %170 = vector.broadcast %cst_65 : f32 to vector<16x1xf32>
    %171 = arith.mulf %169, %170 : vector<16x1xf32>
    %172 = math.sqrt %171 : vector<16x1xf32>
    %cst_66 = arith.constant 9.99999997E-7 : f32
    %173 = vector.broadcast %cst_66 : f32 to vector<16x1xf32>
    %174 = arith.addf %172, %173 : vector<16x1xf32>
    %175 = tpu.reciprocal %174 {approx = true} : vector<16x1xf32> -> vector<16x1xf32>
    %176 = vector.broadcast %159 : vector<1x32xf32> to vector<16x32xf32>
    %177 = arith.mulf %176, %166 : vector<16x32xf32>
    %178 = vector.broadcast %175 : vector<16x1xf32> to vector<16x32xf32>
    %179 = arith.mulf %177, %178 : vector<16x32xf32>
    %180 = vector.broadcast %160 : vector<1x32xf32> to vector<16x32xf32>
    %181 = arith.addf %179, %180 : vector<16x32xf32>
    %182 = arith.truncf %181 : vector<16x32xf32> to vector<16x32xbf16>
    %c0_67 = arith.constant 0 : index
    %c0_68 = arith.constant 0 : index
    %c0_69 = arith.constant 0 : index
    %c0_70 = arith.constant 0 : index
    %183 = vector.load %arg8[%c0_67, %c0_68, %c0_69, %c0_70] : memref<1x1x32x2048xbf16, #tpu.memory_space<vmem>>, vector<1x1x32x2048xbf16>
    %184 = vector.shape_cast %183 : vector<1x1x32x2048xbf16> to vector<32x2048xbf16>
    %cst_71 = arith.constant dense<0.000000e+00> : vector<16x2048xf32>
    %185 = tpu.matmul %182, %184, %cst_71 {dimension_numbers = #tpu.dot_dimension_numbers<[1], [0], [0], [1], [0, 0, 1, 1], [], []>} : vector<16x32xbf16>, vector<32x2048xbf16>, vector<16x2048xf32> -> vector<16x2048xf32>
    %c0_72 = arith.constant 0 : index
    %c0_73 = arith.constant 0 : index
    %c0_74 = arith.constant 0 : index
    %c0_75 = arith.constant 0 : index
    %186 = vector.load %arg9[%c0_72, %c0_73, %c0_74, %c0_75] : memref<1x1x1x2048xf32, #tpu.memory_space<vmem>>, vector<1x1x1x2048xf32>
    %187 = vector.shape_cast %186 : vector<1x1x1x2048xf32> to vector<1x2048xf32>
    %188 = vector.broadcast %187 : vector<1x2048xf32> to vector<16x2048xf32>
    %189 = arith.addf %185, %188 : vector<16x2048xf32>
    %cst_76 = arith.constant 0.000000e+00 : f32
    %190 = vector.broadcast %cst_76 : f32 to vector<16x2048xf32>
    %191 = arith.maximumf %189, %190 : vector<16x2048xf32>
    %192 = arith.truncf %191 : vector<16x2048xf32> to vector<16x2048xbf16>
    %c0_77 = arith.constant 0 : index
    %c0_78 = arith.constant 0 : index
    %c0_79 = arith.constant 0 : index
    %c0_80 = arith.constant 0 : index
    %193 = vector.load %arg10[%c0_77, %c0_78, %c0_79, %c0_80] : memref<1x1x2048x32xbf16, #tpu.memory_space<vmem>>, vector<1x1x2048x32xbf16>
    %194 = vector.shape_cast %193 : vector<1x1x2048x32xbf16> to vector<2048x32xbf16>
    %cst_81 = arith.constant dense<0.000000e+00> : vector<16x32xf32>
    %195 = tpu.matmul %192, %194, %cst_81 {dimension_numbers = #tpu.dot_dimension_numbers<[1], [0], [0], [1], [0, 0, 1, 1], [], []>} : vector<16x2048xbf16>, vector<2048x32xbf16>, vector<16x32xf32> -> vector<16x32xf32>
    %c0_82 = arith.constant 0 : index
    %c0_83 = arith.constant 0 : index
    %c0_84 = arith.constant 0 : index
    %c0_85 = arith.constant 0 : index
    %196 = vector.load %arg11[%c0_82, %c0_83, %c0_84, %c0_85] : memref<1x1x1x32xf32, #tpu.memory_space<vmem>>, vector<1x1x1x32xf32>
    %197 = vector.shape_cast %196 : vector<1x1x1x32xf32> to vector<1x32xf32>
    %198 = vector.broadcast %197 : vector<1x32xf32> to vector<16x32xf32>
    %199 = arith.addf %195, %198 : vector<16x32xf32>
    %200 = arith.addf %158, %199 : vector<16x32xf32>
    %c0_86 = arith.constant 0 : index
    %c0_87 = arith.constant 0 : index
    %201 = vector.load %arg17[%c0_86, %c0_87] : memref<16x32xf32, #tpu.memory_space<vmem>>, vector<16x32xf32>
    tpu.vector_store %arg17[%c0_86, %c0_87], %200 {strides = array<i32>} : memref<16x32xf32, #tpu.memory_space<vmem>>, vector<16x32xf32>,
    %c5_i32 = arith.constant 5 : i32
    %202 = arith.cmpi eq, %arg1, %c5_i32 : i32
    %203 = arith.extui %202 : i1 to i32
    %c0_i32_88 = arith.constant 0 : i32
    %204 = arith.cmpi ne, %203, %c0_i32_88 : i32
    scf.if %204 {
      %c0_89 = arith.constant 0 : index
      %c0_90 = arith.constant 0 : index
      %c0_91 = arith.constant 0 : index
      %205 = vector.load %arg13[%c0_89, %c0_90, %c0_91] : memref<1x2x32xf32, #tpu.memory_space<vmem>>, vector<1x2x32xf32>
      %206 = vector.shape_cast %205 : vector<1x2x32xf32> to vector<2x32xf32>
      %207 = vector.extract_strided_slice %206 {offsets = [0, 0], sizes = [1, 32], strides = [1, 1]} : vector<2x32xf32> to vector<1x32xf32>
      %208 = vector.extract_strided_slice %206 {offsets = [1, 0], sizes = [1, 32], strides = [1, 1]} : vector<2x32xf32> to vector<1x32xf32>
      %cst_92 = arith.constant dense<0.000000e+00> : vector<16xf32>
      %209 = vector.multi_reduction <add>, %200, %cst_92 [1] : vector<16x32xf32> to vector<16xf32>
      %210 = vector.shape_cast %209 : vector<16xf32> to vector<16x1xf32>
      %cst_93 = arith.constant 3.200000e+01 : f32
      %211 = vector.broadcast %cst_93 : f32 to vector<16x1xf32>
      %212 = arith.divf %210, %211 : vector<16x1xf32>
      %213 = vector.broadcast %212 : vector<16x1xf32> to vector<16x32xf32>
      %214 = arith.subf %200, %213 : vector<16x32xf32>
      %215 = arith.mulf %214, %214 : vector<16x32xf32>
      %cst_94 = arith.constant dense<0.000000e+00> : vector<16xf32>
      %216 = vector.multi_reduction <add>, %215, %cst_94 [1] : vector<16x32xf32> to vector<16xf32>
      %217 = vector.shape_cast %216 : vector<16xf32> to vector<16x1xf32>
      %cst_95 = arith.constant 0.0322580636 : f32
      %218 = vector.broadcast %cst_95 : f32 to vector<16x1xf32>
      %219 = arith.mulf %217, %218 : vector<16x1xf32>
      %220 = math.sqrt %219 : vector<16x1xf32>
      %cst_96 = arith.constant 9.99999997E-7 : f32
      %221 = vector.broadcast %cst_96 : f32 to vector<16x1xf32>
      %222 = arith.addf %220, %221 : vector<16x1xf32>
      %223 = tpu.reciprocal %222 {approx = true} : vector<16x1xf32> -> vector<16x1xf32>
      %224 = vector.broadcast %207 : vector<1x32xf32> to vector<16x32xf32>
      %225 = arith.mulf %224, %214 : vector<16x32xf32>
      %226 = vector.broadcast %223 : vector<16x1xf32> to vector<16x32xf32>
      %227 = arith.mulf %225, %226 : vector<16x32xf32>
      %228 = vector.broadcast %208 : vector<1x32xf32> to vector<16x32xf32>
      %229 = arith.addf %227, %228 : vector<16x32xf32>
      %c0_97 = arith.constant 0 : index
      %c0_98 = arith.constant 0 : index
      %230 = vector.load %arg14[%c0_97, %c0_98] : memref<32x128xf32, #tpu.memory_space<vmem>>, vector<32x128xf32>
      %cst_99 = arith.constant dense<0.000000e+00> : vector<16x128xf32>
      %231 = tpu.matmul %229, %230, %cst_99 {dimension_numbers = #tpu.dot_dimension_numbers<[1], [0], [0], [1], [0, 0, 1, 1], [], []>} : vector<16x32xf32>, vector<32x128xf32>, vector<16x128xf32> -> vector<16x128xf32>
      %c0_100 = arith.constant 0 : index
      %c0_101 = arith.constant 0 : index
      %232 = vector.load %arg15[%c0_100, %c0_101] : memref<1x128xf32, #tpu.memory_space<vmem>>, vector<1x128xf32>
      %233 = vector.broadcast %232 : vector<1x128xf32> to vector<16x128xf32>
      %234 = arith.addf %231, %233 : vector<16x128xf32>
      %c0_102 = arith.constant 0 : index
      %c0_103 = arith.constant 0 : index
      %c0_104 = arith.constant 0 : index
      %235 = vector.load %arg16[%c0_102, %c0_103, %c0_104] : memref<1x16x128xf32, #tpu.memory_space<vmem>>, vector<1x16x128xf32>
      %236 = vector.shape_cast %235 : vector<1x16x128xf32> to vector<16x128xf32>
      %237 = vector.shape_cast %234 : vector<16x128xf32> to vector<1x16x128xf32>
      tpu.vector_store %arg16[%c0_102, %c0_103, %c0_104], %237 {strides = array<i32>} : memref<1x16x128xf32, #tpu.memory_space<vmem>>, vector<1x16x128xf32>,
    } else {
    }
    return
  }
  func.func @transform_0(%arg0: i32, %arg1: i32) -> (i32, i32, i32) {
    %c0_i32 = arith.constant 0 : i32
    %c0_i32_0 = arith.constant 0 : i32
    %c0_i32_1 = arith.constant 0 : i32
    return %arg0, %c0_i32, %c0_i32_0 : i32, i32, i32
  }
  func.func @transform_1(%arg0: i32, %arg1: i32) -> (i32, i32, i32) {
    %c0_i32 = arith.constant 0 : i32
    %c0_i32_0 = arith.constant 0 : i32
    %c0_i32_1 = arith.constant 0 : i32
    return %arg0, %c0_i32, %c0_i32_0 : i32, i32, i32
  }
  func.func @transform_2(%arg0: i32, %arg1: i32) -> (i32, i32, i32, i32) {
    %c0_i32 = arith.constant 0 : i32
    %c0_i32_0 = arith.constant 0 : i32
    %c0_i32_1 = arith.constant 0 : i32
    return %arg0, %arg1, %c0_i32, %c0_i32_0 : i32, i32, i32, i32
  }
  func.func @transform_3(%arg0: i32, %arg1: i32) -> (i32, i32, i32, i32) {
    %c0_i32 = arith.constant 0 : i32
    %c0_i32_0 = arith.constant 0 : i32
    %c0_i32_1 = arith.constant 0 : i32
    return %arg0, %arg1, %c0_i32, %c0_i32_0 : i32, i32, i32, i32
  }
  func.func @transform_4(%arg0: i32, %arg1: i32) -> (i32, i32, i32, i32) {
    %c0_i32 = arith.constant 0 : i32
    %c0_i32_0 = arith.constant 0 : i32
    %c0_i32_1 = arith.constant 0 : i32
    return %arg0, %arg1, %c0_i32, %c0_i32_0 : i32, i32, i32, i32
  }
  func.func @transform_5(%arg0: i32, %arg1: i32) -> (i32, i32, i32, i32) {
    %c0_i32 = arith.constant 0 : i32
    %c0_i32_0 = arith.constant 0 : i32
    %c0_i32_1 = arith.constant 0 : i32
    return %arg0, %arg1, %c0_i32, %c0_i32_0 : i32, i32, i32, i32
  }
  func.func @transform_6(%arg0: i32, %arg1: i32) -> (i32, i32, i32, i32) {
    %c0_i32 = arith.constant 0 : i32
    %c0_i32_0 = arith.constant 0 : i32
    %c0_i32_1 = arith.constant 0 : i32
    return %arg0, %arg1, %c0_i32, %c0_i32_0 : i32, i32, i32, i32
  }
  func.func @transform_7(%arg0: i32, %arg1: i32) -> (i32, i32, i32, i32) {
    %c0_i32 = arith.constant 0 : i32
    %c0_i32_0 = arith.constant 0 : i32
    %c0_i32_1 = arith.constant 0 : i32
    return %arg0, %arg1, %c0_i32, %c0_i32_0 : i32, i32, i32, i32
  }
  func.func @transform_8(%arg0: i32, %arg1: i32) -> (i32, i32, i32, i32) {
    %c0_i32 = arith.constant 0 : i32
    %c0_i32_0 = arith.constant 0 : i32
    %c0_i32_1 = arith.constant 0 : i32
    return %arg0, %arg1, %c0_i32, %c0_i32_0 : i32, i32, i32, i32
  }
  func.func @transform_9(%arg0: i32, %arg1: i32) -> (i32, i32, i32, i32) {
    %c0_i32 = arith.constant 0 : i32
    %c0_i32_0 = arith.constant 0 : i32
    %c0_i32_1 = arith.constant 0 : i32
    return %arg0, %arg1, %c0_i32, %c0_i32_0 : i32, i32, i32, i32
  }
  func.func @transform_10(%arg0: i32, %arg1: i32) -> (i32, i32, i32, i32) {
    %c0_i32 = arith.constant 0 : i32
    %c0_i32_0 = arith.constant 0 : i32
    %c0_i32_1 = arith.constant 0 : i32
    return %arg0, %arg1, %c0_i32, %c0_i32_0 : i32, i32, i32, i32
  }
  func.func @transform_11(%arg0: i32, %arg1: i32) -> (i32, i32, i32) {
    %c0_i32 = arith.constant 0 : i32
    %c0_i32_0 = arith.constant 0 : i32
    %c0_i32_1 = arith.constant 0 : i32
    return %arg0, %c0_i32, %c0_i32_0 : i32, i32, i32
  }
  func.func @transform_12(%arg0: i32, %arg1: i32) -> (i32, i32) {
    %c0_i32 = arith.constant 0 : i32
    %c0_i32_0 = arith.constant 0 : i32
    %c0_i32_1 = arith.constant 0 : i32
    return %c0_i32, %c0_i32_0 : i32, i32
  }
  func.func @transform_13(%arg0: i32, %arg1: i32) -> (i32, i32) {
    %c0_i32 = arith.constant 0 : i32
    %c0_i32_0 = arith.constant 0 : i32
    %c0_i32_1 = arith.constant 0 : i32
    return %c0_i32, %c0_i32_0 : i32, i32
  }
  func.func @transform_14(%arg0: i32, %arg1: i32) -> (i32, i32, i32) {
    %c0_i32 = arith.constant 0 : i32
    %c0_i32_0 = arith.constant 0 : i32
    %c0_i32_1 = arith.constant 0 : i32
    return %arg0, %c0_i32, %c0_i32_0 : i32, i32, i32
  }
}

</mosaic_0001>

<llo_original>
// kernel: transformer_forward.1
$region0: #{transformer_forward.1}
  #allocation0 [shape = 'u32[]', space=smem, size = 0x4, offset = 0x4, fixed_abs, tag = 'smem constant byte address 0x4 - core index']
  #allocation1 [shape = 'u32[144,128]{1,0:T(1,128)}', space=vmem, size = 0x12000, scoped, tag = 'internal scratch']
  #allocation2 [shape = 'f32[16,32]{1,0:T(8,128)}', space=vmem, size = 0x2000, scoped, tag = 'scratch operand']
  %s0 = inlined_call_operand.vmem [shape: f32[2,16,32], index: 0, kind: input, shape index: {}]
  %s1 = inlined_call_operand.vmem [shape: f32[2,2,8], index: 1, kind: input, shape index: {}]
  %s2 = inlined_call_operand.vmem [shape: f32[2,6,32,96], index: 2, kind: input, shape index: {}]
  %s3 = inlined_call_operand.vmem [shape: f32[2,6,1,96], index: 3, kind: input, shape index: {}]
  %s4 = inlined_call_operand.vmem [shape: f32[2,6,32,32], index: 4, kind: input, shape index: {}]
  %s5 = inlined_call_operand.vmem [shape: f32[2,6,1,32], index: 5, kind: input, shape index: {}]
  %s6 = inlined_call_operand.vmem [shape: bf16[2,6,32,2048], index: 6, kind: input, shape index: {}]
  %s7 = inlined_call_operand.vmem [shape: f32[2,6,1,2048], index: 7, kind: input, shape index: {}]
  %s8 = inlined_call_operand.vmem [shape: bf16[2,6,2048,32], index: 8, kind: input, shape index: {}]
  %s9 = inlined_call_operand.vmem [shape: f32[2,6,1,32], index: 9, kind: input, shape index: {}]
  %s10 = inlined_call_operand.vmem [shape: f32[2,6,4,32], index: 10, kind: input, shape index: {}]
  %s11 = inlined_call_operand.vmem [shape: f32[2,2,32], index: 11, kind: input, shape index: {}]
  %s12 = inlined_call_operand.vmem [shape: f32[32,128], index: 12, kind: input, shape index: {}]
  %s13 = inlined_call_operand.vmem [shape: f32[1,128], index: 13, kind: input, shape index: {}]
  %s14 = inlined_call_operand.vmem [shape: f32[2,16,128], index: 14, kind: output, shape index: {}]
  %s15 = sld [smem:[#allocation0]]
  $region97: #{transformer_forward.1} parent=0
    _
  %s17 = ssub.s32 1, %s15
  %s18 = scalar_select 0, %s17, %s15
  loop: start=0, step=1, limit=14
  $region2: #{transformer_forward.1} parent=0 // loop_pre_header
    _
  $region3: #{transformer_forward.1} parent=0 // loop_header
    %s20 = sphi 0, %s24
    %p21 = scmp.ge.s32.totalorder %s20, 14
    %s27 = sphi 0, %s39
    %s28 = sphi 0, %s35
    %s29 = sphi 0, %s27
    %s30 = sphi 0, %s28
    %s31 = sphi 0, %s29
    %s32 = sphi 0, %s30
    %s42 = sphi 0, %s44
    %s45 = sphi 0, %s42
    %s46 = sphi 0, %s45
    %s62 = sphi 0, %s46
    %s68 = sphi 0, %s70
    %s71 = sphi 0, %s68
    %s72 = sphi 0, %s71
    %s88 = sphi 0, %s72
    %s96 = sphi 0, %s98
    %s99 = sphi 0, %s96
    %s100 = sphi 0, %s99
    %s116 = sphi 0, %s100
    %s124 = sphi 0, %s126
    %s127 = sphi 0, %s124
    %s128 = sphi 0, %s127
    %s144 = sphi 0, %s128
    %s152 = sphi 0, %s154
    %s155 = sphi 0, %s152
    %s156 = sphi 0, %s155
    %s172 = sphi 0, %s156
    %s180 = sphi 0, %s182
    %s183 = sphi 0, %s180
    %s184 = sphi 0, %s183
    %s200 = sphi 0, %s184
    %s208 = sphi 0, %s210
    %s211 = sphi 0, %s208
    %s212 = sphi 0, %s211
    %s228 = sphi 0, %s212
    %s236 = sphi 0, %s238
    %s239 = sphi 0, %s236
    %s240 = sphi 0, %s239
    %s256 = sphi 0, %s240
    %s264 = sphi 0, %s266
    %s267 = sphi 0, %s264
    %s268 = sphi 0, %s267
    %s284 = sphi 0, %s268
    %s292 = sphi 0, %s294
    %s295 = sphi 0, %s292
    %s296 = sphi 0, %s295
    %s312 = sphi 0, %s296
    %s320 = sphi 0, %s322
    %s323 = sphi 0, %s320
    %s324 = sphi 0, %s323
    %s340 = sphi 0, %s324
    %s346 = sphi 0, %s348
    %s349 = sphi 0, %s346
    %s350 = sphi 0, %s349
    %s366 = sphi 0, %s350
    %s370 = sphi 0, %s370
    %s372 = sphi 0, %s370
    %s373 = sphi 0, %s372
    %s387 = sphi 0, %s373
    %s391 = sphi 0, %s391
    %s393 = sphi 0, %s391
    %s394 = sphi 0, %s393
    %s408 = sphi 0, %s394
    %s414 = sphi 0, %s416
    %s417 = sphi 0, %s414
    %s418 = sphi 0, %s417
    %s434 = sphi 0, %s418
  $region4: #{transformer_forward.1} parent=0 // loop_header_branch
    %23 = sbr.rel (%p21) target = $region8
  $region5: #{transformer_forward.1} parent=0 // loop_body
    %s25 = ssub.s32 %s20, 1
    %s26 = ssub.s32 %s20, 2
    %s33 = sadd.s32 1, %s28
    %p34 = scmp.ge.s32.totalorder %s33, 6
    %s35 = scalar_select %p34, 0, %s33
    %s36 = sadd.s32 1, %s27
    %s37 = scalar_select %p34, %s36, %s27
    %p38 = scmp.ge.s32.totalorder %s37, 2
    %s39 = scalar_select %p38, 0, %s37
    %s40 = ssub.s32 %s27, %s39
    %p41 = scmp.eq.s32.totalorder %s40, 0
    %s43 = sadd.s32 %s42, 1
    %s44 = scalar_select %p41, %s42, %s43
    %p47 = pneg %p41
    %p48 = scmp.eq.s32.totalorder %s20, 11
    %p49 = por %p47, %p48
    %p50 = scmp.ne.s32.totalorder %s42, %s45
    %p51 = scmp.eq.s32.totalorder %s20, 0
    %p52 = por %p50, %p51
    %p53 = scmp.ne.s32.totalorder %s42, %s45
    %p54 = scmp.eq.s32.totalorder %s25, 11
    %p55 = por %p53, %p54
    %p56 = scmp.ne.s32.totalorder %s45, %s46
    %p57 = scmp.eq.s32.totalorder %s25, 0
    %p58 = por %p56, %p57
    %p59 = scmp.ne.s32.totalorder %s45, %s46
    %p60 = scmp.eq.s32.totalorder %s26, 11
    %p61 = por %p59, %p60
    %p63 = scmp.ne.s32.totalorder %s46, %s62
    %p64 = scmp.eq.s32.totalorder %s26, 0
    %p65 = por %p63, %p64
    %s66 = ssub.s32 %s27, %s39
    %p67 = scmp.eq.s32.totalorder %s66, 0
    %s69 = sadd.s32 %s68, 1
    %s70 = scalar_select %p67, %s68, %s69
    %p73 = pneg %p67
    %p74 = scmp.eq.s32.totalorder %s20, 11
    %p75 = por %p73, %p74
    %p76 = scmp.ne.s32.totalorder %s68, %s71
    %p77 = scmp.eq.s32.totalorder %s20, 0
    %p78 = por %p76, %p77
    %p79 = scmp.ne.s32.totalorder %s68, %s71
    %p80 = scmp.eq.s32.totalorder %s25, 11
    %p81 = por %p79, %p80
    %p82 = scmp.ne.s32.totalorder %s71, %s72
    %p83 = scmp.eq.s32.totalorder %s25, 0
    %p84 = por %p82, %p83
    %p85 = scmp.ne.s32.totalorder %s71, %s72
    %p86 = scmp.eq.s32.totalorder %s26, 11
    %p87 = por %p85, %p86
    %p89 = scmp.ne.s32.totalorder %s72, %s88
    %p90 = scmp.eq.s32.totalorder %s26, 0
    %p91 = por %p89, %p90
    %s92 = ssub.s32 %s27, %s39
    %s93 = ssub.s32 %s28, %s35
    %s94 = sor.u32 %s92, %s93
    %p95 = scmp.eq.s32.totalorder %s94, 0
    %s97 = sadd.s32 %s96, 1
    %s98 = scalar_select %p95, %s96, %s97
    %p101 = pneg %p95
    %p102 = scmp.eq.s32.totalorder %s20, 11
    %p103 = por %p101, %p102
    %p104 = scmp.ne.s32.totalorder %s96, %s99
    %p105 = scmp.eq.s32.totalorder %s20, 0
    %p106 = por %p104, %p105
    %p107 = scmp.ne.s32.totalorder %s96, %s99
    %p108 = scmp.eq.s32.totalorder %s25, 11
    %p109 = por %p107, %p108
    %p110 = scmp.ne.s32.totalorder %s99, %s100
    %p111 = scmp.eq.s32.totalorder %s25, 0
    %p112 = por %p110, %p111
    %p113 = scmp.ne.s32.totalorder %s99, %s100
    %p114 = scmp.eq.s32.totalorder %s26, 11
    %p115 = por %p113, %p114
    %p117 = scmp.ne.s32.totalorder %s100, %s116
    %p118 = scmp.eq.s32.totalorder %s26, 0
    %p119 = por %p117, %p118
    %s120 = ssub.s32 %s27, %s39
    %s121 = ssub.s32 %s28, %s35
    %s122 = sor.u32 %s120, %s121
    %p123 = scmp.eq.s32.totalorder %s122, 0
    %s125 = sadd.s32 %s124, 1
    %s126 = scalar_select %p123, %s124, %s125
    %p129 = pneg %p123
    %p130 = scmp.eq.s32.totalorder %s20, 11
    %p131 = por %p129, %p130
    %p132 = scmp.ne.s32.totalorder %s124, %s127
    %p133 = scmp.eq.s32.totalorder %s20, 0
    %p134 = por %p132, %p133
    %p135 = scmp.ne.s32.totalorder %s124, %s127
    %p136 = scmp.eq.s32.totalorder %s25, 11
    %p137 = por %p135, %p136
    %p138 = scmp.ne.s32.totalorder %s127, %s128
    %p139 = scmp.eq.s32.totalorder %s25, 0
    %p140 = por %p138, %p139
    %p141 = scmp.ne.s32.totalorder %s127, %s128
    %p142 = scmp.eq.s32.totalorder %s26, 11
    %p143 = por %p141, %p142
    %p145 = scmp.ne.s32.totalorder %s128, %s144
    %p146 = scmp.eq.s32.totalorder %s26, 0
    %p147 = por %p145, %p146
    %s148 = ssub.s32 %s27, %s39
    %s149 = ssub.s32 %s28, %s35
    %s150 = sor.u32 %s148, %s149
    %p151 = scmp.eq.s32.totalorder %s150, 0
    %s153 = sadd.s32 %s152, 1
    %s154 = scalar_select %p151, %s152, %s153
    %p157 = pneg %p151
    %p158 = scmp.eq.s32.totalorder %s20, 11
    %p159 = por %p157, %p158
    %p160 = scmp.ne.s32.totalorder %s152, %s155
    %p161 = scmp.eq.s32.totalorder %s20, 0
    %p162 = por %p160, %p161
    %p163 = scmp.ne.s32.totalorder %s152, %s155
    %p164 = scmp.eq.s32.totalorder %s25, 11
    %p165 = por %p163, %p164
    %p166 = scmp.ne.s32.totalorder %s155, %s156
    %p167 = scmp.eq.s32.totalorder %s25, 0
    %p168 = por %p166, %p167
    %p169 = scmp.ne.s32.totalorder %s155, %s156
    %p170 = scmp.eq.s32.totalorder %s26, 11
    %p171 = por %p169, %p170
    %p173 = scmp.ne.s32.totalorder %s156, %s172
    %p174 = scmp.eq.s32.totalorder %s26, 0
    %p175 = por %p173, %p174
    %s176 = ssub.s32 %s27, %s39
    %s177 = ssub.s32 %s28, %s35
    %s178 = sor.u32 %s176, %s177
    %p179 = scmp.eq.s32.totalorder %s178, 0
    %s181 = sadd.s32 %s180, 1
    %s182 = scalar_select %p179, %s180, %s181
    %p185 = pneg %p179
    %p186 = scmp.eq.s32.totalorder %s20, 11
    %p187 = por %p185, %p186
    %p188 = scmp.ne.s32.totalorder %s180, %s183
    %p189 = scmp.eq.s32.totalorder %s20, 0
    %p190 = por %p188, %p189
    %p191 = scmp.ne.s32.totalorder %s180, %s183
    %p192 = scmp.eq.s32.totalorder %s25, 11
    %p193 = por %p191, %p192
    %p194 = scmp.ne.s32.totalorder %s183, %s184
    %p195 = scmp.eq.s32.totalorder %s25, 0
    %p196 = por %p194, %p195
    %p197 = scmp.ne.s32.totalorder %s183, %s184
    %p198 = scmp.eq.s32.totalorder %s26, 11
    %p199 = por %p197, %p198
    %p201 = scmp.ne.s32.totalorder %s184, %s200
    %p202 = scmp.eq.s32.totalorder %s26, 0
    %p203 = por %p201, %p202
    %s204 = ssub.s32 %s27, %s39
    %s205 = ssub.s32 %s28, %s35
    %s206 = sor.u32 %s204, %s205
    %p207 = scmp.eq.s32.totalorder %s206, 0
    %s209 = sadd.s32 %s208, 1
    %s210 = scalar_select %p207, %s208, %s209
    %p213 = pneg %p207
    %p214 = scmp.eq.s32.totalorder %s20, 11
    %p215 = por %p213, %p214
    %p216 = scmp.ne.s32.totalorder %s208, %s211
    %p217 = scmp.eq.s32.totalorder %s20, 0
    %p218 = por %p216, %p217
    %p219 = scmp.ne.s32.totalorder %s208, %s211
    %p220 = scmp.eq.s32.totalorder %s25, 11
    %p221 = por %p219, %p220
    %p222 = scmp.ne.s32.totalorder %s211, %s212
    %p223 = scmp.eq.s32.totalorder %s25, 0
    %p224 = por %p222, %p223
    %p225 = scmp.ne.s32.totalorder %s211, %s212
    %p226 = scmp.eq.s32.totalorder %s26, 11
    %p227 = por %p225, %p226
    %p229 = scmp.ne.s32.totalorder %s212, %s228
    %p230 = scmp.eq.s32.totalorder %s26, 0
    %p231 = por %p229, %p230
    %s232 = ssub.s32 %s27, %s39
    %s233 = ssub.s32 %s28, %s35
    %s234 = sor.u32 %s232, %s233
    %p235 = scmp.eq.s32.totalorder %s234, 0
    %s237 = sadd.s32 %s236, 1
    %s238 = scalar_select %p235, %s236, %s237
    %p241 = pneg %p235
    %p242 = scmp.eq.s32.totalorder %s20, 11
    %p243 = por %p241, %p242
    %p244 = scmp.ne.s32.totalorder %s236, %s239
    %p245 = scmp.eq.s32.totalorder %s20, 0
    %p246 = por %p244, %p245
    %p247 = scmp.ne.s32.totalorder %s236, %s239
    %p248 = scmp.eq.s32.totalorder %s25, 11
    %p249 = por %p247, %p248
    %p250 = scmp.ne.s32.totalorder %s239, %s240
    %p251 = scmp.eq.s32.totalorder %s25, 0
    %p252 = por %p250, %p251
    %p253 = scmp.ne.s32.totalorder %s239, %s240
    %p254 = scmp.eq.s32.totalorder %s26, 11
    %p255 = por %p253, %p254
    %p257 = scmp.ne.s32.totalorder %s240, %s256
    %p258 = scmp.eq.s32.totalorder %s26, 0
    %p259 = por %p257, %p258
    %s260 = ssub.s32 %s27, %s39
    %s261 = ssub.s32 %s28, %s35
    %s262 = sor.u32 %s260, %s261
    %p263 = scmp.eq.s32.totalorder %s262, 0
    %s265 = sadd.s32 %s264, 1
    %s266 = scalar_select %p263, %s264, %s265
    %p269 = pneg %p263
    %p270 = scmp.eq.s32.totalorder %s20, 11
    %p271 = por %p269, %p270
    %p272 = scmp.ne.s32.totalorder %s264, %s267
    %p273 = scmp.eq.s32.totalorder %s20, 0
    %p274 = por %p272, %p273
    %p275 = scmp.ne.s32.totalorder %s264, %s267
    %p276 = scmp.eq.s32.totalorder %s25, 11
    %p277 = por %p275, %p276
    %p278 = scmp.ne.s32.totalorder %s267, %s268
    %p279 = scmp.eq.s32.totalorder %s25, 0
    %p280 = por %p278, %p279
    %p281 = scmp.ne.s32.totalorder %s267, %s268
    %p282 = scmp.eq.s32.totalorder %s26, 11
    %p283 = por %p281, %p282
    %p285 = scmp.ne.s32.totalorder %s268, %s284
    %p286 = scmp.eq.s32.totalorder %s26, 0
    %p287 = por %p285, %p286
    %s288 = ssub.s32 %s27, %s39
    %s289 = ssub.s32 %s28, %s35
    %s290 = sor.u32 %s288, %s289
    %p291 = scmp.eq.s32.totalorder %s290, 0
    %s293 = sadd.s32 %s292, 1
    %s294 = scalar_select %p291, %s292, %s293
    %p297 = pneg %p291
    %p298 = scmp.eq.s32.totalorder %s20, 11
    %p299 = por %p297, %p298
    %p300 = scmp.ne.s32.totalorder %s292, %s295
    %p301 = scmp.eq.s32.totalorder %s20, 0
    %p302 = por %p300, %p301
    %p303 = scmp.ne.s32.totalorder %s292, %s295
    %p304 = scmp.eq.s32.totalorder %s25, 11
    %p305 = por %p303, %p304
    %p306 = scmp.ne.s32.totalorder %s295, %s296
    %p307 = scmp.eq.s32.totalorder %s25, 0
    %p308 = por %p306, %p307
    %p309 = scmp.ne.s32.totalorder %s295, %s296
    %p310 = scmp.eq.s32.totalorder %s26, 11
    %p311 = por %p309, %p310
    %p313 = scmp.ne.s32.totalorder %s296, %s312
    %p314 = scmp.eq.s32.totalorder %s26, 0
    %p315 = por %p313, %p314
    %s316 = ssub.s32 %s27, %s39
    %s317 = ssub.s32 %s28, %s35
    %s318 = sor.u32 %s316, %s317
    %p319 = scmp.eq.s32.totalorder %s318, 0
    %s321 = sadd.s32 %s320, 1
    %s322 = scalar_select %p319, %s320, %s321
    %p325 = pneg %p319
    %p326 = scmp.eq.s32.totalorder %s20, 11
    %p327 = por %p325, %p326
    %p328 = scmp.ne.s32.totalorder %s320, %s323
    %p329 = scmp.eq.s32.totalorder %s20, 0
    %p330 = por %p328, %p329
    %p331 = scmp.ne.s32.totalorder %s320, %s323
    %p332 = scmp.eq.s32.totalorder %s25, 11
    %p333 = por %p331, %p332
    %p334 = scmp.ne.s32.totalorder %s323, %s324
    %p335 = scmp.eq.s32.totalorder %s25, 0
    %p336 = por %p334, %p335
    %p337 = scmp.ne.s32.totalorder %s323, %s324
    %p338 = scmp.eq.s32.totalorder %s26, 11
    %p339 = por %p337, %p338
    %p341 = scmp.ne.s32.totalorder %s324, %s340
    %p342 = scmp.eq.s32.totalorder %s26, 0
    %p343 = por %p341, %p342
    %s344 = ssub.s32 %s27, %s39
    %p345 = scmp.eq.s32.totalorder %s344, 0
    %s347 = sadd.s32 %s346, 1
    %s348 = scalar_select %p345, %s346, %s347
    %p351 = pneg %p345
    %p352 = scmp.eq.s32.totalorder %s20, 11
    %p353 = por %p351, %p352
    %p354 = scmp.ne.s32.totalorder %s346, %s349
    %p355 = scmp.eq.s32.totalorder %s20, 0
    %p356 = por %p354, %p355
    %p357 = scmp.ne.s32.totalorder %s346, %s349
    %p358 = scmp.eq.s32.totalorder %s25, 11
    %p359 = por %p357, %p358
    %p360 = scmp.ne.s32.totalorder %s349, %s350
    %p361 = scmp.eq.s32.totalorder %s25, 0
    %p362 = por %p360, %p361
    %p363 = scmp.ne.s32.totalorder %s349, %s350
    %p364 = scmp.eq.s32.totalorder %s26, 11
    %p365 = por %p363, %p364
    %p367 = scmp.ne.s32.totalorder %s350, %s366
    %p368 = scmp.eq.s32.totalorder %s26, 0
    %p369 = por %p367, %p368
    %s371 = sadd.s32 %s370, 1
    %p374 = scmp.eq.s32.totalorder %s20, 11
    %p375 = scmp.ne.s32.totalorder %s370, %s372
    %p376 = scmp.eq.s32.totalorder %s20, 0
    %p377 = por %p375, %p376
    %p378 = scmp.ne.s32.totalorder %s370, %s372
    %p379 = scmp.eq.s32.totalorder %s25, 11
    %p380 = por %p378, %p379
    %p381 = scmp.ne.s32.totalorder %s372, %s373
    %p382 = scmp.eq.s32.totalorder %s25, 0
    %p383 = por %p381, %p382
    %p384 = scmp.ne.s32.totalorder %s372, %s373
    %p385 = scmp.eq.s32.totalorder %s26, 11
    %p386 = por %p384, %p385
    %p388 = scmp.ne.s32.totalorder %s373, %s387
    %p389 = scmp.eq.s32.totalorder %s26, 0
    %p390 = por %p388, %p389
    %s392 = sadd.s32 %s391, 1
    %p395 = scmp.eq.s32.totalorder %s20, 11
    %p396 = scmp.ne.s32.totalorder %s391, %s393
    %p397 = scmp.eq.s32.totalorder %s20, 0
    %p398 = por %p396, %p397
    %p399 = scmp.ne.s32.totalorder %s391, %s393
    %p400 = scmp.eq.s32.totalorder %s25, 11
    %p401 = por %p399, %p400
    %p402 = scmp.ne.s32.totalorder %s393, %s394
    %p403 = scmp.eq.s32.totalorder %s25, 0
    %p404 = por %p402, %p403
    %p405 = scmp.ne.s32.totalorder %s393, %s394
    %p406 = scmp.eq.s32.totalorder %s26, 11
    %p407 = por %p405, %p406
    %p409 = scmp.ne.s32.totalorder %s394, %s408
    %p410 = scmp.eq.s32.totalorder %s26, 0
    %p411 = por %p409, %p410
    %s412 = ssub.s32 %s27, %s39
    %p413 = scmp.eq.s32.totalorder %s412, 0
    %s415 = sadd.s32 %s414, 1
    %s416 = scalar_select %p413, %s414, %s415
    %p419 = pneg %p413
    %p420 = scmp.eq.s32.totalorder %s20, 11
    %p421 = por %p419, %p420
    %p422 = scmp.ne.s32.totalorder %s414, %s417
    %p423 = scmp.eq.s32.totalorder %s20, 0
    %p424 = por %p422, %p423
    %p425 = scmp.ne.s32.totalorder %s414, %s417
    %p426 = scmp.eq.s32.totalorder %s25, 11
    %p427 = por %p425, %p426
    %p428 = scmp.ne.s32.totalorder %s417, %s418
    %p429 = scmp.eq.s32.totalorder %s25, 0
    %p430 = por %p428, %p429
    %p431 = scmp.ne.s32.totalorder %s417, %s418
    %p432 = scmp.eq.s32.totalorder %s26, 11
    %p433 = por %p431, %p432
    %p435 = scmp.ne.s32.totalorder %s418, %s434
    %p436 = scmp.eq.s32.totalorder %s26, 0
    %p437 = por %p435, %p436
    %p438 = scmp.le.s32.totalorder 1, %s20
    %p439 = scmp.lt.s32.totalorder %s20, 13
    %p440 = pnand %p438, %p439
    %p441 = pneg %p440
    // Predicated region
    $region9: #{transformer_forward.1} parent=5 // pred_check
      _
    $region10: #{transformer_forward.1} parent=5 // pred_check_branch
      %443 = sbr.rel (%p440) target = $region12
    $region11: #{transformer_forward.1} parent=5 // pred_region
      %s444 = ssub.s32 %s20, 1
      // Predicated region
      $region13: #{transformer_forward.1} parent=11 // pred_check
        %p445 = pneg %p383
      $region14: #{transformer_forward.1} parent=11 // pred_check_branch
        %447 = sbr.rel (%p445) target = $region16
      $region15: #{transformer_forward.1} parent=11 // pred_region
        _
      $region16: #{transformer_forward.1} parent=11 // pred_fallthru
        _
      // Predicated region
      $region17: #{transformer_forward.1} parent=11 // pred_check
        %p448 = pneg %p404
      $region18: #{transformer_forward.1} parent=11 // pred_check_branch
        %450 = sbr.rel (%p448) target = $region20
      $region19: #{transformer_forward.1} parent=11 // pred_region
        _
      $region20: #{transformer_forward.1} parent=11 // pred_fallthru
        _
    $region12: #{transformer_forward.1} parent=5 // pred_fallthru
      _
    %p451 = scmp.lt.s32.totalorder %s20, 12
    // Predicated region
    $region21: #{transformer_forward.1} parent=5 // pred_check
      %p452 = pneg %p451
    $region22: #{transformer_forward.1} parent=5 // pred_check_branch
      %454 = sbr.rel (%p452) target = $region24
    $region23: #{transformer_forward.1} parent=5 // pred_region
      // Predicated region
      $region25: #{transformer_forward.1} parent=23 // pred_check
        %p455 = pneg %p52
      $region26: #{transformer_forward.1} parent=23 // pred_check_branch
        %457 = sbr.rel (%p455) target = $region28
      $region27: #{transformer_forward.1} parent=23 // pred_region
        %p458 = scmp.lt.s32.totalorder %s27, 1
        %s459 = scalar_select %p458, %s27, 1
        %s460 = smul.addr %s459, 2
        %s461 = smul.addr %s460, 8
        %s462 = scalar_lea.vmem %s0, %s461
      $region28: #{transformer_forward.1} parent=23 // pred_fallthru
        _
      // Predicated region
      $region29: #{transformer_forward.1} parent=23 // pred_check
        %p463 = pneg %p78
      $region30: #{transformer_forward.1} parent=23 // pred_check_branch
        %465 = sbr.rel (%p463) target = $region32
      $region31: #{transformer_forward.1} parent=23 // pred_region
        %p466 = scmp.lt.s32.totalorder %s27, 1
        %s467 = scalar_select %p466, %s27, 1
        %s468 = smul.addr %s467, 2
        %s469 = scalar_lea.vmem %s1, %s468
      $region32: #{transformer_forward.1} parent=23 // pred_fallthru
        _
      // Predicated region
      $region33: #{transformer_forward.1} parent=23 // pred_check
        %p470 = pneg %p106
      $region34: #{transformer_forward.1} parent=23 // pred_check_branch
        %472 = sbr.rel (%p470) target = $region36
      $region35: #{transformer_forward.1} parent=23 // pred_region
        %p473 = scmp.lt.s32.totalorder %s27, 1
        %s474 = scalar_select %p473, %s27, 1
        %p475 = scmp.lt.s32.totalorder %s28, 5
        %s476 = scalar_select %p475, %s28, 5
        %s477 = smul.addr %s476, 4
        %s478 = smul.addr %s474, 24
        %s479 = sadd.s32 %s477, %s478
        %s480 = smul.addr %s479, 8
        %s481 = scalar_lea.vmem %s2, %s480
      $region36: #{transformer_forward.1} parent=23 // pred_fallthru
        _
      // Predicated region
      $region37: #{transformer_forward.1} parent=23 // pred_check
        %p482 = pneg %p134
      $region38: #{transformer_forward.1} parent=23 // pred_check_branch
        %484 = sbr.rel (%p482) target = $region40
      $region39: #{transformer_forward.1} parent=23 // pred_region
        %p485 = scmp.lt.s32.totalorder %s27, 1
        %s486 = scalar_select %p485, %s27, 1
        %p487 = scmp.lt.s32.totalorder %s28, 5
        %s488 = scalar_select %p487, %s28, 5
        %s489 = smul.addr %s486, 6
        %s490 = sadd.s32 %s488, %s489
        %s491 = scalar_lea.vmem %s3, %s490
      $region40: #{transformer_forward.1} parent=23 // pred_fallthru
        _
      // Predicated region
      $region41: #{transformer_forward.1} parent=23 // pred_check
        %p492 = pneg %p162
      $region42: #{transformer_forward.1} parent=23 // pred_check_branch
        %494 = sbr.rel (%p492) target = $region44
      $region43: #{transformer_forward.1} parent=23 // pred_region
        %p495 = scmp.lt.s32.totalorder %s27, 1
        %s496 = scalar_select %p495, %s27, 1
        %p497 = scmp.lt.s32.totalorder %s28, 5
        %s498 = scalar_select %p497, %s28, 5
        %s499 = smul.addr %s498, 4
        %s500 = smul.addr %s496, 24
        %s501 = sadd.s32 %s499, %s500
        %s502 = smul.addr %s501, 8
        %s503 = scalar_lea.vmem %s4, %s502
      $region44: #{transformer_forward.1} parent=23 // pred_fallthru
        _
      // Predicated region
      $region45: #{transformer_forward.1} parent=23 // pred_check
        %p504 = pneg %p190
      $region46: #{transformer_forward.1} parent=23 // pred_check_branch
        %506 = sbr.rel (%p504) target = $region48
      $region47: #{transformer_forward.1} parent=23 // pred_region
        %p507 = scmp.lt.s32.totalorder %s27, 1
        %s508 = scalar_select %p507, %s27, 1
        %p509 = scmp.lt.s32.totalorder %s28, 5
        %s510 = scalar_select %p509, %s28, 5
        %s511 = smul.addr %s508, 6
        %s512 = sadd.s32 %s510, %s511
        %s513 = scalar_lea.vmem %s5, %s512
      $region48: #{transformer_forward.1} parent=23 // pred_fallthru
        _
      // Predicated region
      $region49: #{transformer_forward.1} parent=23 // pred_check
        %p514 = pneg %p218
      $region50: #{transformer_forward.1} parent=23 // pred_check_branch
        %516 = sbr.rel (%p514) target = $region52
      $region51: #{transformer_forward.1} parent=23 // pred_region
        %p517 = scmp.lt.s32.totalorder %s27, 1
        %s518 = scalar_select %p517, %s27, 1
        %p519 = scmp.lt.s32.totalorder %s28, 5
        %s520 = scalar_select %p519, %s28, 5
        %s521 = smul.addr %s520, 64
        %s522 = smul.addr %s518, 384
        %s523 = sadd.s32 %s521, %s522
        %s524 = smul.addr %s523, 4
        %s525 = scalar_lea.vmem %s6, %s524
      $region52: #{transformer_forward.1} parent=23 // pred_fallthru
        _
      // Predicated region
      $region53: #{transformer_forward.1} parent=23 // pred_check
        %p526 = pneg %p246
      $region54: #{transformer_forward.1} parent=23 // pred_check_branch
        %528 = sbr.rel (%p526) target = $region56
      $region55: #{transformer_forward.1} parent=23 // pred_region
        %p529 = scmp.lt.s32.totalorder %s27, 1
        %s530 = scalar_select %p529, %s27, 1
        %p531 = scmp.lt.s32.totalorder %s28, 5
        %s532 = scalar_select %p531, %s28, 5
        %s533 = smul.addr %s532, 16
        %s534 = smul.addr %s530, 96
        %s535 = sadd.s32 %s533, %s534
        %s536 = scalar_lea.vmem %s7, %s535
      $region56: #{transformer_forward.1} parent=23 // pred_fallthru
        _
      // Predicated region
      $region57: #{transformer_forward.1} parent=23 // pred_check
        %p537 = pneg %p274
      $region58: #{transformer_forward.1} parent=23 // pred_check_branch
        %539 = sbr.rel (%p537) target = $region60
      $region59: #{transformer_forward.1} parent=23 // pred_region
        %p540 = scmp.lt.s32.totalorder %s27, 1
        %s541 = scalar_select %p540, %s27, 1
        %p542 = scmp.lt.s32.totalorder %s28, 5
        %s543 = scalar_select %p542, %s28, 5
        %s544 = smul.addr %s543, 256
        %s545 = smul.addr %s541, 1536
        %s546 = sadd.s32 %s544, %s545
        %s547 = smul.addr %s546, 4
        %s548 = scalar_lea.vmem %s8, %s547
      $region60: #{transformer_forward.1} parent=23 // pred_fallthru
        _
      // Predicated region
      $region61: #{transformer_forward.1} parent=23 // pred_check
        %p549 = pneg %p302
      $region62: #{transformer_forward.1} parent=23 // pred_check_branch
        %551 = sbr.rel (%p549) target = $region64
      $region63: #{transformer_forward.1} parent=23 // pred_region
        %p552 = scmp.lt.s32.totalorder %s27, 1
        %s553 = scalar_select %p552, %s27, 1
        %p554 = scmp.lt.s32.totalorder %s28, 5
        %s555 = scalar_select %p554, %s28, 5
        %s556 = smul.addr %s553, 6
        %s557 = sadd.s32 %s555, %s556
        %s558 = scalar_lea.vmem %s9, %s557
      $region64: #{transformer_forward.1} parent=23 // pred_fallthru
        _
      // Predicated region
      $region65: #{transformer_forward.1} parent=23 // pred_check
        %p559 = pneg %p330
      $region66: #{transformer_forward.1} parent=23 // pred_check_branch
        %561 = sbr.rel (%p559) target = $region68
      $region67: #{transformer_forward.1} parent=23 // pred_region
        %p562 = scmp.lt.s32.totalorder %s27, 1
        %s563 = scalar_select %p562, %s27, 1
        %p564 = scmp.lt.s32.totalorder %s28, 5
        %s565 = scalar_select %p564, %s28, 5
        %s566 = smul.addr %s563, 6
        %s567 = sadd.s32 %s565, %s566
        %s568 = smul.addr %s567, 4
        %s569 = scalar_lea.vmem %s10, %s568
      $region68: #{transformer_forward.1} parent=23 // pred_fallthru
        _
      // Predicated region
      $region69: #{transformer_forward.1} parent=23 // pred_check
        %p570 = pneg %p356
      $region70: #{transformer_forward.1} parent=23 // pred_check_branch
        %572 = sbr.rel (%p570) target = $region72
      $region71: #{transformer_forward.1} parent=23 // pred_region
        %p573 = scmp.lt.s32.totalorder %s27, 1
        %s574 = scalar_select %p573, %s27, 1
        %s575 = smul.addr %s574, 2
        %s576 = scalar_lea.vmem %s11, %s575
      $region72: #{transformer_forward.1} parent=23 // pred_fallthru
        _
    $region24: #{transformer_forward.1} parent=5 // pred_fallthru
      _
    %p577 = scmp.le.s32.totalorder 1, %s20
    %p578 = scmp.lt.s32.totalorder %s20, 13
    %p579 = pnand %p577, %p578
    %p580 = pneg %p579
    // Predicated region
    $region73: #{transformer_forward.1} parent=5 // pred_check
      _
    $region74: #{transformer_forward.1} parent=5 // pred_check_branch
      %582 = sbr.rel (%p579) target = $region76
    $region75: #{transformer_forward.1} parent=5 // pred_region
      %s583 = ssub.s32 %s20, 1
      %p584 = scmp.lt.s32.totalorder %s29, 1
      %s585 = scalar_select %p584, %s29, 1
      %s586 = smul.addr %s585, 2
      %s587 = smul.addr %s586, 8
      %s588 = scalar_lea.vmem %s0, %s587
      %p589 = pneg %p58
      %p590 = pneg %p55
      %p591 = scmp.lt.s32.totalorder %s29, 1
      %s592 = scalar_select %p591, %s29, 1
      %s593 = smul.addr %s592, 2
      %s594 = scalar_lea.vmem %s1, %s593
      %p595 = pneg %p84
      %p596 = pneg %p81
      %p597 = scmp.lt.s32.totalorder %s29, 1
      %s598 = scalar_select %p597, %s29, 1
      %p599 = scmp.lt.s32.totalorder %s30, 5
      %s600 = scalar_select %p599, %s30, 5
      %s601 = smul.addr %s600, 4
      %s602 = smul.addr %s598, 24
      %s603 = sadd.s32 %s601, %s602
      %s604 = smul.addr %s603, 8
      %s605 = scalar_lea.vmem %s2, %s604
      %p606 = pneg %p112
      %p607 = pneg %p109
      %p608 = scmp.lt.s32.totalorder %s29, 1
      %s609 = scalar_select %p608, %s29, 1
      %p610 = scmp.lt.s32.totalorder %s30, 5
      %s611 = scalar_select %p610, %s30, 5
      %s612 = smul.addr %s609, 6
      %s613 = sadd.s32 %s611, %s612
      %s614 = scalar_lea.vmem %s3, %s613
      %p615 = pneg %p140
      %p616 = pneg %p137
      %p617 = scmp.lt.s32.totalorder %s29, 1
      %s618 = scalar_select %p617, %s29, 1
      %p619 = scmp.lt.s32.totalorder %s30, 5
      %s620 = scalar_select %p619, %s30, 5
      %s621 = smul.addr %s620, 4
      %s622 = smul.addr %s618, 24
      %s623 = sadd.s32 %s621, %s622
      %s624 = smul.addr %s623, 8
      %s625 = scalar_lea.vmem %s4, %s624
      %p626 = pneg %p168
      %p627 = pneg %p165
      %p628 = scmp.lt.s32.totalorder %s29, 1
      %s629 = scalar_select %p628, %s29, 1
      %p630 = scmp.lt.s32.totalorder %s30, 5
      %s631 = scalar_select %p630, %s30, 5
      %s632 = smul.addr %s629, 6
      %s633 = sadd.s32 %s631, %s632
      %s634 = scalar_lea.vmem %s5, %s633
      %p635 = pneg %p196
      %p636 = pneg %p193
      %p637 = scmp.lt.s32.totalorder %s29, 1
      %s638 = scalar_select %p637, %s29, 1
      %p639 = scmp.lt.s32.totalorder %s30, 5
      %s640 = scalar_select %p639, %s30, 5
      %s641 = smul.addr %s640, 64
      %s642 = smul.addr %s638, 384
      %s643 = sadd.s32 %s641, %s642
      %s644 = smul.addr %s643, 4
      %s645 = scalar_lea.vmem %s6, %s644
      %p646 = pneg %p224
      %p647 = pneg %p221
      %p648 = scmp.lt.s32.totalorder %s29, 1
      %s649 = scalar_select %p648, %s29, 1
      %p650 = scmp.lt.s32.totalorder %s30, 5
      %s651 = scalar_select %p650, %s30, 5
      %s652 = smul.addr %s651, 16
      %s653 = smul.addr %s649, 96
      %s654 = sadd.s32 %s652, %s653
      %s655 = scalar_lea.vmem %s7, %s654
      %p656 = pneg %p252
      %p657 = pneg %p249
      %p658 = scmp.lt.s32.totalorder %s29, 1
      %s659 = scalar_select %p658, %s29, 1
      %p660 = scmp.lt.s32.totalorder %s30, 5
      %s661 = scalar_select %p660, %s30, 5
      %s662 = smul.addr %s661, 256
      %s663 = smul.addr %s659, 1536
      %s664 = sadd.s32 %s662, %s663
      %s665 = smul.addr %s664, 4
      %s666 = scalar_lea.vmem %s8, %s665
      %p667 = pneg %p280
      %p668 = pneg %p277
      %p669 = scmp.lt.s32.totalorder %s29, 1
      %s670 = scalar_select %p669, %s29, 1
      %p671 = scmp.lt.s32.totalorder %s30, 5
      %s672 = scalar_select %p671, %s30, 5
      %s673 = smul.addr %s670, 6
      %s674 = sadd.s32 %s672, %s673
      %s675 = scalar_lea.vmem %s9, %s674
      %p676 = pneg %p308
      %p677 = pneg %p305
      %p678 = scmp.lt.s32.totalorder %s29, 1
      %s679 = scalar_select %p678, %s29, 1
      %p680 = scmp.lt.s32.totalorder %s30, 5
      %s681 = scalar_select %p680, %s30, 5
      %s682 = smul.addr %s679, 6
      %s683 = sadd.s32 %s681, %s682
      %s684 = smul.addr %s683, 4
      %s685 = scalar_lea.vmem %s10, %s684
      %p686 = pneg %p336
      %p687 = pneg %p333
      %p688 = scmp.lt.s32.totalorder %s29, 1
      %s689 = scalar_select %p688, %s29, 1
      %s690 = smul.addr %s689, 2
      %s691 = scalar_lea.vmem %s11, %s690
      %p692 = pneg %p362
      %p693 = pneg %p359
      %p694 = pneg %p383
      %p695 = pneg %p380
      %p696 = pneg %p404
      %p697 = pneg %p401
      %p698 = pneg %p430
      %p699 = pneg %p427
      %p700 = scmp.lt.s32.totalorder %s29, 1
      %s701 = scalar_select %p700, %s29, 1
      %s702 = smul.addr %s701, 2
      %s703 = smul.addr %s702, 8
      %s704 = scalar_lea.vmem %s14, %s703
      %p705 = scmp.lt.s32.totalorder %s29, 1
      %s706 = scalar_select %p705, %s29, 1
      %s707 = smul.addr %s706, 2
      %s708 = smul.addr %s707, 8
      %s709 = scalar_lea.vmem %s0, %s708
      %p710 = scmp.lt.s32.totalorder %s29, 1
      %s711 = scalar_select %p710, %s29, 1
      %s712 = smul.addr %s711, 2
      %s713 = scalar_lea.vmem %s1, %s712
      %p714 = scmp.lt.s32.totalorder %s29, 1
      %s715 = scalar_select %p714, %s29, 1
      %p716 = scmp.lt.s32.totalorder %s30, 5
      %s717 = scalar_select %p716, %s30, 5
      %s718 = smul.addr %s717, 4
      %s719 = smul.addr %s715, 24
      %s720 = sadd.s32 %s718, %s719
      %s721 = smul.addr %s720, 8
      %s722 = scalar_lea.vmem %s2, %s721
      %p723 = scmp.lt.s32.totalorder %s29, 1
      %s724 = scalar_select %p723, %s29, 1
      %p725 = scmp.lt.s32.totalorder %s30, 5
      %s726 = scalar_select %p725, %s30, 5
      %s727 = smul.addr %s724, 6
      %s728 = sadd.s32 %s726, %s727
      %s729 = scalar_lea.vmem %s3, %s728
      %p730 = scmp.lt.s32.totalorder %s29, 1
      %s731 = scalar_select %p730, %s29, 1
      %p732 = scmp.lt.s32.totalorder %s30, 5
      %s733 = scalar_select %p732, %s30, 5
      %s734 = smul.addr %s733, 4
      %s735 = smul.addr %s731, 24
      %s736 = sadd.s32 %s734, %s735
      %s737 = smul.addr %s736, 8
      %s738 = scalar_lea.vmem %s4, %s737
      %p739 = scmp.lt.s32.totalorder %s29, 1
      %s740 = scalar_select %p739, %s29, 1
      %p741 = scmp.lt.s32.totalorder %s30, 5
      %s742 = scalar_select %p741, %s30, 5
      %s743 = smul.addr %s740, 6
      %s744 = sadd.s32 %s742, %s743
      %s745 = scalar_lea.vmem %s5, %s744
      %p746 = scmp.lt.s32.totalorder %s29, 1
      %s747 = scalar_select %p746, %s29, 1
      %p748 = scmp.lt.s32.totalorder %s30, 5
      %s749 = scalar_select %p748, %s30, 5
      %s750 = smul.addr %s749, 64
      %s751 = smul.addr %s747, 384
      %s752 = sadd.s32 %s750, %s751
      %s753 = smul.addr %s752, 4
      %s754 = scalar_lea.vmem %s6, %s753
      %p755 = scmp.lt.s32.totalorder %s29, 1
      %s756 = scalar_select %p755, %s29, 1
      %p757 = scmp.lt.s32.totalorder %s30, 5
      %s758 = scalar_select %p757, %s30, 5
      %s759 = smul.addr %s758, 16
      %s760 = smul.addr %s756, 96
      %s761 = sadd.s32 %s759, %s760
      %s762 = scalar_lea.vmem %s7, %s761
      %p763 = scmp.lt.s32.totalorder %s29, 1
      %s764 = scalar_select %p763, %s29, 1
      %p765 = scmp.lt.s32.totalorder %s30, 5
      %s766 = scalar_select %p765, %s30, 5
      %s767 = smul.addr %s766, 256
      %s768 = smul.addr %s764, 1536
      %s769 = sadd.s32 %s767, %s768
      %s770 = smul.addr %s769, 4
      %s771 = scalar_lea.vmem %s8, %s770
      %p772 = scmp.lt.s32.totalorder %s29, 1
      %s773 = scalar_select %p772, %s29, 1
      %p774 = scmp.lt.s32.totalorder %s30, 5
      %s775 = scalar_select %p774, %s30, 5
      %s776 = smul.addr %s773, 6
      %s777 = sadd.s32 %s775, %s776
      %s778 = scalar_lea.vmem %s9, %s777
      %p779 = scmp.lt.s32.totalorder %s29, 1
      %s780 = scalar_select %p779, %s29, 1
      %p781 = scmp.lt.s32.totalorder %s30, 5
      %s782 = scalar_select %p781, %s30, 5
      %s783 = smul.addr %s780, 6
      %s784 = sadd.s32 %s782, %s783
      %s785 = smul.addr %s784, 4
      %s786 = scalar_lea.vmem %s10, %s785
      %p787 = scmp.lt.s32.totalorder %s29, 1
      %s788 = scalar_select %p787, %s29, 1
      %s789 = smul.addr %s788, 2
      %s790 = scalar_lea.vmem %s11, %s789
      %p791 = scmp.lt.s32.totalorder %s29, 1
      %s792 = scalar_select %p791, %s29, 1
      %s793 = smul.addr %s792, 2
      %s794 = smul.addr %s793, 8
      %s795 = scalar_lea.vmem %s14, %s794
      %p797 = scmp.eq.s32.totalorder %s30, 0
      // Predicated region
      $region77: #{transformer_forward.1} parent=75 // pred_check
        %p798 = pneg %p797
      $region78: #{transformer_forward.1} parent=75 // pred_check_branch
        %800 = sbr.rel (%p798) target = $region80
      $region79: #{transformer_forward.1} parent=75 // pred_region
        %v801 = vld [vmem:[%s709] sm:$0xff]
        %v802 = vld [vmem:[%s709 + $0x8] sm:$0xff]
        %vm803 = vcmask 261120
        %804 = vst.msk [vmem:[#allocation2] sm:$0xff] %vm803, %v801
        %805 = vst.msk [vmem:[#allocation2 + $0x8] sm:$0xff] %vm803, %v802
      $region80: #{transformer_forward.1} parent=75 // pred_fallthru
        _
      %v806 = vld [vmem:[#allocation2] sm:$0xff]
      %v807 = vld [vmem:[#allocation2 + $0x8] sm:$0xff]
      %v808 = vld [vmem:[%s786] sm:$0xf]
      %vm809 = vcmask 261120
      %v810 = vsel %vm809, %v806, 0.0
      %811 = vadd.xlane.f32.xlu0 %v810
      %v812 = vpop.xlane.xlu0 %811
      %v813 = vsel %vm809, %v807, 0.0
      %814 = vadd.xlane.f32.xlu0 %v813
      %v815 = vpop.xlane.xlu0 %814
      %v816 = vrcp.pop 32.0
      %v817 = vmul.f32 %v812, %v816
      %v818 = vmul.f32 %v815, %v816
      %v819 = vsub.f32 %v806, %v817
      %v820 = vsub.f32 %v807, %v818
      %v821 = vmul.f32 %v819, %v819
      %v822 = vmul.f32 %v820, %v820
      %v823 = vsel %vm809, %v821, 0.0
      %824 = vadd.xlane.f32.xlu0 %v823
      %v825 = vpop.xlane.xlu0 %824
      %v826 = vsel %vm809, %v822, 0.0
      %827 = vadd.xlane.f32.xlu0 %v826
      %v828 = vpop.xlane.xlu0 %827
      %v829 = vmul.f32 %v825, 0.032258064
      %v830 = vmul.f32 %v828, 0.032258064
      %v831 = vrsqrt.pop %v829
      %v832 = vmul.f32 %v829, %v831
      %vm833 = vcmp.eq.f32.partialorder %v829, inf
      %v834 = vsel %vm833, %v829, %v832
      %vm835 = vcmp.eq.f32.partialorder %v829, 0.0
      %v836 = vand.u32 %v829, 2147483648
      %v837 = vsel %vm835, %v836, %v834
      %v838 = vrsqrt.pop %v830
      %v839 = vmul.f32 %v830, %v838
      %vm840 = vcmp.eq.f32.partialorder %v830, inf
      %v841 = vsel %vm840, %v830, %v839
      %vm842 = vcmp.eq.f32.partialorder %v830, 0.0
      %v843 = vand.u32 %v830, 2147483648
      %v844 = vsel %vm842, %v843, %v841
      %v845 = vadd.f32 %v837, 1e-06
      %v846 = vadd.f32 %v844, 1e-06
      %v847 = vrcp.pop %v845
      %v848 = vrcp.pop %v846
      %v849 = vlaneseq
      %v850 = vshrl.u32 %v849, 7
      %v851 = vsub.s32 0, %v850
      %v852 = vrot.slane %v808, %v851
      %v853 = vmul.f32 %v852, %v819
      %v854 = vmul.f32 %v852, %v820
      %v855 = vmul.f32 %v853, %v847
      %v856 = vmul.f32 %v854, %v848
      %v857 = vlaneseq
      %v858 = vshrl.u32 %v857, 7
      %v859 = vsub.s32 1, %v858
      %v860 = vrot.slane %v808, %v859
      %v861 = vadd.f32 %v855, %v860
      %v862 = vadd.f32 %v856, %v860
      %v863 = vld [vmem:[%s722] sm:$0xff]
      %v864 = vld [vmem:[%s722 + $0x8] sm:$0xff]
      %v865 = vld [vmem:[%s722 + $0x10] sm:$0xff]
      %v866 = vld [vmem:[%s722 + $0x18] sm:$0xff]
      %v867 = vld [vmem:[%s729] sm:$0x1]
      %v869 = vlaneseq
      %v870 = vshrl.u32 %v869, 7
      %v871 = vsub.s32 0, %v870
      %v872 = vrot.slane %v867, %v871
      %v875 = vsel %vm809, %v861, 0
      %v878 = vsel %vm809, %v862, 0
      %880 = vmatprep.subr.mxu0 0.0
      %881 = vmatpush1.msra.mxu0 0.0
      %882 = vmatprep.subr.mxu0 0.0
      %883 = vmatpush1.msra.mxu0 0.0
      %884 = vmatprep.subr.mxu0 0.0
      %885 = vmatpush1.msra.mxu0 0.0
      %886 = vmatprep.subr.mxu0 0.0
      %887 = vmatpush1.msra.mxu0 0.0
      %888 = vmatprep.subr.mxu0 0.0
      %889 = vmatpush1.msra.mxu0 0.0
      %890 = vmatprep.subr.mxu0 0.0
      %891 = vmatpush1.msra.mxu0 0.0
      %892 = vmatprep.subr.mxu0 0.0
      %893 = vmatpush1.msra.mxu0 0.0
      %894 = vmatprep.subr.mxu0 0.0
      %895 = vmatpush1.msra.mxu0 0.0
      %896 = vmatprep.subr.mxu0 0.0
      %897 = vmatpush1.msra.mxu0 0.0
      %898 = vmatprep.subr.mxu0 0.0
      %899 = vmatpush1.msra.mxu0 0.0
      %900 = vmatprep.subr.mxu0 0.0
      %901 = vmatpush1.msra.mxu0 0.0
      %902 = vmatprep.subr.mxu0 0.0
      %903 = vmatpush1.msra.mxu0 0.0
      %904 = vmatprep.subr.mxu0 0.0
      %905 = vmatpush1.msra.mxu0 %v866
      %906 = vmatprep.subr.mxu0 0.0
      %907 = vmatpush1.msra.mxu0 %v865
      %908 = vmatprep.subr.mxu0 0.0
      %909 = vmatpush1.msra.mxu0 %v864
      %910 = vmatprep.subr.mxu0 0.0
      %911 = vmatpush1.msra.mxu0 %v863
      %912 = vmatprep.subr.mxu0 0.0
      %913 = vmatpush2.msra.mxu0 0.0
      %914 = vmatprep.subr.mxu0 0.0
      %915 = vmatpush2.msra.mxu0 0.0
      %916 = vmatprep.subr.mxu0 0.0
      %917 = vmatpush2.msra.mxu0 0.0
      %918 = vmatprep.subr.mxu0 0.0
      %919 = vmatpush2.msra.mxu0 0.0
      %920 = vmatprep.subr.mxu0 0.0
      %921 = vmatpush2.msra.mxu0 0.0
      %922 = vmatprep.subr.mxu0 0.0
      %923 = vmatpush2.msra.mxu0 0.0
      %924 = vmatprep.subr.mxu0 0.0
      %925 = vmatpush2.msra.mxu0 0.0
      %926 = vmatprep.subr.mxu0 0.0
      %927 = vmatpush2.msra.mxu0 0.0
      %928 = vmatprep.subr.mxu0 0.0
      %929 = vmatpush2.msra.mxu0 0.0
      %930 = vmatprep.subr.mxu0 0.0
      %931 = vmatpush2.msra.mxu0 0.0
      %932 = vmatprep.subr.mxu0 0.0
      %933 = vmatpush2.msra.mxu0 0.0
      %934 = vmatprep.subr.mxu0 0.0
      %935 = vmatpush2.msra.mxu0 0.0
      %936 = vmatprep.subr.mxu0 0.0
      %937 = vmatpush2.msra.mxu0 0.0
      %938 = vmatprep.subr.mxu0 0.0
      %939 = vmatpush2.msra.mxu0 0.0
      %940 = vmatprep.subr.mxu0 0.0
      %941 = vmatpush2.msra.mxu0 0.0
      %942 = vmatprep.subr.mxu0 0.0
      %943 = vmatpush2.msra.mxu0 0.0
      %944 = vmatprep.mubr.f32.mxu0 0.0
      %945 = vmatmul.mubr.f32.gmra.mxu0 %v875
      %v946 = vpop.f32.mrf.mxu0
      %v947 = vadd.f32 %v872, %v946
      %v948 = vpop.f32.mrf.mxu0
      %949 = vmatprep.mubr.f32.mxu0 0.0
      %950 = vmatmul.mubr.f32.gmra.mxu0 %v878
      %v951 = vpop.f32.mrf.mxu0
      %v952 = vadd.f32 %v872, %v951
      %v953 = vpop.f32.mrf.mxu0
      %954 = vdwg.mxu0
      %v955 = vld [vmem:[%s713] sm:$0x3]
      %v958 = vunpack.c.l.s4 1966171168
      %v959 = vunpack.c.0.s8 %v958
      %v960 = vlaneseq
      %v961 = vshrl.u32 %v960, 7
      %v962 = vsub.s32 %v959, %v961
      %v963 = vrot.slane %v955, %v962
      %v964 = vcombine.high %v963, %v963
      %v966 = vunpack.c.l.s4 1966171168
      %v967 = vunpack.c.0.s8 %v966
      %v968 = vlaneseq
      %v969 = vshrl.u32 %v968, 7
      %v970 = vsub.s32 %v967, %v969
      %v971 = vrot.slane %v963, %v970
      %v973 = vunpack.c.l.s4 1966171168
      %v974 = vunpack.c.0.s8 %v973
      %v975 = vlaneseq
      %v976 = vshrl.u32 %v975, 7
      %v977 = vsub.s32 %v974, %v976
      %v978 = vrot.slane %v964, %v977
      %v981 = vld [vmem:[%s738] sm:$0xff]
      %v982 = vld [vmem:[%s738 + $0x8] sm:$0xff]
      %v983 = vld [vmem:[%s738 + $0x10] sm:$0xff]
      %v984 = vld [vmem:[%s738 + $0x18] sm:$0xff]
      %986 = vrot.lane.b32.xlu0 %v947, 96
      %v987 = vpop.permute.xlu0 %986
      %vm988 = vcmask 64512
      %v989 = vsel %vm988, %v947, 0
      %v991 = vsel %vm988, %v987, 0
      %993 = vmatprep.subr.mxu0 0.0
      %994 = vmatpush1.xpose.msra.mxu0 0.0
      %995 = vmatprep.subr.mxu0 0.0
      %996 = vmatpush1.xpose.msra.mxu0 0.0
      %997 = vmatprep.subr.mxu0 0.0
      %998 = vmatpush1.xpose.msra.mxu0 0.0
      %999 = vmatprep.subr.mxu0 0.0
      %1000 = vmatpush1.xpose.msra.mxu0 0.0
      %1001 = vmatprep.subr.mxu0 0.0
      %1002 = vmatpush1.xpose.msra.mxu0 0.0
      %1003 = vmatprep.subr.mxu0 0.0
      %1004 = vmatpush1.xpose.msra.mxu0 0.0
      %1005 = vmatprep.subr.mxu0 0.0
      %1006 = vmatpush1.xpose.msra.mxu0 0.0
      %1007 = vmatprep.subr.mxu0 0.0
      %1008 = vmatpush1.xpose.msra.mxu0 0.0
      %1009 = vmatprep.subr.mxu0 0.0
      %1010 = vmatpush1.xpose.msra.mxu0 0.0
      %1011 = vmatprep.subr.mxu0 0.0
      %1012 = vmatpush1.xpose.msra.mxu0 0.0
      %1013 = vmatprep.subr.mxu0 0.0
      %1014 = vmatpush1.xpose.msra.mxu0 0.0
      %1015 = vmatprep.subr.mxu0 0.0
      %1016 = vmatpush1.xpose.msra.mxu0 0.0
      %1017 = vmatprep.subr.mxu0 0.0
      %1018 = vmatpush1.xpose.msra.mxu0 0.0
      %1019 = vmatprep.subr.mxu0 0.0
      %1020 = vmatpush1.xpose.msra.mxu0 0.0
      %1021 = vmatprep.subr.mxu0 0.0
      %1022 = vmatpush1.xpose.msra.mxu0 0.0
      %1023 = vmatprep.subr.mxu0 0.0
      %1024 = vmatpush1.xpose.msra.mxu0 %v991
      %1025 = vmatprep.subr.mxu0 0.0
      %1026 = vmatpush2.xpose.msra.mxu0 0.0
      %1027 = vmatprep.subr.mxu0 0.0
      %1028 = vmatpush2.xpose.msra.mxu0 0.0
      %1029 = vmatprep.subr.mxu0 0.0
      %1030 = vmatpush2.xpose.msra.mxu0 0.0
      %1031 = vmatprep.subr.mxu0 0.0
      %1032 = vmatpush2.xpose.msra.mxu0 0.0
      %1033 = vmatprep.subr.mxu0 0.0
      %1034 = vmatpush2.xpose.msra.mxu0 0.0
      %1035 = vmatprep.subr.mxu0 0.0
      %1036 = vmatpush2.xpose.msra.mxu0 0.0
      %1037 = vmatprep.subr.mxu0 0.0
      %1038 = vmatpush2.xpose.msra.mxu0 0.0
      %1039 = vmatprep.subr.mxu0 0.0
      %1040 = vmatpush2.xpose.msra.mxu0 0.0
      %1041 = vmatprep.subr.mxu0 0.0
      %1042 = vmatpush2.xpose.msra.mxu0 0.0
      %1043 = vmatprep.subr.mxu0 0.0
      %1044 = vmatpush2.xpose.msra.mxu0 0.0
      %1045 = vmatprep.subr.mxu0 0.0
      %1046 = vmatpush2.xpose.msra.mxu0 0.0
      %1047 = vmatprep.subr.mxu0 0.0
      %1048 = vmatpush2.xpose.msra.mxu0 0.0
      %1049 = vmatprep.subr.mxu0 0.0
      %1050 = vmatpush2.xpose.msra.mxu0 0.0
      %1051 = vmatprep.subr.mxu0 0.0
      %1052 = vmatpush2.xpose.msra.mxu0 0.0
      %1053 = vmatprep.subr.mxu0 0.0
      %1054 = vmatpush2.xpose.msra.mxu0 0.0
      %1055 = vmatprep.subr.mxu0 0.0
      %1056 = vmatpush2.xpose.msra.mxu0 0.0
      %1057 = vmatprep.mubr.f32.mxu0 0.0
      %1058 = vmatmul.mubr.f32.gmra.mxu0 %v989
      %v1059 = vpop.f32.mrf.mxu0
      %v1060 = vadd.f32 0.0, %v1059
      %v1061 = vpop.f32.mrf.mxu0
      %1062 = vdwg.mxu0
      %1064 = vrot.lane.b32.xlu0 %v952, 96
      %v1065 = vpop.permute.xlu0 %1064
      %v1066 = vsel %vm988, %v952, 0
      %v1068 = vsel %vm988, %v1065, 0
      %1070 = vmatprep.subr.mxu0 0.0
      %1071 = vmatpush1.xpose.msra.mxu0 0.0
      %1072 = vmatprep.subr.mxu0 0.0
      %1073 = vmatpush1.xpose.msra.mxu0 0.0
      %1074 = vmatprep.subr.mxu0 0.0
      %1075 = vmatpush1.xpose.msra.mxu0 0.0
      %1076 = vmatprep.subr.mxu0 0.0
      %1077 = vmatpush1.xpose.msra.mxu0 0.0
      %1078 = vmatprep.subr.mxu0 0.0
      %1079 = vmatpush1.xpose.msra.mxu0 0.0
      %1080 = vmatprep.subr.mxu0 0.0
      %1081 = vmatpush1.xpose.msra.mxu0 0.0
      %1082 = vmatprep.subr.mxu0 0.0
      %1083 = vmatpush1.xpose.msra.mxu0 0.0
      %1084 = vmatprep.subr.mxu0 0.0
      %1085 = vmatpush1.xpose.msra.mxu0 0.0
      %1086 = vmatprep.subr.mxu0 0.0
      %1087 = vmatpush1.xpose.msra.mxu0 0.0
      %1088 = vmatprep.subr.mxu0 0.0
      %1089 = vmatpush1.xpose.msra.mxu0 0.0
      %1090 = vmatprep.subr.mxu0 0.0
      %1091 = vmatpush1.xpose.msra.mxu0 0.0
      %1092 = vmatprep.subr.mxu0 0.0
      %1093 = vmatpush1.xpose.msra.mxu0 0.0
      %1094 = vmatprep.subr.mxu0 0.0
      %1095 = vmatpush1.xpose.msra.mxu0 0.0
      %1096 = vmatprep.subr.mxu0 0.0
      %1097 = vmatpush1.xpose.msra.mxu0 0.0
      %1098 = vmatprep.subr.mxu0 0.0
      %1099 = vmatpush1.xpose.msra.mxu0 0.0
      %1100 = vmatprep.subr.mxu0 0.0
      %1101 = vmatpush1.xpose.msra.mxu0 %v1068
      %1102 = vmatprep.subr.mxu0 0.0
      %1103 = vmatpush2.xpose.msra.mxu0 0.0
      %1104 = vmatprep.subr.mxu0 0.0
      %1105 = vmatpush2.xpose.msra.mxu0 0.0
      %1106 = vmatprep.subr.mxu0 0.0
      %1107 = vmatpush2.xpose.msra.mxu0 0.0
      %1108 = vmatprep.subr.mxu0 0.0
      %1109 = vmatpush2.xpose.msra.mxu0 0.0
      %1110 = vmatprep.subr.mxu0 0.0
      %1111 = vmatpush2.xpose.msra.mxu0 0.0
      %1112 = vmatprep.subr.mxu0 0.0
      %1113 = vmatpush2.xpose.msra.mxu0 0.0
      %1114 = vmatprep.subr.mxu0 0.0
      %1115 = vmatpush2.xpose.msra.mxu0 0.0
      %1116 = vmatprep.subr.mxu0 0.0
      %1117 = vmatpush2.xpose.msra.mxu0 0.0
      %1118 = vmatprep.subr.mxu0 0.0
      %1119 = vmatpush2.xpose.msra.mxu0 0.0
      %1120 = vmatprep.subr.mxu0 0.0
      %1121 = vmatpush2.xpose.msra.mxu0 0.0
      %1122 = vmatprep.subr.mxu0 0.0
      %1123 = vmatpush2.xpose.msra.mxu0 0.0
      %1124 = vmatprep.subr.mxu0 0.0
      %1125 = vmatpush2.xpose.msra.mxu0 0.0
      %1126 = vmatprep.subr.mxu0 0.0
      %1127 = vmatpush2.xpose.msra.mxu0 0.0
      %1128 = vmatprep.subr.mxu0 0.0
      %1129 = vmatpush2.xpose.msra.mxu0 0.0
      %1130 = vmatprep.subr.mxu0 0.0
      %1131 = vmatpush2.xpose.msra.mxu0 0.0
      %1132 = vmatprep.subr.mxu0 0.0
      %1133 = vmatpush2.xpose.msra.mxu0 0.0
      %1134 = vmatprep.mubr.f32.mxu0 0.0
      %1135 = vmatmul.mubr.f32.gmra.mxu0 %v1066
      %v1136 = vpop.f32.mrf.mxu0
      %v1137 = vadd.f32 0.0, %v1136
      %v1138 = vpop.f32.mrf.mxu0
      %1139 = vdwg.mxu0
      %v1140 = vmul.f32 %v1060, 0.35355338
      %v1141 = vmul.f32 %v1137, 0.35355338
      %vm1142 = vcmp.eq.f32.partialorder %v971, 0.0
      %vm1143 = vcmp.eq.f32.partialorder %v978, 0.0
      %v1144 = vsel %vm1142, 1, 0
      %v1145 = vsel %vm1143, 1, 0
      %v1146 = vlaneseq
      %v1147 = vshrl.u32 %v1146, 7
      %v1148 = vsub.s32 0, %v1147
      %v1149 = vrot.slane %v1144, %v1148
      %v1150 = vlaneseq
      %v1151 = vshrl.u32 %v1150, 7
      %v1152 = vsub.s32 0, %v1151
      %v1153 = vrot.slane %v1145, %v1152
      %vm1154 = vcmp.eq.s32.totalorder %v1149, 1
      %vm1155 = vcmp.eq.s32.totalorder %v1153, 1
      %v1156 = vsel %vm1154, -1e+09, %v1140
      %v1157 = vsel %vm1155, -1e+09, %v1141
      %v1158 = vsel %vm988, %v1156, -inf
      %1159 = vmax.xlane.f32.xlu0 %v1158
      %v1160 = vpop.xlane.xlu0 %1159
      %v1161 = vsel %vm988, %v1157, -inf
      %1162 = vmax.xlane.f32.xlu0 %v1161
      %v1163 = vpop.xlane.xlu0 %1162
      %v1164 = vsub.f32 %v1156, %v1160
      %v1165 = vsub.f32 %v1157, %v1163
      %v1166 = vmul.f32 %v1164, 1.442695
      %v1167 = vpow.pop %v1166
      %v1168 = vmul.f32 %v1165, 1.442695
      %v1169 = vpow.pop %v1168
      %v1170 = vsel %vm988, %v1167, 0.0
      %1171 = vadd.xlane.f32.xlu0 %v1170
      %v1172 = vpop.xlane.xlu0 %1171
      %v1173 = vsel %vm988, %v1169, 0.0
      %1174 = vadd.xlane.f32.xlu0 %v1173
      %v1175 = vpop.xlane.xlu0 %1174
      %v1176 = vrcp.pop %v1172
      %v1177 = vrcp.pop %v1175
      %v1178 = vmul.f32 %v1167, %v1176
      %v1179 = vmul.f32 %v1169, %v1177
      %1180 = vrot.lane.b32.xlu0 %v947, 64
      %v1181 = vpop.permute.xlu0 %1180
      %v1184 = vsel %vm988, %v1178, 0
      %1186 = vmatprep.subr.mxu0 0.0
      %1187 = vmatpush1.msra.mxu0 0.0
      %1188 = vmatprep.subr.mxu0 0.0
      %1189 = vmatpush1.msra.mxu0 0.0
      %1190 = vmatprep.subr.mxu0 0.0
      %1191 = vmatpush1.msra.mxu0 0.0
      %1192 = vmatprep.subr.mxu0 0.0
      %1193 = vmatpush1.msra.mxu0 0.0
      %1194 = vmatprep.subr.mxu0 0.0
      %1195 = vmatpush1.msra.mxu0 0.0
      %1196 = vmatprep.subr.mxu0 0.0
      %1197 = vmatpush1.msra.mxu0 0.0
      %1198 = vmatprep.subr.mxu0 0.0
      %1199 = vmatpush1.msra.mxu0 0.0
      %1200 = vmatprep.subr.mxu0 0.0
      %1201 = vmatpush1.msra.mxu0 0.0
      %1202 = vmatprep.subr.mxu0 0.0
      %1203 = vmatpush1.msra.mxu0 0.0
      %1204 = vmatprep.subr.mxu0 0.0
      %1205 = vmatpush1.msra.mxu0 0.0
      %1206 = vmatprep.subr.mxu0 0.0
      %1207 = vmatpush1.msra.mxu0 0.0
      %1208 = vmatprep.subr.mxu0 0.0
      %1209 = vmatpush1.msra.mxu0 0.0
      %1210 = vmatprep.subr.mxu0 0.0
      %1211 = vmatpush1.msra.mxu0 0.0
      %1212 = vmatprep.subr.mxu0 0.0
      %1213 = vmatpush1.msra.mxu0 0.0
      %1214 = vmatprep.subr.mxu0 0.0
      %1215 = vmatpush1.msra.mxu0 0.0
      %1216 = vmatprep.subr.mxu0 0.0
      %1217 = vmatpush1.msra.mxu0 %v1181
      %1218 = vmatprep.subr.mxu0 0.0
      %1219 = vmatpush2.msra.mxu0 0.0
      %1220 = vmatprep.subr.mxu0 0.0
      %1221 = vmatpush2.msra.mxu0 0.0
      %1222 = vmatprep.subr.mxu0 0.0
      %1223 = vmatpush2.msra.mxu0 0.0
      %1224 = vmatprep.subr.mxu0 0.0
      %1225 = vmatpush2.msra.mxu0 0.0
      %1226 = vmatprep.subr.mxu0 0.0
      %1227 = vmatpush2.msra.mxu0 0.0
      %1228 = vmatprep.subr.mxu0 0.0
      %1229 = vmatpush2.msra.mxu0 0.0
      %1230 = vmatprep.subr.mxu0 0.0
      %1231 = vmatpush2.msra.mxu0 0.0
      %1232 = vmatprep.subr.mxu0 0.0
      %1233 = vmatpush2.msra.mxu0 0.0
      %1234 = vmatprep.subr.mxu0 0.0
      %1235 = vmatpush2.msra.mxu0 0.0
      %1236 = vmatprep.subr.mxu0 0.0
      %1237 = vmatpush2.msra.mxu0 0.0
      %1238 = vmatprep.subr.mxu0 0.0
      %1239 = vmatpush2.msra.mxu0 0.0
      %1240 = vmatprep.subr.mxu0 0.0
      %1241 = vmatpush2.msra.mxu0 0.0
      %1242 = vmatprep.subr.mxu0 0.0
      %1243 = vmatpush2.msra.mxu0 0.0
      %1244 = vmatprep.subr.mxu0 0.0
      %1245 = vmatpush2.msra.mxu0 0.0
      %1246 = vmatprep.subr.mxu0 0.0
      %1247 = vmatpush2.msra.mxu0 0.0
      %1248 = vmatprep.subr.mxu0 0.0
      %1249 = vmatpush2.msra.mxu0 0.0
      %1250 = vmatprep.mubr.f32.mxu0 0.0
      %1251 = vmatmul.mubr.f32.gmra.mxu0 %v1184
      %v1252 = vpop.f32.mrf.mxu0
      %v1253 = vadd.f32 0.0, %v1252
      %v1254 = vpop.f32.mrf.mxu0
      %1255 = vdwg.mxu0
      %1256 = vrot.lane.b32.xlu0 %v952, 64
      %v1257 = vpop.permute.xlu0 %1256
      %v1260 = vsel %vm988, %v1179, 0
      %1262 = vmatprep.subr.mxu0 0.0
      %1263 = vmatpush1.msra.mxu0 0.0
      %1264 = vmatprep.subr.mxu0 0.0
      %1265 = vmatpush1.msra.mxu0 0.0
      %1266 = vmatprep.subr.mxu0 0.0
      %1267 = vmatpush1.msra.mxu0 0.0
      %1268 = vmatprep.subr.mxu0 0.0
      %1269 = vmatpush1.msra.mxu0 0.0
      %1270 = vmatprep.subr.mxu0 0.0
      %1271 = vmatpush1.msra.mxu0 0.0
      %1272 = vmatprep.subr.mxu0 0.0
      %1273 = vmatpush1.msra.mxu0 0.0
      %1274 = vmatprep.subr.mxu0 0.0
      %1275 = vmatpush1.msra.mxu0 0.0
      %1276 = vmatprep.subr.mxu0 0.0
      %1277 = vmatpush1.msra.mxu0 0.0
      %1278 = vmatprep.subr.mxu0 0.0
      %1279 = vmatpush1.msra.mxu0 0.0
      %1280 = vmatprep.subr.mxu0 0.0
      %1281 = vmatpush1.msra.mxu0 0.0
      %1282 = vmatprep.subr.mxu0 0.0
      %1283 = vmatpush1.msra.mxu0 0.0
      %1284 = vmatprep.subr.mxu0 0.0
      %1285 = vmatpush1.msra.mxu0 0.0
      %1286 = vmatprep.subr.mxu0 0.0
      %1287 = vmatpush1.msra.mxu0 0.0
      %1288 = vmatprep.subr.mxu0 0.0
      %1289 = vmatpush1.msra.mxu0 0.0
      %1290 = vmatprep.subr.mxu0 0.0
      %1291 = vmatpush1.msra.mxu0 0.0
      %1292 = vmatprep.subr.mxu0 0.0
      %1293 = vmatpush1.msra.mxu0 %v1257
      %1294 = vmatprep.subr.mxu0 0.0
      %1295 = vmatpush2.msra.mxu0 0.0
      %1296 = vmatprep.subr.mxu0 0.0
      %1297 = vmatpush2.msra.mxu0 0.0
      %1298 = vmatprep.subr.mxu0 0.0
      %1299 = vmatpush2.msra.mxu0 0.0
      %1300 = vmatprep.subr.mxu0 0.0
      %1301 = vmatpush2.msra.mxu0 0.0
      %1302 = vmatprep.subr.mxu0 0.0
      %1303 = vmatpush2.msra.mxu0 0.0
      %1304 = vmatprep.subr.mxu0 0.0
      %1305 = vmatpush2.msra.mxu0 0.0
      %1306 = vmatprep.subr.mxu0 0.0
      %1307 = vmatpush2.msra.mxu0 0.0
      %1308 = vmatprep.subr.mxu0 0.0
      %1309 = vmatpush2.msra.mxu0 0.0
      %1310 = vmatprep.subr.mxu0 0.0
      %1311 = vmatpush2.msra.mxu0 0.0
      %1312 = vmatprep.subr.mxu0 0.0
      %1313 = vmatpush2.msra.mxu0 0.0
      %1314 = vmatprep.subr.mxu0 0.0
      %1315 = vmatpush2.msra.mxu0 0.0
      %1316 = vmatprep.subr.mxu0 0.0
      %1317 = vmatpush2.msra.mxu0 0.0
      %1318 = vmatprep.subr.mxu0 0.0
      %1319 = vmatpush2.msra.mxu0 0.0
      %1320 = vmatprep.subr.mxu0 0.0
      %1321 = vmatpush2.msra.mxu0 0.0
      %1322 = vmatprep.subr.mxu0 0.0
      %1323 = vmatpush2.msra.mxu0 0.0
      %1324 = vmatprep.subr.mxu0 0.0
      %1325 = vmatpush2.msra.mxu0 0.0
      %1326 = vmatprep.mubr.f32.mxu0 0.0
      %1327 = vmatmul.mubr.f32.gmra.mxu0 %v1260
      %v1328 = vpop.f32.mrf.mxu0
      %v1329 = vadd.f32 0.0, %v1328
      %v1330 = vpop.f32.mrf.mxu0
      %1331 = vdwg.mxu0
      %1332 = vrot.lane.b32.xlu0 %v947, 120
      %v1333 = vpop.permute.xlu0 %1332
      %1334 = vrot.lane.b32.xlu0 %v947, 88
      %v1335 = vpop.permute.xlu0 %1334
      %v1336 = vsel %vm988, %v1333, 0
      %v1338 = vsel %vm988, %v1335, 0
      %1340 = vmatprep.subr.mxu0 0.0
      %1341 = vmatpush1.xpose.msra.mxu0 0.0
      %1342 = vmatprep.subr.mxu0 0.0
      %1343 = vmatpush1.xpose.msra.mxu0 0.0
      %1344 = vmatprep.subr.mxu0 0.0
      %1345 = vmatpush1.xpose.msra.mxu0 0.0
      %1346 = vmatprep.subr.mxu0 0.0
      %1347 = vmatpush1.xpose.msra.mxu0 0.0
      %1348 = vmatprep.subr.mxu0 0.0
      %1349 = vmatpush1.xpose.msra.mxu0 0.0
      %1350 = vmatprep.subr.mxu0 0.0
      %1351 = vmatpush1.xpose.msra.mxu0 0.0
      %1352 = vmatprep.subr.mxu0 0.0
      %1353 = vmatpush1.xpose.msra.mxu0 0.0
      %1354 = vmatprep.subr.mxu0 0.0
      %1355 = vmatpush1.xpose.msra.mxu0 0.0
      %1356 = vmatprep.subr.mxu0 0.0
      %1357 = vmatpush1.xpose.msra.mxu0 0.0
      %1358 = vmatprep.subr.mxu0 0.0
      %1359 = vmatpush1.xpose.msra.mxu0 0.0
      %1360 = vmatprep.subr.mxu0 0.0
      %1361 = vmatpush1.xpose.msra.mxu0 0.0
      %1362 = vmatprep.subr.mxu0 0.0
      %1363 = vmatpush1.xpose.msra.mxu0 0.0
      %1364 = vmatprep.subr.mxu0 0.0
      %1365 = vmatpush1.xpose.msra.mxu0 0.0
      %1366 = vmatprep.subr.mxu0 0.0
      %1367 = vmatpush1.xpose.msra.mxu0 0.0
      %1368 = vmatprep.subr.mxu0 0.0
      %1369 = vmatpush1.xpose.msra.mxu0 0.0
      %1370 = vmatprep.subr.mxu0 0.0
      %1371 = vmatpush1.xpose.msra.mxu0 %v1338
      %1372 = vmatprep.subr.mxu0 0.0
      %1373 = vmatpush2.xpose.msra.mxu0 0.0
      %1374 = vmatprep.subr.mxu0 0.0
      %1375 = vmatpush2.xpose.msra.mxu0 0.0
      %1376 = vmatprep.subr.mxu0 0.0
      %1377 = vmatpush2.xpose.msra.mxu0 0.0
      %1378 = vmatprep.subr.mxu0 0.0
      %1379 = vmatpush2.xpose.msra.mxu0 0.0
      %1380 = vmatprep.subr.mxu0 0.0
      %1381 = vmatpush2.xpose.msra.mxu0 0.0
      %1382 = vmatprep.subr.mxu0 0.0
      %1383 = vmatpush2.xpose.msra.mxu0 0.0
      %1384 = vmatprep.subr.mxu0 0.0
      %1385 = vmatpush2.xpose.msra.mxu0 0.0
      %1386 = vmatprep.subr.mxu0 0.0
      %1387 = vmatpush2.xpose.msra.mxu0 0.0
      %1388 = vmatprep.subr.mxu0 0.0
      %1389 = vmatpush2.xpose.msra.mxu0 0.0
      %1390 = vmatprep.subr.mxu0 0.0
      %1391 = vmatpush2.xpose.msra.mxu0 0.0
      %1392 = vmatprep.subr.mxu0 0.0
      %1393 = vmatpush2.xpose.msra.mxu0 0.0
      %1394 = vmatprep.subr.mxu0 0.0
      %1395 = vmatpush2.xpose.msra.mxu0 0.0
      %1396 = vmatprep.subr.mxu0 0.0
      %1397 = vmatpush2.xpose.msra.mxu0 0.0
      %1398 = vmatprep.subr.mxu0 0.0
      %1399 = vmatpush2.xpose.msra.mxu0 0.0
      %1400 = vmatprep.subr.mxu0 0.0
      %1401 = vmatpush2.xpose.msra.mxu0 0.0
      %1402 = vmatprep.subr.mxu0 0.0
      %1403 = vmatpush2.xpose.msra.mxu0 0.0
      %1404 = vmatprep.mubr.f32.mxu0 0.0
      %1405 = vmatmul.mubr.f32.gmra.mxu0 %v1336
      %v1406 = vpop.f32.mrf.mxu0
      %v1407 = vadd.f32 0.0, %v1406
      %v1408 = vpop.f32.mrf.mxu0
      %1409 = vdwg.mxu0
      %1410 = vrot.lane.b32.xlu0 %v952, 120
      %v1411 = vpop.permute.xlu0 %1410
      %1412 = vrot.lane.b32.xlu0 %v952, 88
      %v1413 = vpop.permute.xlu0 %1412
      %v1414 = vsel %vm988, %v1411, 0
      %v1416 = vsel %vm988, %v1413, 0
      %1418 = vmatprep.subr.mxu0 0.0
      %1419 = vmatpush1.xpose.msra.mxu0 0.0
      %1420 = vmatprep.subr.mxu0 0.0
      %1421 = vmatpush1.xpose.msra.mxu0 0.0
      %1422 = vmatprep.subr.mxu0 0.0
      %1423 = vmatpush1.xpose.msra.mxu0 0.0
      %1424 = vmatprep.subr.mxu0 0.0
      %1425 = vmatpush1.xpose.msra.mxu0 0.0
      %1426 = vmatprep.subr.mxu0 0.0
      %1427 = vmatpush1.xpose.msra.mxu0 0.0
      %1428 = vmatprep.subr.mxu0 0.0
      %1429 = vmatpush1.xpose.msra.mxu0 0.0
      %1430 = vmatprep.subr.mxu0 0.0
      %1431 = vmatpush1.xpose.msra.mxu0 0.0
      %1432 = vmatprep.subr.mxu0 0.0
      %1433 = vmatpush1.xpose.msra.mxu0 0.0
      %1434 = vmatprep.subr.mxu0 0.0
      %1435 = vmatpush1.xpose.msra.mxu0 0.0
      %1436 = vmatprep.subr.mxu0 0.0
      %1437 = vmatpush1.xpose.msra.mxu0 0.0
      %1438 = vmatprep.subr.mxu0 0.0
      %1439 = vmatpush1.xpose.msra.mxu0 0.0
      %1440 = vmatprep.subr.mxu0 0.0
      %1441 = vmatpush1.xpose.msra.mxu0 0.0
      %1442 = vmatprep.subr.mxu0 0.0
      %1443 = vmatpush1.xpose.msra.mxu0 0.0
      %1444 = vmatprep.subr.mxu0 0.0
      %1445 = vmatpush1.xpose.msra.mxu0 0.0
      %1446 = vmatprep.subr.mxu0 0.0
      %1447 = vmatpush1.xpose.msra.mxu0 0.0
      %1448 = vmatprep.subr.mxu0 0.0
      %1449 = vmatpush1.xpose.msra.mxu0 %v1416
      %1450 = vmatprep.subr.mxu0 0.0
      %1451 = vmatpush2.xpose.msra.mxu0 0.0
      %1452 = vmatprep.subr.mxu0 0.0
      %1453 = vmatpush2.xpose.msra.mxu0 0.0
      %1454 = vmatprep.subr.mxu0 0.0
      %1455 = vmatpush2.xpose.msra.mxu0 0.0
      %1456 = vmatprep.subr.mxu0 0.0
      %1457 = vmatpush2.xpose.msra.mxu0 0.0
      %1458 = vmatprep.subr.mxu0 0.0
      %1459 = vmatpush2.xpose.msra.mxu0 0.0
      %1460 = vmatprep.subr.mxu0 0.0
      %1461 = vmatpush2.xpose.msra.mxu0 0.0
      %1462 = vmatprep.subr.mxu0 0.0
      %1463 = vmatpush2.xpose.msra.mxu0 0.0
      %1464 = vmatprep.subr.mxu0 0.0
      %1465 = vmatpush2.xpose.msra.mxu0 0.0
      %1466 = vmatprep.subr.mxu0 0.0
      %1467 = vmatpush2.xpose.msra.mxu0 0.0
      %1468 = vmatprep.subr.mxu0 0.0
      %1469 = vmatpush2.xpose.msra.mxu0 0.0
      %1470 = vmatprep.subr.mxu0 0.0
      %1471 = vmatpush2.xpose.msra.mxu0 0.0
      %1472 = vmatprep.subr.mxu0 0.0
      %1473 = vmatpush2.xpose.msra.mxu0 0.0
      %1474 = vmatprep.subr.mxu0 0.0
      %1475 = vmatpush2.xpose.msra.mxu0 0.0
      %1476 = vmatprep.subr.mxu0 0.0
      %1477 = vmatpush2.xpose.msra.mxu0 0.0
      %1478 = vmatprep.subr.mxu0 0.0
      %1479 = vmatpush2.xpose.msra.mxu0 0.0
      %1480 = vmatprep.subr.mxu0 0.0
      %1481 = vmatpush2.xpose.msra.mxu0 0.0
      %1482 = vmatprep.mubr.f32.mxu0 0.0
      %1483 = vmatmul.mubr.f32.gmra.mxu0 %v1414
      %v1484 = vpop.f32.mrf.mxu0
      %v1485 = vadd.f32 0.0, %v1484
      %v1486 = vpop.f32.mrf.mxu0
      %1487 = vdwg.mxu0
      %v1488 = vmul.f32 %v1407, 0.35355338
      %v1489 = vmul.f32 %v1485, 0.35355338
      %v1490 = vsel %vm1154, -1e+09, %v1488
      %v1491 = vsel %vm1155, -1e+09, %v1489
      %v1492 = vsel %vm988, %v1490, -inf
      %1493 = vmax.xlane.f32.xlu0 %v1492
      %v1494 = vpop.xlane.xlu0 %1493
      %v1495 = vsel %vm988, %v1491, -inf
      %1496 = vmax.xlane.f32.xlu0 %v1495
      %v1497 = vpop.xlane.xlu0 %1496
      %v1498 = vsub.f32 %v1490, %v1494
      %v1499 = vsub.f32 %v1491, %v1497
      %v1500 = vmul.f32 %v1498, 1.442695
      %v1501 = vpow.pop %v1500
      %v1502 = vmul.f32 %v1499, 1.442695
      %v1503 = vpow.pop %v1502
      %v1504 = vsel %vm988, %v1501, 0.0
      %1505 = vadd.xlane.f32.xlu0 %v1504
      %v1506 = vpop.xlane.xlu0 %1505
      %v1507 = vsel %vm988, %v1503, 0.0
      %1508 = vadd.xlane.f32.xlu0 %v1507
      %v1509 = vpop.xlane.xlu0 %1508
      %v1510 = vrcp.pop %v1506
      %v1511 = vrcp.pop %v1509
      %v1512 = vmul.f32 %v1501, %v1510
      %v1513 = vmul.f32 %v1503, %v1511
      %1514 = vrot.lane.b32.xlu0 %v947, 56
      %v1515 = vpop.permute.xlu0 %1514
      %v1518 = vsel %vm988, %v1512, 0
      %1520 = vmatprep.subr.mxu0 0.0
      %1521 = vmatpush1.msra.mxu0 0.0
      %1522 = vmatprep.subr.mxu0 0.0
      %1523 = vmatpush1.msra.mxu0 0.0
      %1524 = vmatprep.subr.mxu0 0.0
      %1525 = vmatpush1.msra.mxu0 0.0
      %1526 = vmatprep.subr.mxu0 0.0
      %1527 = vmatpush1.msra.mxu0 0.0
      %1528 = vmatprep.subr.mxu0 0.0
      %1529 = vmatpush1.msra.mxu0 0.0
      %1530 = vmatprep.subr.mxu0 0.0
      %1531 = vmatpush1.msra.mxu0 0.0
      %1532 = vmatprep.subr.mxu0 0.0
      %1533 = vmatpush1.msra.mxu0 0.0
      %1534 = vmatprep.subr.mxu0 0.0
      %1535 = vmatpush1.msra.mxu0 0.0
      %1536 = vmatprep.subr.mxu0 0.0
      %1537 = vmatpush1.msra.mxu0 0.0
      %1538 = vmatprep.subr.mxu0 0.0
      %1539 = vmatpush1.msra.mxu0 0.0
      %1540 = vmatprep.subr.mxu0 0.0
      %1541 = vmatpush1.msra.mxu0 0.0
      %1542 = vmatprep.subr.mxu0 0.0
      %1543 = vmatpush1.msra.mxu0 0.0
      %1544 = vmatprep.subr.mxu0 0.0
      %1545 = vmatpush1.msra.mxu0 0.0
      %1546 = vmatprep.subr.mxu0 0.0
      %1547 = vmatpush1.msra.mxu0 0.0
      %1548 = vmatprep.subr.mxu0 0.0
      %1549 = vmatpush1.msra.mxu0 0.0
      %1550 = vmatprep.subr.mxu0 0.0
      %1551 = vmatpush1.msra.mxu0 %v1515
      %1552 = vmatprep.subr.mxu0 0.0
      %1553 = vmatpush2.msra.mxu0 0.0
      %1554 = vmatprep.subr.mxu0 0.0
      %1555 = vmatpush2.msra.mxu0 0.0
      %1556 = vmatprep.subr.mxu0 0.0
      %1557 = vmatpush2.msra.mxu0 0.0
      %1558 = vmatprep.subr.mxu0 0.0
      %1559 = vmatpush2.msra.mxu0 0.0
      %1560 = vmatprep.subr.mxu0 0.0
      %1561 = vmatpush2.msra.mxu0 0.0
      %1562 = vmatprep.subr.mxu0 0.0
      %1563 = vmatpush2.msra.mxu0 0.0
      %1564 = vmatprep.subr.mxu0 0.0
      %1565 = vmatpush2.msra.mxu0 0.0
      %1566 = vmatprep.subr.mxu0 0.0
      %1567 = vmatpush2.msra.mxu0 0.0
      %1568 = vmatprep.subr.mxu0 0.0
      %1569 = vmatpush2.msra.mxu0 0.0
      %1570 = vmatprep.subr.mxu0 0.0
      %1571 = vmatpush2.msra.mxu0 0.0
      %1572 = vmatprep.subr.mxu0 0.0
      %1573 = vmatpush2.msra.mxu0 0.0
      %1574 = vmatprep.subr.mxu0 0.0
      %1575 = vmatpush2.msra.mxu0 0.0
      %1576 = vmatprep.subr.mxu0 0.0
      %1577 = vmatpush2.msra.mxu0 0.0
      %1578 = vmatprep.subr.mxu0 0.0
      %1579 = vmatpush2.msra.mxu0 0.0
      %1580 = vmatprep.subr.mxu0 0.0
      %1581 = vmatpush2.msra.mxu0 0.0
      %1582 = vmatprep.subr.mxu0 0.0
      %1583 = vmatpush2.msra.mxu0 0.0
      %1584 = vmatprep.mubr.f32.mxu0 0.0
      %1585 = vmatmul.mubr.f32.gmra.mxu0 %v1518
      %v1586 = vpop.f32.mrf.mxu0
      %v1587 = vadd.f32 0.0, %v1586
      %v1588 = vpop.f32.mrf.mxu0
      %1589 = vdwg.mxu0
      %1590 = vrot.lane.b32.xlu0 %v952, 56
      %v1591 = vpop.permute.xlu0 %1590
      %v1594 = vsel %vm988, %v1513, 0
      %1596 = vmatprep.subr.mxu0 0.0
      %1597 = vmatpush1.msra.mxu0 0.0
      %1598 = vmatprep.subr.mxu0 0.0
      %1599 = vmatpush1.msra.mxu0 0.0
      %1600 = vmatprep.subr.mxu0 0.0
      %1601 = vmatpush1.msra.mxu0 0.0
      %1602 = vmatprep.subr.mxu0 0.0
      %1603 = vmatpush1.msra.mxu0 0.0
      %1604 = vmatprep.subr.mxu0 0.0
      %1605 = vmatpush1.msra.mxu0 0.0
      %1606 = vmatprep.subr.mxu0 0.0
      %1607 = vmatpush1.msra.mxu0 0.0
      %1608 = vmatprep.subr.mxu0 0.0
      %1609 = vmatpush1.msra.mxu0 0.0
      %1610 = vmatprep.subr.mxu0 0.0
      %1611 = vmatpush1.msra.mxu0 0.0
      %1612 = vmatprep.subr.mxu0 0.0
      %1613 = vmatpush1.msra.mxu0 0.0
      %1614 = vmatprep.subr.mxu0 0.0
      %1615 = vmatpush1.msra.mxu0 0.0
      %1616 = vmatprep.subr.mxu0 0.0
      %1617 = vmatpush1.msra.mxu0 0.0
      %1618 = vmatprep.subr.mxu0 0.0
      %1619 = vmatpush1.msra.mxu0 0.0
      %1620 = vmatprep.subr.mxu0 0.0
      %1621 = vmatpush1.msra.mxu0 0.0
      %1622 = vmatprep.subr.mxu0 0.0
      %1623 = vmatpush1.msra.mxu0 0.0
      %1624 = vmatprep.subr.mxu0 0.0
      %1625 = vmatpush1.msra.mxu0 0.0
      %1626 = vmatprep.subr.mxu0 0.0
      %1627 = vmatpush1.msra.mxu0 %v1591
      %1628 = vmatprep.subr.mxu0 0.0
      %1629 = vmatpush2.msra.mxu0 0.0
      %1630 = vmatprep.subr.mxu0 0.0
      %1631 = vmatpush2.msra.mxu0 0.0
      %1632 = vmatprep.subr.mxu0 0.0
      %1633 = vmatpush2.msra.mxu0 0.0
      %1634 = vmatprep.subr.mxu0 0.0
      %1635 = vmatpush2.msra.mxu0 0.0
      %1636 = vmatprep.subr.mxu0 0.0
      %1637 = vmatpush2.msra.mxu0 0.0
      %1638 = vmatprep.subr.mxu0 0.0
      %1639 = vmatpush2.msra.mxu0 0.0
      %1640 = vmatprep.subr.mxu0 0.0
      %1641 = vmatpush2.msra.mxu0 0.0
      %1642 = vmatprep.subr.mxu0 0.0
      %1643 = vmatpush2.msra.mxu0 0.0
      %1644 = vmatprep.subr.mxu0 0.0
      %1645 = vmatpush2.msra.mxu0 0.0
      %1646 = vmatprep.subr.mxu0 0.0
      %1647 = vmatpush2.msra.mxu0 0.0
      %1648 = vmatprep.subr.mxu0 0.0
      %1649 = vmatpush2.msra.mxu0 0.0
      %1650 = vmatprep.subr.mxu0 0.0
      %1651 = vmatpush2.msra.mxu0 0.0
      %1652 = vmatprep.subr.mxu0 0.0
      %1653 = vmatpush2.msra.mxu0 0.0
      %1654 = vmatprep.subr.mxu0 0.0
      %1655 = vmatpush2.msra.mxu0 0.0
      %1656 = vmatprep.subr.mxu0 0.0
      %1657 = vmatpush2.msra.mxu0 0.0
      %1658 = vmatprep.subr.mxu0 0.0
      %1659 = vmatpush2.msra.mxu0 0.0
      %1660 = vmatprep.mubr.f32.mxu0 0.0
      %1661 = vmatmul.mubr.f32.gmra.mxu0 %v1594
      %v1662 = vpop.f32.mrf.mxu0
      %v1663 = vadd.f32 0.0, %v1662
      %v1664 = vpop.f32.mrf.mxu0
      %1665 = vdwg.mxu0
      %v1667 = vsel %vm988, %v1587, 0
      %v1670 = vsel %vm988, %v1663, 0
      %1672 = vmatprep.subr.mxu0 0.0
      %1673 = vmatpush1.msra.mxu0 0.0
      %1674 = vmatprep.subr.mxu0 0.0
      %1675 = vmatpush1.msra.mxu0 0.0
      %1676 = vmatprep.subr.mxu0 0.0
      %1677 = vmatpush1.msra.mxu0 0.0
      %1678 = vmatprep.subr.mxu0 0.0
      %1679 = vmatpush1.msra.mxu0 0.0
      %1680 = vmatprep.subr.mxu0 0.0
      %1681 = vmatpush1.msra.mxu0 0.0
      %1682 = vmatprep.subr.mxu0 0.0
      %1683 = vmatpush1.msra.mxu0 0.0
      %1684 = vmatprep.subr.mxu0 0.0
      %1685 = vmatpush1.msra.mxu0 0.0
      %1686 = vmatprep.subr.mxu0 0.0
      %1687 = vmatpush1.msra.mxu0 0.0
      %1688 = vmatprep.subr.mxu0 0.0
      %1689 = vmatpush1.msra.mxu0 0.0
      %1690 = vmatprep.subr.mxu0 0.0
      %1691 = vmatpush1.msra.mxu0 0.0
      %1692 = vmatprep.subr.mxu0 0.0
      %1693 = vmatpush1.msra.mxu0 0.0
      %1694 = vmatprep.subr.mxu0 0.0
      %1695 = vmatpush1.msra.mxu0 0.0
      %1696 = vmatprep.subr.mxu0 0.0
      %1697 = vmatpush1.msra.mxu0 0.0
      %1698 = vmatprep.subr.mxu0 0.0
      %1699 = vmatpush1.msra.mxu0 0.0
      %1700 = vmatprep.subr.mxu0 0.0
      %1701 = vmatpush1.msra.mxu0 0.0
      %1702 = vmatprep.subr.mxu0 0.0
      %1703 = vmatpush1.msra.mxu0 %v982
      %1704 = vmatprep.subr.mxu0 0.0
      %1705 = vmatpush2.msra.mxu0 0.0
      %1706 = vmatprep.subr.mxu0 0.0
      %1707 = vmatpush2.msra.mxu0 0.0
      %1708 = vmatprep.subr.mxu0 0.0
      %1709 = vmatpush2.msra.mxu0 0.0
      %1710 = vmatprep.subr.mxu0 0.0
      %1711 = vmatpush2.msra.mxu0 0.0
      %1712 = vmatprep.subr.mxu0 0.0
      %1713 = vmatpush2.msra.mxu0 0.0
      %1714 = vmatprep.subr.mxu0 0.0
      %1715 = vmatpush2.msra.mxu0 0.0
      %1716 = vmatprep.subr.mxu0 0.0
      %1717 = vmatpush2.msra.mxu0 0.0
      %1718 = vmatprep.subr.mxu0 0.0
      %1719 = vmatpush2.msra.mxu0 0.0
      %1720 = vmatprep.subr.mxu0 0.0
      %1721 = vmatpush2.msra.mxu0 0.0
      %1722 = vmatprep.subr.mxu0 0.0
      %1723 = vmatpush2.msra.mxu0 0.0
      %1724 = vmatprep.subr.mxu0 0.0
      %1725 = vmatpush2.msra.mxu0 0.0
      %1726 = vmatprep.subr.mxu0 0.0
      %1727 = vmatpush2.msra.mxu0 0.0
      %1728 = vmatprep.subr.mxu0 0.0
      %1729 = vmatpush2.msra.mxu0 0.0
      %1730 = vmatprep.subr.mxu0 0.0
      %1731 = vmatpush2.msra.mxu0 0.0
      %1732 = vmatprep.subr.mxu0 0.0
      %1733 = vmatpush2.msra.mxu0 0.0
      %1734 = vmatprep.subr.mxu0 0.0
      %1735 = vmatpush2.msra.mxu0 0.0
      %1736 = vmatprep.mubr.f32.mxu0 0.0
      %1737 = vmatmul.mubr.f32.gmra.mxu0 %v1667
      %v1738 = vpop.f32.mrf.mxu0
      %v1739 = vadd.f32 0.0, %v1738
      %v1740 = vpop.f32.mrf.mxu0
      %1741 = vmatprep.mubr.f32.mxu0 0.0
      %1742 = vmatmul.mubr.f32.gmra.mxu0 %v1670
      %v1743 = vpop.f32.mrf.mxu0
      %v1744 = vadd.f32 0.0, %v1743
      %v1745 = vpop.f32.mrf.mxu0
      %1746 = vdwg.mxu0
      %v1748 = vsel %vm988, %v1253, 0
      %v1751 = vsel %vm988, %v1329, 0
      %1753 = vmatprep.subr.mxu0 0.0
      %1754 = vmatpush1.msra.mxu0 0.0
      %1755 = vmatprep.subr.mxu0 0.0
      %1756 = vmatpush1.msra.mxu0 0.0
      %1757 = vmatprep.subr.mxu0 0.0
      %1758 = vmatpush1.msra.mxu0 0.0
      %1759 = vmatprep.subr.mxu0 0.0
      %1760 = vmatpush1.msra.mxu0 0.0
      %1761 = vmatprep.subr.mxu0 0.0
      %1762 = vmatpush1.msra.mxu0 0.0
      %1763 = vmatprep.subr.mxu0 0.0
      %1764 = vmatpush1.msra.mxu0 0.0
      %1765 = vmatprep.subr.mxu0 0.0
      %1766 = vmatpush1.msra.mxu0 0.0
      %1767 = vmatprep.subr.mxu0 0.0
      %1768 = vmatpush1.msra.mxu0 0.0
      %1769 = vmatprep.subr.mxu0 0.0
      %1770 = vmatpush1.msra.mxu0 0.0
      %1771 = vmatprep.subr.mxu0 0.0
      %1772 = vmatpush1.msra.mxu0 0.0
      %1773 = vmatprep.subr.mxu0 0.0
      %1774 = vmatpush1.msra.mxu0 0.0
      %1775 = vmatprep.subr.mxu0 0.0
      %1776 = vmatpush1.msra.mxu0 0.0
      %1777 = vmatprep.subr.mxu0 0.0
      %1778 = vmatpush1.msra.mxu0 0.0
      %1779 = vmatprep.subr.mxu0 0.0
      %1780 = vmatpush1.msra.mxu0 0.0
      %1781 = vmatprep.subr.mxu0 0.0
      %1782 = vmatpush1.msra.mxu0 0.0
      %1783 = vmatprep.subr.mxu0 0.0
      %1784 = vmatpush1.msra.mxu0 %v981
      %1785 = vmatprep.subr.mxu0 0.0
      %1786 = vmatpush2.msra.mxu0 0.0
      %1787 = vmatprep.subr.mxu0 0.0
      %1788 = vmatpush2.msra.mxu0 0.0
      %1789 = vmatprep.subr.mxu0 0.0
      %1790 = vmatpush2.msra.mxu0 0.0
      %1791 = vmatprep.subr.mxu0 0.0
      %1792 = vmatpush2.msra.mxu0 0.0
      %1793 = vmatprep.subr.mxu0 0.0
      %1794 = vmatpush2.msra.mxu0 0.0
      %1795 = vmatprep.subr.mxu0 0.0
      %1796 = vmatpush2.msra.mxu0 0.0
      %1797 = vmatprep.subr.mxu0 0.0
      %1798 = vmatpush2.msra.mxu0 0.0
      %1799 = vmatprep.subr.mxu0 0.0
      %1800 = vmatpush2.msra.mxu0 0.0
      %1801 = vmatprep.subr.mxu0 0.0
      %1802 = vmatpush2.msra.mxu0 0.0
      %1803 = vmatprep.subr.mxu0 0.0
      %1804 = vmatpush2.msra.mxu0 0.0
      %1805 = vmatprep.subr.mxu0 0.0
      %1806 = vmatpush2.msra.mxu0 0.0
      %1807 = vmatprep.subr.mxu0 0.0
      %1808 = vmatpush2.msra.mxu0 0.0
      %1809 = vmatprep.subr.mxu0 0.0
      %1810 = vmatpush2.msra.mxu0 0.0
      %1811 = vmatprep.subr.mxu0 0.0
      %1812 = vmatpush2.msra.mxu0 0.0
      %1813 = vmatprep.subr.mxu0 0.0
      %1814 = vmatpush2.msra.mxu0 0.0
      %1815 = vmatprep.subr.mxu0 0.0
      %1816 = vmatpush2.msra.mxu0 0.0
      %1817 = vmatprep.mubr.f32.mxu0 0.0
      %1818 = vmatmul.mubr.f32.gmra.mxu0 %v1748
      %v1819 = vpop.f32.mrf.mxu0
      %v1820 = vadd.f32 %v1739, %v1819
      %v1821 = vpop.f32.mrf.mxu0
      %1822 = vmatprep.mubr.f32.mxu0 0.0
      %1823 = vmatmul.mubr.f32.gmra.mxu0 %v1751
      %v1824 = vpop.f32.mrf.mxu0
      %v1825 = vadd.f32 %v1744, %v1824
      %v1826 = vpop.f32.mrf.mxu0
      %1827 = vdwg.mxu0
      %1828 = vrot.lane.b32.xlu0 %v947, 112
      %v1829 = vpop.permute.xlu0 %1828
      %1830 = vrot.lane.b32.xlu0 %v947, 80
      %v1831 = vpop.permute.xlu0 %1830
      %v1832 = vsel %vm988, %v1829, 0
      %v1834 = vsel %vm988, %v1831, 0
      %1836 = vmatprep.subr.mxu0 0.0
      %1837 = vmatpush1.xpose.msra.mxu0 0.0
      %1838 = vmatprep.subr.mxu0 0.0
      %1839 = vmatpush1.xpose.msra.mxu0 0.0
      %1840 = vmatprep.subr.mxu0 0.0
      %1841 = vmatpush1.xpose.msra.mxu0 0.0
      %1842 = vmatprep.subr.mxu0 0.0
      %1843 = vmatpush1.xpose.msra.mxu0 0.0
      %1844 = vmatprep.subr.mxu0 0.0
      %1845 = vmatpush1.xpose.msra.mxu0 0.0
      %1846 = vmatprep.subr.mxu0 0.0
      %1847 = vmatpush1.xpose.msra.mxu0 0.0
      %1848 = vmatprep.subr.mxu0 0.0
      %1849 = vmatpush1.xpose.msra.mxu0 0.0
      %1850 = vmatprep.subr.mxu0 0.0
      %1851 = vmatpush1.xpose.msra.mxu0 0.0
      %1852 = vmatprep.subr.mxu0 0.0
      %1853 = vmatpush1.xpose.msra.mxu0 0.0
      %1854 = vmatprep.subr.mxu0 0.0
      %1855 = vmatpush1.xpose.msra.mxu0 0.0
      %1856 = vmatprep.subr.mxu0 0.0
      %1857 = vmatpush1.xpose.msra.mxu0 0.0
      %1858 = vmatprep.subr.mxu0 0.0
      %1859 = vmatpush1.xpose.msra.mxu0 0.0
      %1860 = vmatprep.subr.mxu0 0.0
      %1861 = vmatpush1.xpose.msra.mxu0 0.0
      %1862 = vmatprep.subr.mxu0 0.0
      %1863 = vmatpush1.xpose.msra.mxu0 0.0
      %1864 = vmatprep.subr.mxu0 0.0
      %1865 = vmatpush1.xpose.msra.mxu0 0.0
      %1866 = vmatprep.subr.mxu0 0.0
      %1867 = vmatpush1.xpose.msra.mxu0 %v1834
      %1868 = vmatprep.subr.mxu0 0.0
      %1869 = vmatpush2.xpose.msra.mxu0 0.0
      %1870 = vmatprep.subr.mxu0 0.0
      %1871 = vmatpush2.xpose.msra.mxu0 0.0
      %1872 = vmatprep.subr.mxu0 0.0
      %1873 = vmatpush2.xpose.msra.mxu0 0.0
      %1874 = vmatprep.subr.mxu0 0.0
      %1875 = vmatpush2.xpose.msra.mxu0 0.0
      %1876 = vmatprep.subr.mxu0 0.0
      %1877 = vmatpush2.xpose.msra.mxu0 0.0
      %1878 = vmatprep.subr.mxu0 0.0
      %1879 = vmatpush2.xpose.msra.mxu0 0.0
      %1880 = vmatprep.subr.mxu0 0.0
      %1881 = vmatpush2.xpose.msra.mxu0 0.0
      %1882 = vmatprep.subr.mxu0 0.0
      %1883 = vmatpush2.xpose.msra.mxu0 0.0
      %1884 = vmatprep.subr.mxu0 0.0
      %1885 = vmatpush2.xpose.msra.mxu0 0.0
      %1886 = vmatprep.subr.mxu0 0.0
      %1887 = vmatpush2.xpose.msra.mxu0 0.0
      %1888 = vmatprep.subr.mxu0 0.0
      %1889 = vmatpush2.xpose.msra.mxu0 0.0
      %1890 = vmatprep.subr.mxu0 0.0
      %1891 = vmatpush2.xpose.msra.mxu0 0.0
      %1892 = vmatprep.subr.mxu0 0.0
      %1893 = vmatpush2.xpose.msra.mxu0 0.0
      %1894 = vmatprep.subr.mxu0 0.0
      %1895 = vmatpush2.xpose.msra.mxu0 0.0
      %1896 = vmatprep.subr.mxu0 0.0
      %1897 = vmatpush2.xpose.msra.mxu0 0.0
      %1898 = vmatprep.subr.mxu0 0.0
      %1899 = vmatpush2.xpose.msra.mxu0 0.0
      %1900 = vmatprep.mubr.f32.mxu0 0.0
      %1901 = vmatmul.mubr.f32.gmra.mxu0 %v1832
      %v1902 = vpop.f32.mrf.mxu0
      %v1903 = vadd.f32 0.0, %v1902
      %v1904 = vpop.f32.mrf.mxu0
      %1905 = vdwg.mxu0
      %1906 = vrot.lane.b32.xlu0 %v952, 112
      %v1907 = vpop.permute.xlu0 %1906
      %1908 = vrot.lane.b32.xlu0 %v952, 80
      %v1909 = vpop.permute.xlu0 %1908
      %v1910 = vsel %vm988, %v1907, 0
      %v1912 = vsel %vm988, %v1909, 0
      %1914 = vmatprep.subr.mxu0 0.0
      %1915 = vmatpush1.xpose.msra.mxu0 0.0
      %1916 = vmatprep.subr.mxu0 0.0
      %1917 = vmatpush1.xpose.msra.mxu0 0.0
      %1918 = vmatprep.subr.mxu0 0.0
      %1919 = vmatpush1.xpose.msra.mxu0 0.0
      %1920 = vmatprep.subr.mxu0 0.0
      %1921 = vmatpush1.xpose.msra.mxu0 0.0
      %1922 = vmatprep.subr.mxu0 0.0
      %1923 = vmatpush1.xpose.msra.mxu0 0.0
      %1924 = vmatprep.subr.mxu0 0.0
      %1925 = vmatpush1.xpose.msra.mxu0 0.0
      %1926 = vmatprep.subr.mxu0 0.0
      %1927 = vmatpush1.xpose.msra.mxu0 0.0
      %1928 = vmatprep.subr.mxu0 0.0
      %1929 = vmatpush1.xpose.msra.mxu0 0.0
      %1930 = vmatprep.subr.mxu0 0.0
      %1931 = vmatpush1.xpose.msra.mxu0 0.0
      %1932 = vmatprep.subr.mxu0 0.0
      %1933 = vmatpush1.xpose.msra.mxu0 0.0
      %1934 = vmatprep.subr.mxu0 0.0
      %1935 = vmatpush1.xpose.msra.mxu0 0.0
      %1936 = vmatprep.subr.mxu0 0.0
      %1937 = vmatpush1.xpose.msra.mxu0 0.0
      %1938 = vmatprep.subr.mxu0 0.0
      %1939 = vmatpush1.xpose.msra.mxu0 0.0
      %1940 = vmatprep.subr.mxu0 0.0
      %1941 = vmatpush1.xpose.msra.mxu0 0.0
      %1942 = vmatprep.subr.mxu0 0.0
      %1943 = vmatpush1.xpose.msra.mxu0 0.0
      %1944 = vmatprep.subr.mxu0 0.0
      %1945 = vmatpush1.xpose.msra.mxu0 %v1912
      %1946 = vmatprep.subr.mxu0 0.0
      %1947 = vmatpush2.xpose.msra.mxu0 0.0
      %1948 = vmatprep.subr.mxu0 0.0
      %1949 = vmatpush2.xpose.msra.mxu0 0.0
      %1950 = vmatprep.subr.mxu0 0.0
      %1951 = vmatpush2.xpose.msra.mxu0 0.0
      %1952 = vmatprep.subr.mxu0 0.0
      %1953 = vmatpush2.xpose.msra.mxu0 0.0
      %1954 = vmatprep.subr.mxu0 0.0
      %1955 = vmatpush2.xpose.msra.mxu0 0.0
      %1956 = vmatprep.subr.mxu0 0.0
      %1957 = vmatpush2.xpose.msra.mxu0 0.0
      %1958 = vmatprep.subr.mxu0 0.0
      %1959 = vmatpush2.xpose.msra.mxu0 0.0
      %1960 = vmatprep.subr.mxu0 0.0
      %1961 = vmatpush2.xpose.msra.mxu0 0.0
      %1962 = vmatprep.subr.mxu0 0.0
      %1963 = vmatpush2.xpose.msra.mxu0 0.0
      %1964 = vmatprep.subr.mxu0 0.0
      %1965 = vmatpush2.xpose.msra.mxu0 0.0
      %1966 = vmatprep.subr.mxu0 0.0
      %1967 = vmatpush2.xpose.msra.mxu0 0.0
      %1968 = vmatprep.subr.mxu0 0.0
      %1969 = vmatpush2.xpose.msra.mxu0 0.0
      %1970 = vmatprep.subr.mxu0 0.0
      %1971 = vmatpush2.xpose.msra.mxu0 0.0
      %1972 = vmatprep.subr.mxu0 0.0
      %1973 = vmatpush2.xpose.msra.mxu0 0.0
      %1974 = vmatprep.subr.mxu0 0.0
      %1975 = vmatpush2.xpose.msra.mxu0 0.0
      %1976 = vmatprep.subr.mxu0 0.0
      %1977 = vmatpush2.xpose.msra.mxu0 0.0
      %1978 = vmatprep.mubr.f32.mxu0 0.0
      %1979 = vmatmul.mubr.f32.gmra.mxu0 %v1910
      %v1980 = vpop.f32.mrf.mxu0
      %v1981 = vadd.f32 0.0, %v1980
      %v1982 = vpop.f32.mrf.mxu0
      %1983 = vdwg.mxu0
      %v1984 = vmul.f32 %v1903, 0.35355338
      %v1985 = vmul.f32 %v1981, 0.35355338
      %v1986 = vsel %vm1154, -1e+09, %v1984
      %v1987 = vsel %vm1155, -1e+09, %v1985
      %v1988 = vsel %vm988, %v1986, -inf
      %1989 = vmax.xlane.f32.xlu0 %v1988
      %v1990 = vpop.xlane.xlu0 %1989
      %v1991 = vsel %vm988, %v1987, -inf
      %1992 = vmax.xlane.f32.xlu0 %v1991
      %v1993 = vpop.xlane.xlu0 %1992
      %v1994 = vsub.f32 %v1986, %v1990
      %v1995 = vsub.f32 %v1987, %v1993
      %v1996 = vmul.f32 %v1994, 1.442695
      %v1997 = vpow.pop %v1996
      %v1998 = vmul.f32 %v1995, 1.442695
      %v1999 = vpow.pop %v1998
      %v2000 = vsel %vm988, %v1997, 0.0
      %2001 = vadd.xlane.f32.xlu0 %v2000
      %v2002 = vpop.xlane.xlu0 %2001
      %v2003 = vsel %vm988, %v1999, 0.0
      %2004 = vadd.xlane.f32.xlu0 %v2003
      %v2005 = vpop.xlane.xlu0 %2004
      %v2006 = vrcp.pop %v2002
      %v2007 = vrcp.pop %v2005
      %v2008 = vmul.f32 %v1997, %v2006
      %v2009 = vmul.f32 %v1999, %v2007
      %2010 = vrot.lane.b32.xlu0 %v947, 48
      %v2011 = vpop.permute.xlu0 %2010
      %v2014 = vsel %vm988, %v2008, 0
      %2016 = vmatprep.subr.mxu0 0.0
      %2017 = vmatpush1.msra.mxu0 0.0
      %2018 = vmatprep.subr.mxu0 0.0
      %2019 = vmatpush1.msra.mxu0 0.0
      %2020 = vmatprep.subr.mxu0 0.0
      %2021 = vmatpush1.msra.mxu0 0.0
      %2022 = vmatprep.subr.mxu0 0.0
      %2023 = vmatpush1.msra.mxu0 0.0
      %2024 = vmatprep.subr.mxu0 0.0
      %2025 = vmatpush1.msra.mxu0 0.0
      %2026 = vmatprep.subr.mxu0 0.0
      %2027 = vmatpush1.msra.mxu0 0.0
      %2028 = vmatprep.subr.mxu0 0.0
      %2029 = vmatpush1.msra.mxu0 0.0
      %2030 = vmatprep.subr.mxu0 0.0
      %2031 = vmatpush1.msra.mxu0 0.0
      %2032 = vmatprep.subr.mxu0 0.0
      %2033 = vmatpush1.msra.mxu0 0.0
      %2034 = vmatprep.subr.mxu0 0.0
      %2035 = vmatpush1.msra.mxu0 0.0
      %2036 = vmatprep.subr.mxu0 0.0
      %2037 = vmatpush1.msra.mxu0 0.0
      %2038 = vmatprep.subr.mxu0 0.0
      %2039 = vmatpush1.msra.mxu0 0.0
      %2040 = vmatprep.subr.mxu0 0.0
      %2041 = vmatpush1.msra.mxu0 0.0
      %2042 = vmatprep.subr.mxu0 0.0
      %2043 = vmatpush1.msra.mxu0 0.0
      %2044 = vmatprep.subr.mxu0 0.0
      %2045 = vmatpush1.msra.mxu0 0.0
      %2046 = vmatprep.subr.mxu0 0.0
      %2047 = vmatpush1.msra.mxu0 %v2011
      %2048 = vmatprep.subr.mxu0 0.0
      %2049 = vmatpush2.msra.mxu0 0.0
      %2050 = vmatprep.subr.mxu0 0.0
      %2051 = vmatpush2.msra.mxu0 0.0
      %2052 = vmatprep.subr.mxu0 0.0
      %2053 = vmatpush2.msra.mxu0 0.0
      %2054 = vmatprep.subr.mxu0 0.0
      %2055 = vmatpush2.msra.mxu0 0.0
      %2056 = vmatprep.subr.mxu0 0.0
      %2057 = vmatpush2.msra.mxu0 0.0
      %2058 = vmatprep.subr.mxu0 0.0
      %2059 = vmatpush2.msra.mxu0 0.0
      %2060 = vmatprep.subr.mxu0 0.0
      %2061 = vmatpush2.msra.mxu0 0.0
      %2062 = vmatprep.subr.mxu0 0.0
      %2063 = vmatpush2.msra.mxu0 0.0
      %2064 = vmatprep.subr.mxu0 0.0
      %2065 = vmatpush2.msra.mxu0 0.0
      %2066 = vmatprep.subr.mxu0 0.0
      %2067 = vmatpush2.msra.mxu0 0.0
      %2068 = vmatprep.subr.mxu0 0.0
      %2069 = vmatpush2.msra.mxu0 0.0
      %2070 = vmatprep.subr.mxu0 0.0
      %2071 = vmatpush2.msra.mxu0 0.0
      %2072 = vmatprep.subr.mxu0 0.0
      %2073 = vmatpush2.msra.mxu0 0.0
      %2074 = vmatprep.subr.mxu0 0.0
      %2075 = vmatpush2.msra.mxu0 0.0
      %2076 = vmatprep.subr.mxu0 0.0
      %2077 = vmatpush2.msra.mxu0 0.0
      %2078 = vmatprep.subr.mxu0 0.0
      %2079 = vmatpush2.msra.mxu0 0.0
      %2080 = vmatprep.mubr.f32.mxu0 0.0
      %2081 = vmatmul.mubr.f32.gmra.mxu0 %v2014
      %v2082 = vpop.f32.mrf.mxu0
      %v2083 = vadd.f32 0.0, %v2082
      %v2084 = vpop.f32.mrf.mxu0
      %2085 = vdwg.mxu0
      %2086 = vrot.lane.b32.xlu0 %v952, 48
      %v2087 = vpop.permute.xlu0 %2086
      %v2090 = vsel %vm988, %v2009, 0
      %2092 = vmatprep.subr.mxu0 0.0
      %2093 = vmatpush1.msra.mxu0 0.0
      %2094 = vmatprep.subr.mxu0 0.0
      %2095 = vmatpush1.msra.mxu0 0.0
      %2096 = vmatprep.subr.mxu0 0.0
      %2097 = vmatpush1.msra.mxu0 0.0
      %2098 = vmatprep.subr.mxu0 0.0
      %2099 = vmatpush1.msra.mxu0 0.0
      %2100 = vmatprep.subr.mxu0 0.0
      %2101 = vmatpush1.msra.mxu0 0.0
      %2102 = vmatprep.subr.mxu0 0.0
      %2103 = vmatpush1.msra.mxu0 0.0
      %2104 = vmatprep.subr.mxu0 0.0
      %2105 = vmatpush1.msra.mxu0 0.0
      %2106 = vmatprep.subr.mxu0 0.0
      %2107 = vmatpush1.msra.mxu0 0.0
      %2108 = vmatprep.subr.mxu0 0.0
      %2109 = vmatpush1.msra.mxu0 0.0
      %2110 = vmatprep.subr.mxu0 0.0
      %2111 = vmatpush1.msra.mxu0 0.0
      %2112 = vmatprep.subr.mxu0 0.0
      %2113 = vmatpush1.msra.mxu0 0.0
      %2114 = vmatprep.subr.mxu0 0.0
      %2115 = vmatpush1.msra.mxu0 0.0
      %2116 = vmatprep.subr.mxu0 0.0
      %2117 = vmatpush1.msra.mxu0 0.0
      %2118 = vmatprep.subr.mxu0 0.0
      %2119 = vmatpush1.msra.mxu0 0.0
      %2120 = vmatprep.subr.mxu0 0.0
      %2121 = vmatpush1.msra.mxu0 0.0
      %2122 = vmatprep.subr.mxu0 0.0
      %2123 = vmatpush1.msra.mxu0 %v2087
      %2124 = vmatprep.subr.mxu0 0.0
      %2125 = vmatpush2.msra.mxu0 0.0
      %2126 = vmatprep.subr.mxu0 0.0
      %2127 = vmatpush2.msra.mxu0 0.0
      %2128 = vmatprep.subr.mxu0 0.0
      %2129 = vmatpush2.msra.mxu0 0.0
      %2130 = vmatprep.subr.mxu0 0.0
      %2131 = vmatpush2.msra.mxu0 0.0
      %2132 = vmatprep.subr.mxu0 0.0
      %2133 = vmatpush2.msra.mxu0 0.0
      %2134 = vmatprep.subr.mxu0 0.0
      %2135 = vmatpush2.msra.mxu0 0.0
      %2136 = vmatprep.subr.mxu0 0.0
      %2137 = vmatpush2.msra.mxu0 0.0
      %2138 = vmatprep.subr.mxu0 0.0
      %2139 = vmatpush2.msra.mxu0 0.0
      %2140 = vmatprep.subr.mxu0 0.0
      %2141 = vmatpush2.msra.mxu0 0.0
      %2142 = vmatprep.subr.mxu0 0.0
      %2143 = vmatpush2.msra.mxu0 0.0
      %2144 = vmatprep.subr.mxu0 0.0
      %2145 = vmatpush2.msra.mxu0 0.0
      %2146 = vmatprep.subr.mxu0 0.0
      %2147 = vmatpush2.msra.mxu0 0.0
      %2148 = vmatprep.subr.mxu0 0.0
      %2149 = vmatpush2.msra.mxu0 0.0
      %2150 = vmatprep.subr.mxu0 0.0
      %2151 = vmatpush2.msra.mxu0 0.0
      %2152 = vmatprep.subr.mxu0 0.0
      %2153 = vmatpush2.msra.mxu0 0.0
      %2154 = vmatprep.subr.mxu0 0.0
      %2155 = vmatpush2.msra.mxu0 0.0
      %2156 = vmatprep.mubr.f32.mxu0 0.0
      %2157 = vmatmul.mubr.f32.gmra.mxu0 %v2090
      %v2158 = vpop.f32.mrf.mxu0
      %v2159 = vadd.f32 0.0, %v2158
      %v2160 = vpop.f32.mrf.mxu0
      %2161 = vdwg.mxu0
      %v2163 = vsel %vm988, %v2083, 0
      %v2166 = vsel %vm988, %v2159, 0
      %2168 = vmatprep.subr.mxu0 0.0
      %2169 = vmatpush1.msra.mxu0 0.0
      %2170 = vmatprep.subr.mxu0 0.0
      %2171 = vmatpush1.msra.mxu0 0.0
      %2172 = vmatprep.subr.mxu0 0.0
      %2173 = vmatpush1.msra.mxu0 0.0
      %2174 = vmatprep.subr.mxu0 0.0
      %2175 = vmatpush1.msra.mxu0 0.0
      %2176 = vmatprep.subr.mxu0 0.0
      %2177 = vmatpush1.msra.mxu0 0.0
      %2178 = vmatprep.subr.mxu0 0.0
      %2179 = vmatpush1.msra.mxu0 0.0
      %2180 = vmatprep.subr.mxu0 0.0
      %2181 = vmatpush1.msra.mxu0 0.0
      %2182 = vmatprep.subr.mxu0 0.0
      %2183 = vmatpush1.msra.mxu0 0.0
      %2184 = vmatprep.subr.mxu0 0.0
      %2185 = vmatpush1.msra.mxu0 0.0
      %2186 = vmatprep.subr.mxu0 0.0
      %2187 = vmatpush1.msra.mxu0 0.0
      %2188 = vmatprep.subr.mxu0 0.0
      %2189 = vmatpush1.msra.mxu0 0.0
      %2190 = vmatprep.subr.mxu0 0.0
      %2191 = vmatpush1.msra.mxu0 0.0
      %2192 = vmatprep.subr.mxu0 0.0
      %2193 = vmatpush1.msra.mxu0 0.0
      %2194 = vmatprep.subr.mxu0 0.0
      %2195 = vmatpush1.msra.mxu0 0.0
      %2196 = vmatprep.subr.mxu0 0.0
      %2197 = vmatpush1.msra.mxu0 0.0
      %2198 = vmatprep.subr.mxu0 0.0
      %2199 = vmatpush1.msra.mxu0 %v983
      %2200 = vmatprep.subr.mxu0 0.0
      %2201 = vmatpush2.msra.mxu0 0.0
      %2202 = vmatprep.subr.mxu0 0.0
      %2203 = vmatpush2.msra.mxu0 0.0
      %2204 = vmatprep.subr.mxu0 0.0
      %2205 = vmatpush2.msra.mxu0 0.0
      %2206 = vmatprep.subr.mxu0 0.0
      %2207 = vmatpush2.msra.mxu0 0.0
      %2208 = vmatprep.subr.mxu0 0.0
      %2209 = vmatpush2.msra.mxu0 0.0
      %2210 = vmatprep.subr.mxu0 0.0
      %2211 = vmatpush2.msra.mxu0 0.0
      %2212 = vmatprep.subr.mxu0 0.0
      %2213 = vmatpush2.msra.mxu0 0.0
      %2214 = vmatprep.subr.mxu0 0.0
      %2215 = vmatpush2.msra.mxu0 0.0
      %2216 = vmatprep.subr.mxu0 0.0
      %2217 = vmatpush2.msra.mxu0 0.0
      %2218 = vmatprep.subr.mxu0 0.0
      %2219 = vmatpush2.msra.mxu0 0.0
      %2220 = vmatprep.subr.mxu0 0.0
      %2221 = vmatpush2.msra.mxu0 0.0
      %2222 = vmatprep.subr.mxu0 0.0
      %2223 = vmatpush2.msra.mxu0 0.0
      %2224 = vmatprep.subr.mxu0 0.0
      %2225 = vmatpush2.msra.mxu0 0.0
      %2226 = vmatprep.subr.mxu0 0.0
      %2227 = vmatpush2.msra.mxu0 0.0
      %2228 = vmatprep.subr.mxu0 0.0
      %2229 = vmatpush2.msra.mxu0 0.0
      %2230 = vmatprep.subr.mxu0 0.0
      %2231 = vmatpush2.msra.mxu0 0.0
      %2232 = vmatprep.mubr.f32.mxu0 0.0
      %2233 = vmatmul.mubr.f32.gmra.mxu0 %v2163
      %v2234 = vpop.f32.mrf.mxu0
      %v2235 = vadd.f32 0.0, %v2234
      %v2236 = vpop.f32.mrf.mxu0
      %2237 = vmatprep.mubr.f32.mxu0 0.0
      %2238 = vmatmul.mubr.f32.gmra.mxu0 %v2166
      %v2239 = vpop.f32.mrf.mxu0
      %v2240 = vadd.f32 0.0, %v2239
      %v2241 = vpop.f32.mrf.mxu0
      %2242 = vdwg.mxu0
      %v2243 = vadd.f32 %v1820, %v2235
      %v2244 = vadd.f32 %v1825, %v2240
      %2245 = vrot.lane.b32.xlu0 %v947, 104
      %v2246 = vpop.permute.xlu0 %2245
      %2247 = vrot.lane.b32.xlu0 %v947, 72
      %v2248 = vpop.permute.xlu0 %2247
      %v2249 = vsel %vm988, %v2246, 0
      %v2251 = vsel %vm988, %v2248, 0
      %2253 = vmatprep.subr.mxu0 0.0
      %2254 = vmatpush1.xpose.msra.mxu0 0.0
      %2255 = vmatprep.subr.mxu0 0.0
      %2256 = vmatpush1.xpose.msra.mxu0 0.0
      %2257 = vmatprep.subr.mxu0 0.0
      %2258 = vmatpush1.xpose.msra.mxu0 0.0
      %2259 = vmatprep.subr.mxu0 0.0
      %2260 = vmatpush1.xpose.msra.mxu0 0.0
      %2261 = vmatprep.subr.mxu0 0.0
      %2262 = vmatpush1.xpose.msra.mxu0 0.0
      %2263 = vmatprep.subr.mxu0 0.0
      %2264 = vmatpush1.xpose.msra.mxu0 0.0
      %2265 = vmatprep.subr.mxu0 0.0
      %2266 = vmatpush1.xpose.msra.mxu0 0.0
      %2267 = vmatprep.subr.mxu0 0.0
      %2268 = vmatpush1.xpose.msra.mxu0 0.0
      %2269 = vmatprep.subr.mxu0 0.0
      %2270 = vmatpush1.xpose.msra.mxu0 0.0
      %2271 = vmatprep.subr.mxu0 0.0
      %2272 = vmatpush1.xpose.msra.mxu0 0.0
      %2273 = vmatprep.subr.mxu0 0.0
      %2274 = vmatpush1.xpose.msra.mxu0 0.0
      %2275 = vmatprep.subr.mxu0 0.0
      %2276 = vmatpush1.xpose.msra.mxu0 0.0
      %2277 = vmatprep.subr.mxu0 0.0
      %2278 = vmatpush1.xpose.msra.mxu0 0.0
      %2279 = vmatprep.subr.mxu0 0.0
      %2280 = vmatpush1.xpose.msra.mxu0 0.0
      %2281 = vmatprep.subr.mxu0 0.0
      %2282 = vmatpush1.xpose.msra.mxu0 0.0
      %2283 = vmatprep.subr.mxu0 0.0
      %2284 = vmatpush1.xpose.msra.mxu0 %v2251
      %2285 = vmatprep.subr.mxu0 0.0
      %2286 = vmatpush2.xpose.msra.mxu0 0.0
      %2287 = vmatprep.subr.mxu0 0.0
      %2288 = vmatpush2.xpose.msra.mxu0 0.0
      %2289 = vmatprep.subr.mxu0 0.0
      %2290 = vmatpush2.xpose.msra.mxu0 0.0
      %2291 = vmatprep.subr.mxu0 0.0
      %2292 = vmatpush2.xpose.msra.mxu0 0.0
      %2293 = vmatprep.subr.mxu0 0.0
      %2294 = vmatpush2.xpose.msra.mxu0 0.0
      %2295 = vmatprep.subr.mxu0 0.0
      %2296 = vmatpush2.xpose.msra.mxu0 0.0
      %2297 = vmatprep.subr.mxu0 0.0
      %2298 = vmatpush2.xpose.msra.mxu0 0.0
      %2299 = vmatprep.subr.mxu0 0.0
      %2300 = vmatpush2.xpose.msra.mxu0 0.0
      %2301 = vmatprep.subr.mxu0 0.0
      %2302 = vmatpush2.xpose.msra.mxu0 0.0
      %2303 = vmatprep.subr.mxu0 0.0
      %2304 = vmatpush2.xpose.msra.mxu0 0.0
      %2305 = vmatprep.subr.mxu0 0.0
      %2306 = vmatpush2.xpose.msra.mxu0 0.0
      %2307 = vmatprep.subr.mxu0 0.0
      %2308 = vmatpush2.xpose.msra.mxu0 0.0
      %2309 = vmatprep.subr.mxu0 0.0
      %2310 = vmatpush2.xpose.msra.mxu0 0.0
      %2311 = vmatprep.subr.mxu0 0.0
      %2312 = vmatpush2.xpose.msra.mxu0 0.0
      %2313 = vmatprep.subr.mxu0 0.0
      %2314 = vmatpush2.xpose.msra.mxu0 0.0
      %2315 = vmatprep.subr.mxu0 0.0
      %2316 = vmatpush2.xpose.msra.mxu0 0.0
      %2317 = vmatprep.mubr.f32.mxu0 0.0
      %2318 = vmatmul.mubr.f32.gmra.mxu0 %v2249
      %v2319 = vpop.f32.mrf.mxu0
      %v2320 = vadd.f32 0.0, %v2319
      %v2321 = vpop.f32.mrf.mxu0
      %2322 = vdwg.mxu0
      %2323 = vrot.lane.b32.xlu0 %v952, 104
      %v2324 = vpop.permute.xlu0 %2323
      %2325 = vrot.lane.b32.xlu0 %v952, 72
      %v2326 = vpop.permute.xlu0 %2325
      %v2327 = vsel %vm988, %v2324, 0
      %v2329 = vsel %vm988, %v2326, 0
      %2331 = vmatprep.subr.mxu0 0.0
      %2332 = vmatpush1.xpose.msra.mxu0 0.0
      %2333 = vmatprep.subr.mxu0 0.0
      %2334 = vmatpush1.xpose.msra.mxu0 0.0
      %2335 = vmatprep.subr.mxu0 0.0
      %2336 = vmatpush1.xpose.msra.mxu0 0.0
      %2337 = vmatprep.subr.mxu0 0.0
      %2338 = vmatpush1.xpose.msra.mxu0 0.0
      %2339 = vmatprep.subr.mxu0 0.0
      %2340 = vmatpush1.xpose.msra.mxu0 0.0
      %2341 = vmatprep.subr.mxu0 0.0
      %2342 = vmatpush1.xpose.msra.mxu0 0.0
      %2343 = vmatprep.subr.mxu0 0.0
      %2344 = vmatpush1.xpose.msra.mxu0 0.0
      %2345 = vmatprep.subr.mxu0 0.0
      %2346 = vmatpush1.xpose.msra.mxu0 0.0
      %2347 = vmatprep.subr.mxu0 0.0
      %2348 = vmatpush1.xpose.msra.mxu0 0.0
      %2349 = vmatprep.subr.mxu0 0.0
      %2350 = vmatpush1.xpose.msra.mxu0 0.0
      %2351 = vmatprep.subr.mxu0 0.0
      %2352 = vmatpush1.xpose.msra.mxu0 0.0
      %2353 = vmatprep.subr.mxu0 0.0
      %2354 = vmatpush1.xpose.msra.mxu0 0.0
      %2355 = vmatprep.subr.mxu0 0.0
      %2356 = vmatpush1.xpose.msra.mxu0 0.0
      %2357 = vmatprep.subr.mxu0 0.0
      %2358 = vmatpush1.xpose.msra.mxu0 0.0
      %2359 = vmatprep.subr.mxu0 0.0
      %2360 = vmatpush1.xpose.msra.mxu0 0.0
      %2361 = vmatprep.subr.mxu0 0.0
      %2362 = vmatpush1.xpose.msra.mxu0 %v2329
      %2363 = vmatprep.subr.mxu0 0.0
      %2364 = vmatpush2.xpose.msra.mxu0 0.0
      %2365 = vmatprep.subr.mxu0 0.0
      %2366 = vmatpush2.xpose.msra.mxu0 0.0
      %2367 = vmatprep.subr.mxu0 0.0
      %2368 = vmatpush2.xpose.msra.mxu0 0.0
      %2369 = vmatprep.subr.mxu0 0.0
      %2370 = vmatpush2.xpose.msra.mxu0 0.0
      %2371 = vmatprep.subr.mxu0 0.0
      %2372 = vmatpush2.xpose.msra.mxu0 0.0
      %2373 = vmatprep.subr.mxu0 0.0
      %2374 = vmatpush2.xpose.msra.mxu0 0.0
      %2375 = vmatprep.subr.mxu0 0.0
      %2376 = vmatpush2.xpose.msra.mxu0 0.0
      %2377 = vmatprep.subr.mxu0 0.0
      %2378 = vmatpush2.xpose.msra.mxu0 0.0
      %2379 = vmatprep.subr.mxu0 0.0
      %2380 = vmatpush2.xpose.msra.mxu0 0.0
      %2381 = vmatprep.subr.mxu0 0.0
      %2382 = vmatpush2.xpose.msra.mxu0 0.0
      %2383 = vmatprep.subr.mxu0 0.0
      %2384 = vmatpush2.xpose.msra.mxu0 0.0
      %2385 = vmatprep.subr.mxu0 0.0
      %2386 = vmatpush2.xpose.msra.mxu0 0.0
      %2387 = vmatprep.subr.mxu0 0.0
      %2388 = vmatpush2.xpose.msra.mxu0 0.0
      %2389 = vmatprep.subr.mxu0 0.0
      %2390 = vmatpush2.xpose.msra.mxu0 0.0
      %2391 = vmatprep.subr.mxu0 0.0
      %2392 = vmatpush2.xpose.msra.mxu0 0.0
      %2393 = vmatprep.subr.mxu0 0.0
      %2394 = vmatpush2.xpose.msra.mxu0 0.0
      %2395 = vmatprep.mubr.f32.mxu0 0.0
      %2396 = vmatmul.mubr.f32.gmra.mxu0 %v2327
      %v2397 = vpop.f32.mrf.mxu0
      %v2398 = vadd.f32 0.0, %v2397
      %v2399 = vpop.f32.mrf.mxu0
      %2400 = vdwg.mxu0
      %v2401 = vmul.f32 %v2320, 0.35355338
      %v2402 = vmul.f32 %v2398, 0.35355338
      %v2403 = vsel %vm1154, -1e+09, %v2401
      %v2404 = vsel %vm1155, -1e+09, %v2402
      %v2405 = vsel %vm988, %v2403, -inf
      %2406 = vmax.xlane.f32.xlu0 %v2405
      %v2407 = vpop.xlane.xlu0 %2406
      %v2408 = vsel %vm988, %v2404, -inf
      %2409 = vmax.xlane.f32.xlu0 %v2408
      %v2410 = vpop.xlane.xlu0 %2409
      %v2411 = vsub.f32 %v2403, %v2407
      %v2412 = vsub.f32 %v2404, %v2410
      %v2413 = vmul.f32 %v2411, 1.442695
      %v2414 = vpow.pop %v2413
      %v2415 = vmul.f32 %v2412, 1.442695
      %v2416 = vpow.pop %v2415
      %v2417 = vsel %vm988, %v2414, 0.0
      %2418 = vadd.xlane.f32.xlu0 %v2417
      %v2419 = vpop.xlane.xlu0 %2418
      %v2420 = vsel %vm988, %v2416, 0.0
      %2421 = vadd.xlane.f32.xlu0 %v2420
      %v2422 = vpop.xlane.xlu0 %2421
      %v2423 = vrcp.pop %v2419
      %v2424 = vrcp.pop %v2422
      %v2425 = vmul.f32 %v2414, %v2423
      %v2426 = vmul.f32 %v2416, %v2424
      %2427 = vrot.lane.b32.xlu0 %v947, 40
      %v2428 = vpop.permute.xlu0 %2427
      %v2431 = vsel %vm988, %v2425, 0
      %2433 = vmatprep.subr.mxu0 0.0
      %2434 = vmatpush1.msra.mxu0 0.0
      %2435 = vmatprep.subr.mxu0 0.0
      %2436 = vmatpush1.msra.mxu0 0.0
      %2437 = vmatprep.subr.mxu0 0.0
      %2438 = vmatpush1.msra.mxu0 0.0
      %2439 = vmatprep.subr.mxu0 0.0
      %2440 = vmatpush1.msra.mxu0 0.0
      %2441 = vmatprep.subr.mxu0 0.0
      %2442 = vmatpush1.msra.mxu0 0.0
      %2443 = vmatprep.subr.mxu0 0.0
      %2444 = vmatpush1.msra.mxu0 0.0
      %2445 = vmatprep.subr.mxu0 0.0
      %2446 = vmatpush1.msra.mxu0 0.0
      %2447 = vmatprep.subr.mxu0 0.0
      %2448 = vmatpush1.msra.mxu0 0.0
      %2449 = vmatprep.subr.mxu0 0.0
      %2450 = vmatpush1.msra.mxu0 0.0
      %2451 = vmatprep.subr.mxu0 0.0
      %2452 = vmatpush1.msra.mxu0 0.0
      %2453 = vmatprep.subr.mxu0 0.0
      %2454 = vmatpush1.msra.mxu0 0.0
      %2455 = vmatprep.subr.mxu0 0.0
      %2456 = vmatpush1.msra.mxu0 0.0
      %2457 = vmatprep.subr.mxu0 0.0
      %2458 = vmatpush1.msra.mxu0 0.0
      %2459 = vmatprep.subr.mxu0 0.0
      %2460 = vmatpush1.msra.mxu0 0.0
      %2461 = vmatprep.subr.mxu0 0.0
      %2462 = vmatpush1.msra.mxu0 0.0
      %2463 = vmatprep.subr.mxu0 0.0
      %2464 = vmatpush1.msra.mxu0 %v2428
      %2465 = vmatprep.subr.mxu0 0.0
      %2466 = vmatpush2.msra.mxu0 0.0
      %2467 = vmatprep.subr.mxu0 0.0
      %2468 = vmatpush2.msra.mxu0 0.0
      %2469 = vmatprep.subr.mxu0 0.0
      %2470 = vmatpush2.msra.mxu0 0.0
      %2471 = vmatprep.subr.mxu0 0.0
      %2472 = vmatpush2.msra.mxu0 0.0
      %2473 = vmatprep.subr.mxu0 0.0
      %2474 = vmatpush2.msra.mxu0 0.0
      %2475 = vmatprep.subr.mxu0 0.0
      %2476 = vmatpush2.msra.mxu0 0.0
      %2477 = vmatprep.subr.mxu0 0.0
      %2478 = vmatpush2.msra.mxu0 0.0
      %2479 = vmatprep.subr.mxu0 0.0
      %2480 = vmatpush2.msra.mxu0 0.0
      %2481 = vmatprep.subr.mxu0 0.0
      %2482 = vmatpush2.msra.mxu0 0.0
      %2483 = vmatprep.subr.mxu0 0.0
      %2484 = vmatpush2.msra.mxu0 0.0
      %2485 = vmatprep.subr.mxu0 0.0
      %2486 = vmatpush2.msra.mxu0 0.0
      %2487 = vmatprep.subr.mxu0 0.0
      %2488 = vmatpush2.msra.mxu0 0.0
      %2489 = vmatprep.subr.mxu0 0.0
      %2490 = vmatpush2.msra.mxu0 0.0
      %2491 = vmatprep.subr.mxu0 0.0
      %2492 = vmatpush2.msra.mxu0 0.0
      %2493 = vmatprep.subr.mxu0 0.0
      %2494 = vmatpush2.msra.mxu0 0.0
      %2495 = vmatprep.subr.mxu0 0.0
      %2496 = vmatpush2.msra.mxu0 0.0
      %2497 = vmatprep.mubr.f32.mxu0 0.0
      %2498 = vmatmul.mubr.f32.gmra.mxu0 %v2431
      %v2499 = vpop.f32.mrf.mxu0
      %v2500 = vadd.f32 0.0, %v2499
      %v2501 = vpop.f32.mrf.mxu0
      %2502 = vdwg.mxu0
      %2503 = vrot.lane.b32.xlu0 %v952, 40
      %v2504 = vpop.permute.xlu0 %2503
      %v2507 = vsel %vm988, %v2426, 0
      %2509 = vmatprep.subr.mxu0 0.0
      %2510 = vmatpush1.msra.mxu0 0.0
      %2511 = vmatprep.subr.mxu0 0.0
      %2512 = vmatpush1.msra.mxu0 0.0
      %2513 = vmatprep.subr.mxu0 0.0
      %2514 = vmatpush1.msra.mxu0 0.0
      %2515 = vmatprep.subr.mxu0 0.0
      %2516 = vmatpush1.msra.mxu0 0.0
      %2517 = vmatprep.subr.mxu0 0.0
      %2518 = vmatpush1.msra.mxu0 0.0
      %2519 = vmatprep.subr.mxu0 0.0
      %2520 = vmatpush1.msra.mxu0 0.0
      %2521 = vmatprep.subr.mxu0 0.0
      %2522 = vmatpush1.msra.mxu0 0.0
      %2523 = vmatprep.subr.mxu0 0.0
      %2524 = vmatpush1.msra.mxu0 0.0
      %2525 = vmatprep.subr.mxu0 0.0
      %2526 = vmatpush1.msra.mxu0 0.0
      %2527 = vmatprep.subr.mxu0 0.0
      %2528 = vmatpush1.msra.mxu0 0.0
      %2529 = vmatprep.subr.mxu0 0.0
      %2530 = vmatpush1.msra.mxu0 0.0
      %2531 = vmatprep.subr.mxu0 0.0
      %2532 = vmatpush1.msra.mxu0 0.0
      %2533 = vmatprep.subr.mxu0 0.0
      %2534 = vmatpush1.msra.mxu0 0.0
      %2535 = vmatprep.subr.mxu0 0.0
      %2536 = vmatpush1.msra.mxu0 0.0
      %2537 = vmatprep.subr.mxu0 0.0
      %2538 = vmatpush1.msra.mxu0 0.0
      %2539 = vmatprep.subr.mxu0 0.0
      %2540 = vmatpush1.msra.mxu0 %v2504
      %2541 = vmatprep.subr.mxu0 0.0
      %2542 = vmatpush2.msra.mxu0 0.0
      %2543 = vmatprep.subr.mxu0 0.0
      %2544 = vmatpush2.msra.mxu0 0.0
      %2545 = vmatprep.subr.mxu0 0.0
      %2546 = vmatpush2.msra.mxu0 0.0
      %2547 = vmatprep.subr.mxu0 0.0
      %2548 = vmatpush2.msra.mxu0 0.0
      %2549 = vmatprep.subr.mxu0 0.0
      %2550 = vmatpush2.msra.mxu0 0.0
      %2551 = vmatprep.subr.mxu0 0.0
      %2552 = vmatpush2.msra.mxu0 0.0
      %2553 = vmatprep.subr.mxu0 0.0
      %2554 = vmatpush2.msra.mxu0 0.0
      %2555 = vmatprep.subr.mxu0 0.0
      %2556 = vmatpush2.msra.mxu0 0.0
      %2557 = vmatprep.subr.mxu0 0.0
      %2558 = vmatpush2.msra.mxu0 0.0
      %2559 = vmatprep.subr.mxu0 0.0
      %2560 = vmatpush2.msra.mxu0 0.0
      %2561 = vmatprep.subr.mxu0 0.0
      %2562 = vmatpush2.msra.mxu0 0.0
      %2563 = vmatprep.subr.mxu0 0.0
      %2564 = vmatpush2.msra.mxu0 0.0
      %2565 = vmatprep.subr.mxu0 0.0
      %2566 = vmatpush2.msra.mxu0 0.0
      %2567 = vmatprep.subr.mxu0 0.0
      %2568 = vmatpush2.msra.mxu0 0.0
      %2569 = vmatprep.subr.mxu0 0.0
      %2570 = vmatpush2.msra.mxu0 0.0
      %2571 = vmatprep.subr.mxu0 0.0
      %2572 = vmatpush2.msra.mxu0 0.0
      %2573 = vmatprep.mubr.f32.mxu0 0.0
      %2574 = vmatmul.mubr.f32.gmra.mxu0 %v2507
      %v2575 = vpop.f32.mrf.mxu0
      %v2576 = vadd.f32 0.0, %v2575
      %v2577 = vpop.f32.mrf.mxu0
      %2578 = vdwg.mxu0
      %v2580 = vsel %vm988, %v2500, 0
      %v2583 = vsel %vm988, %v2576, 0
      %2585 = vmatprep.subr.mxu0 0.0
      %2586 = vmatpush1.msra.mxu0 0.0
      %2587 = vmatprep.subr.mxu0 0.0
      %2588 = vmatpush1.msra.mxu0 0.0
      %2589 = vmatprep.subr.mxu0 0.0
      %2590 = vmatpush1.msra.mxu0 0.0
      %2591 = vmatprep.subr.mxu0 0.0
      %2592 = vmatpush1.msra.mxu0 0.0
      %2593 = vmatprep.subr.mxu0 0.0
      %2594 = vmatpush1.msra.mxu0 0.0
      %2595 = vmatprep.subr.mxu0 0.0
      %2596 = vmatpush1.msra.mxu0 0.0
      %2597 = vmatprep.subr.mxu0 0.0
      %2598 = vmatpush1.msra.mxu0 0.0
      %2599 = vmatprep.subr.mxu0 0.0
      %2600 = vmatpush1.msra.mxu0 0.0
      %2601 = vmatprep.subr.mxu0 0.0
      %2602 = vmatpush1.msra.mxu0 0.0
      %2603 = vmatprep.subr.mxu0 0.0
      %2604 = vmatpush1.msra.mxu0 0.0
      %2605 = vmatprep.subr.mxu0 0.0
      %2606 = vmatpush1.msra.mxu0 0.0
      %2607 = vmatprep.subr.mxu0 0.0
      %2608 = vmatpush1.msra.mxu0 0.0
      %2609 = vmatprep.subr.mxu0 0.0
      %2610 = vmatpush1.msra.mxu0 0.0
      %2611 = vmatprep.subr.mxu0 0.0
      %2612 = vmatpush1.msra.mxu0 0.0
      %2613 = vmatprep.subr.mxu0 0.0
      %2614 = vmatpush1.msra.mxu0 0.0
      %2615 = vmatprep.subr.mxu0 0.0
      %2616 = vmatpush1.msra.mxu0 %v984
      %2617 = vmatprep.subr.mxu0 0.0
      %2618 = vmatpush2.msra.mxu0 0.0
      %2619 = vmatprep.subr.mxu0 0.0
      %2620 = vmatpush2.msra.mxu0 0.0
      %2621 = vmatprep.subr.mxu0 0.0
      %2622 = vmatpush2.msra.mxu0 0.0
      %2623 = vmatprep.subr.mxu0 0.0
      %2624 = vmatpush2.msra.mxu0 0.0
      %2625 = vmatprep.subr.mxu0 0.0
      %2626 = vmatpush2.msra.mxu0 0.0
      %2627 = vmatprep.subr.mxu0 0.0
      %2628 = vmatpush2.msra.mxu0 0.0
      %2629 = vmatprep.subr.mxu0 0.0
      %2630 = vmatpush2.msra.mxu0 0.0
      %2631 = vmatprep.subr.mxu0 0.0
      %2632 = vmatpush2.msra.mxu0 0.0
      %2633 = vmatprep.subr.mxu0 0.0
      %2634 = vmatpush2.msra.mxu0 0.0
      %2635 = vmatprep.subr.mxu0 0.0
      %2636 = vmatpush2.msra.mxu0 0.0
      %2637 = vmatprep.subr.mxu0 0.0
      %2638 = vmatpush2.msra.mxu0 0.0
      %2639 = vmatprep.subr.mxu0 0.0
      %2640 = vmatpush2.msra.mxu0 0.0
      %2641 = vmatprep.subr.mxu0 0.0
      %2642 = vmatpush2.msra.mxu0 0.0
      %2643 = vmatprep.subr.mxu0 0.0
      %2644 = vmatpush2.msra.mxu0 0.0
      %2645 = vmatprep.subr.mxu0 0.0
      %2646 = vmatpush2.msra.mxu0 0.0
      %2647 = vmatprep.subr.mxu0 0.0
      %2648 = vmatpush2.msra.mxu0 0.0
      %2649 = vmatprep.mubr.f32.mxu0 0.0
      %2650 = vmatmul.mubr.f32.gmra.mxu0 %v2580
      %v2651 = vpop.f32.mrf.mxu0
      %v2652 = vadd.f32 0.0, %v2651
      %v2653 = vpop.f32.mrf.mxu0
      %2654 = vmatprep.mubr.f32.mxu0 0.0
      %2655 = vmatmul.mubr.f32.gmra.mxu0 %v2583
      %v2656 = vpop.f32.mrf.mxu0
      %v2657 = vadd.f32 0.0, %v2656
      %v2658 = vpop.f32.mrf.mxu0
      %2659 = vdwg.mxu0
      %v2660 = vadd.f32 %v2243, %v2652
      %v2661 = vadd.f32 %v2244, %v2657
      %v2662 = vadd.f32 %v806, %v2660
      %v2663 = vadd.f32 %v807, %v2661
      %v2664 = vld [vmem:[%s745] sm:$0x1]
      %v2666 = vlaneseq
      %v2667 = vshrl.u32 %v2666, 7
      %v2668 = vsub.s32 0, %v2667
      %v2669 = vrot.slane %v2664, %v2668
      %v2671 = vadd.f32 %v2662, %v2669
      %v2672 = vadd.f32 %v2663, %v2669
      %v2673 = vsel %vm809, %v2671, 0.0
      %2674 = vadd.xlane.f32.xlu0 %v2673
      %v2675 = vpop.xlane.xlu0 %2674
      %v2676 = vsel %vm809, %v2672, 0.0
      %2677 = vadd.xlane.f32.xlu0 %v2676
      %v2678 = vpop.xlane.xlu0 %2677
      %v2679 = vmul.f32 %v2675, %v816
      %v2680 = vmul.f32 %v2678, %v816
      %v2681 = vsub.f32 %v2671, %v2679
      %v2682 = vsub.f32 %v2672, %v2680
      %v2683 = vmul.f32 %v2681, %v2681
      %v2684 = vmul.f32 %v2682, %v2682
      %v2685 = vsel %vm809, %v2683, 0.0
      %2686 = vadd.xlane.f32.xlu0 %v2685
      %v2687 = vpop.xlane.xlu0 %2686
      %v2688 = vsel %vm809, %v2684, 0.0
      %2689 = vadd.xlane.f32.xlu0 %v2688
      %v2690 = vpop.xlane.xlu0 %2689
      %v2691 = vmul.f32 %v2687, 0.032258064
      %v2692 = vmul.f32 %v2690, 0.032258064
      %v2693 = vrsqrt.pop %v2691
      %v2694 = vmul.f32 %v2691, %v2693
      %vm2695 = vcmp.eq.f32.partialorder %v2691, inf
      %v2696 = vsel %vm2695, %v2691, %v2694
      %vm2697 = vcmp.eq.f32.partialorder %v2691, 0.0
      %v2698 = vand.u32 %v2691, 2147483648
      %v2699 = vsel %vm2697, %v2698, %v2696
      %v2700 = vrsqrt.pop %v2692
      %v2701 = vmul.f32 %v2692, %v2700
      %vm2702 = vcmp.eq.f32.partialorder %v2692, inf
      %v2703 = vsel %vm2702, %v2692, %v2701
      %vm2704 = vcmp.eq.f32.partialorder %v2692, 0.0
      %v2705 = vand.u32 %v2692, 2147483648
      %v2706 = vsel %vm2704, %v2705, %v2703
      %v2707 = vadd.f32 %v2699, 1e-06
      %v2708 = vadd.f32 %v2706, 1e-06
      %v2709 = vrcp.pop %v2707
      %v2710 = vrcp.pop %v2708
      %v2711 = vlaneseq
      %v2712 = vshrl.u32 %v2711, 7
      %v2713 = vsub.s32 2, %v2712
      %v2714 = vrot.slane %v808, %v2713
      %v2715 = vmul.f32 %v2714, %v2681
      %v2716 = vmul.f32 %v2714, %v2682
      %v2717 = vmul.f32 %v2715, %v2709
      %v2718 = vmul.f32 %v2716, %v2710
      %v2719 = vlaneseq
      %v2720 = vshrl.u32 %v2719, 7
      %v2721 = vsub.s32 3, %v2720
      %v2722 = vrot.slane %v808, %v2721
      %v2723 = vadd.f32 %v2717, %v2722
      %v2724 = vadd.f32 %v2718, %v2722
      %v2725 = vpack.c.bf16 %v2724, %v2723
      %v2726 = vld [vmem:[%s754] sm:$0xff]
      %v2727 = vld [vmem:[%s754 + $0x8] sm:$0xff]
      %v2728 = vld [vmem:[%s754 + $0x10] sm:$0xff]
      %v2729 = vld [vmem:[%s754 + $0x18] sm:$0xff]
      %v2730 = vld [vmem:[%s754 + $0x20] sm:$0xff]
      %v2731 = vld [vmem:[%s754 + $0x28] sm:$0xff]
      %v2732 = vld [vmem:[%s754 + $0x30] sm:$0xff]
      %v2733 = vld [vmem:[%s754 + $0x38] sm:$0xff]
      %v2734 = vld [vmem:[%s754 + $0x40] sm:$0xff]
      %v2735 = vld [vmem:[%s754 + $0x48] sm:$0xff]
      %v2736 = vld [vmem:[%s754 + $0x50] sm:$0xff]
      %v2737 = vld [vmem:[%s754 + $0x58] sm:$0xff]
      %v2738 = vld [vmem:[%s754 + $0x60] sm:$0xff]
      %v2739 = vld [vmem:[%s754 + $0x68] sm:$0xff]
      %v2740 = vld [vmem:[%s754 + $0x70] sm:$0xff]
      %v2741 = vld [vmem:[%s754 + $0x78] sm:$0xff]
      %v2742 = vld [vmem:[%s754 + $0x80] sm:$0xff]
      %v2743 = vld [vmem:[%s754 + $0x88] sm:$0xff]
      %v2744 = vld [vmem:[%s754 + $0x90] sm:$0xff]
      %v2745 = vld [vmem:[%s754 + $0x98] sm:$0xff]
      %v2746 = vld [vmem:[%s754 + $0xa0] sm:$0xff]
      %v2747 = vld [vmem:[%s754 + $0xa8] sm:$0xff]
      %v2748 = vld [vmem:[%s754 + $0xb0] sm:$0xff]
      %v2749 = vld [vmem:[%s754 + $0xb8] sm:$0xff]
      %v2750 = vld [vmem:[%s754 + $0xc0] sm:$0xff]
      %v2751 = vld [vmem:[%s754 + $0xc8] sm:$0xff]
      %v2752 = vld [vmem:[%s754 + $0xd0] sm:$0xff]
      %v2753 = vld [vmem:[%s754 + $0xd8] sm:$0xff]
      %v2754 = vld [vmem:[%s754 + $0xe0] sm:$0xff]
      %v2755 = vld [vmem:[%s754 + $0xe8] sm:$0xff]
      %v2756 = vld [vmem:[%s754 + $0xf0] sm:$0xff]
      %v2757 = vld [vmem:[%s754 + $0xf8] sm:$0xff]
      %v2758 = vld [vmem:[%s762] sm:$0xff]
      %v2759 = vld [vmem:[%s762 + $0x8] sm:$0xff]
      %v2762 = vlaneseq
      %v2763 = vshrl.u32 %v2762, 7
      %v2764 = vsub.s32 0, %v2763
      %v2765 = vrot.slane %v2758, %v2764
      %v2766 = vlaneseq
      %v2767 = vshrl.u32 %v2766, 7
      %v2768 = vsub.s32 1, %v2767
      %v2769 = vrot.slane %v2758, %v2768
      %v2770 = vlaneseq
      %v2771 = vshrl.u32 %v2770, 7
      %v2772 = vsub.s32 2, %v2771
      %v2773 = vrot.slane %v2758, %v2772
      %v2774 = vlaneseq
      %v2775 = vshrl.u32 %v2774, 7
      %v2776 = vsub.s32 3, %v2775
      %v2777 = vrot.slane %v2758, %v2776
      %v2778 = vlaneseq
      %v2779 = vshrl.u32 %v2778, 7
      %v2780 = vsub.s32 4, %v2779
      %v2781 = vrot.slane %v2758, %v2780
      %v2782 = vlaneseq
      %v2783 = vshrl.u32 %v2782, 7
      %v2784 = vsub.s32 5, %v2783
      %v2785 = vrot.slane %v2758, %v2784
      %v2786 = vlaneseq
      %v2787 = vshrl.u32 %v2786, 7
      %v2788 = vsub.s32 6, %v2787
      %v2789 = vrot.slane %v2758, %v2788
      %v2790 = vlaneseq
      %v2791 = vshrl.u32 %v2790, 7
      %v2792 = vsub.s32 7, %v2791
      %v2793 = vrot.slane %v2758, %v2792
      %v2794 = vlaneseq
      %v2795 = vshrl.u32 %v2794, 7
      %v2796 = vsub.s32 0, %v2795
      %v2797 = vrot.slane %v2759, %v2796
      %v2798 = vlaneseq
      %v2799 = vshrl.u32 %v2798, 7
      %v2800 = vsub.s32 1, %v2799
      %v2801 = vrot.slane %v2759, %v2800
      %v2802 = vlaneseq
      %v2803 = vshrl.u32 %v2802, 7
      %v2804 = vsub.s32 2, %v2803
      %v2805 = vrot.slane %v2759, %v2804
      %v2806 = vlaneseq
      %v2807 = vshrl.u32 %v2806, 7
      %v2808 = vsub.s32 3, %v2807
      %v2809 = vrot.slane %v2759, %v2808
      %v2810 = vlaneseq
      %v2811 = vshrl.u32 %v2810, 7
      %v2812 = vsub.s32 4, %v2811
      %v2813 = vrot.slane %v2759, %v2812
      %v2814 = vlaneseq
      %v2815 = vshrl.u32 %v2814, 7
      %v2816 = vsub.s32 5, %v2815
      %v2817 = vrot.slane %v2759, %v2816
      %v2818 = vlaneseq
      %v2819 = vshrl.u32 %v2818, 7
      %v2820 = vsub.s32 6, %v2819
      %v2821 = vrot.slane %v2759, %v2820
      %v2822 = vlaneseq
      %v2823 = vshrl.u32 %v2822, 7
      %v2824 = vsub.s32 7, %v2823
      %v2825 = vrot.slane %v2759, %v2824
      %v2874 = vunpack.c.l.b16 %v2726
      %v2875 = vunpack.c.h.b16 %v2726
      %v2876 = vunpack.c.l.b16 %v2727
      %v2877 = vunpack.c.h.b16 %v2727
      %v2878 = vunpack.c.l.b16 %v2728
      %v2879 = vunpack.c.h.b16 %v2728
      %v2880 = vunpack.c.l.b16 %v2729
      %v2881 = vunpack.c.h.b16 %v2729
      %v2882 = vunpack.c.l.b16 %v2730
      %v2883 = vunpack.c.h.b16 %v2730
      %v2884 = vunpack.c.l.b16 %v2731
      %v2885 = vunpack.c.h.b16 %v2731
      %v2886 = vunpack.c.l.b16 %v2732
      %v2887 = vunpack.c.h.b16 %v2732
      %v2888 = vunpack.c.l.b16 %v2733
      %v2889 = vunpack.c.h.b16 %v2733
      %v2890 = vunpack.c.l.b16 %v2734
      %v2891 = vunpack.c.h.b16 %v2734
      %v2892 = vunpack.c.l.b16 %v2735
      %v2893 = vunpack.c.h.b16 %v2735
      %v2894 = vunpack.c.l.b16 %v2736
      %v2895 = vunpack.c.h.b16 %v2736
      %v2896 = vunpack.c.l.b16 %v2737
      %v2897 = vunpack.c.h.b16 %v2737
      %v2898 = vunpack.c.l.b16 %v2738
      %v2899 = vunpack.c.h.b16 %v2738
      %v2900 = vunpack.c.l.b16 %v2739
      %v2901 = vunpack.c.h.b16 %v2739
      %v2902 = vunpack.c.l.b16 %v2740
      %v2903 = vunpack.c.h.b16 %v2740
      %v2904 = vunpack.c.l.b16 %v2741
      %v2905 = vunpack.c.h.b16 %v2741
      %v2906 = vunpack.c.l.b16 %v2742
      %v2907 = vunpack.c.h.b16 %v2742
      %v2908 = vunpack.c.l.b16 %v2743
      %v2909 = vunpack.c.h.b16 %v2743
      %v2910 = vunpack.c.l.b16 %v2744
      %v2911 = vunpack.c.h.b16 %v2744
      %v2912 = vunpack.c.l.b16 %v2745
      %v2913 = vunpack.c.h.b16 %v2745
      %v2914 = vunpack.c.l.b16 %v2746
      %v2915 = vunpack.c.h.b16 %v2746
      %v2916 = vunpack.c.l.b16 %v2747
      %v2917 = vunpack.c.h.b16 %v2747
      %v2918 = vunpack.c.l.b16 %v2748
      %v2919 = vunpack.c.h.b16 %v2748
      %v2920 = vunpack.c.l.b16 %v2749
      %v2921 = vunpack.c.h.b16 %v2749
      %v2922 = vunpack.c.l.b16 %v2750
      %v2923 = vunpack.c.h.b16 %v2750
      %v2924 = vunpack.c.l.b16 %v2751
      %v2925 = vunpack.c.h.b16 %v2751
      %v2926 = vunpack.c.l.b16 %v2752
      %v2927 = vunpack.c.h.b16 %v2752
      %v2928 = vunpack.c.l.b16 %v2753
      %v2929 = vunpack.c.h.b16 %v2753
      %v2930 = vunpack.c.l.b16 %v2754
      %v2931 = vunpack.c.h.b16 %v2754
      %v2932 = vunpack.c.l.b16 %v2755
      %v2933 = vunpack.c.h.b16 %v2755
      %v2934 = vunpack.c.l.b16 %v2756
      %v2935 = vunpack.c.h.b16 %v2756
      %v2936 = vunpack.c.l.b16 %v2757
      %v2937 = vunpack.c.h.b16 %v2757
      %v2938 = vpack.c.b16 %v2890, %v2874
      %v2939 = vpack.c.b16 %v2891, %v2875
      %v2940 = vpack.c.b16 %v2892, %v2876
      %v2941 = vpack.c.b16 %v2893, %v2877
      %v2942 = vpack.c.b16 %v2894, %v2878
      %v2943 = vpack.c.b16 %v2895, %v2879
      %v2944 = vpack.c.b16 %v2896, %v2880
      %v2945 = vpack.c.b16 %v2897, %v2881
      %v2946 = vpack.c.b16 %v2898, %v2882
      %v2947 = vpack.c.b16 %v2899, %v2883
      %v2948 = vpack.c.b16 %v2900, %v2884
      %v2949 = vpack.c.b16 %v2901, %v2885
      %v2950 = vpack.c.b16 %v2902, %v2886
      %v2951 = vpack.c.b16 %v2903, %v2887
      %v2952 = vpack.c.b16 %v2904, %v2888
      %v2953 = vpack.c.b16 %v2905, %v2889
      %v2954 = vpack.c.b16 %v2922, %v2906
      %v2955 = vpack.c.b16 %v2923, %v2907
      %v2956 = vpack.c.b16 %v2924, %v2908
      %v2957 = vpack.c.b16 %v2925, %v2909
      %v2958 = vpack.c.b16 %v2926, %v2910
      %v2959 = vpack.c.b16 %v2927, %v2911
      %v2960 = vpack.c.b16 %v2928, %v2912
      %v2961 = vpack.c.b16 %v2929, %v2913
      %v2962 = vpack.c.b16 %v2930, %v2914
      %v2963 = vpack.c.b16 %v2931, %v2915
      %v2964 = vpack.c.b16 %v2932, %v2916
      %v2965 = vpack.c.b16 %v2933, %v2917
      %v2966 = vpack.c.b16 %v2934, %v2918
      %v2967 = vpack.c.b16 %v2935, %v2919
      %v2968 = vpack.c.b16 %v2936, %v2920
      %v2969 = vpack.c.b16 %v2937, %v2921
      %v3003 = vsel %vm809, %v2725, 0
      %3005 = vmatprep.subr.bf16.mxu0 0
      %3006 = vmatpush1.bf16.msra.mxu0 0
      %3007 = vmatprep.subr.bf16.mxu0 0
      %3008 = vmatpush1.bf16.msra.mxu0 0
      %3009 = vmatprep.subr.bf16.mxu0 0
      %3010 = vmatpush1.bf16.msra.mxu0 0
      %3011 = vmatprep.subr.bf16.mxu0 0
      %3012 = vmatpush1.bf16.msra.mxu0 0
      %3013 = vmatprep.subr.bf16.mxu0 0
      %3014 = vmatpush1.bf16.msra.mxu0 0
      %3015 = vmatprep.subr.bf16.mxu0 0
      %3016 = vmatpush1.bf16.msra.mxu0 0
      %3017 = vmatprep.subr.bf16.mxu0 %v2955
      %3018 = vmatpush1.bf16.msra.mxu0 %v2954
      %3019 = vmatprep.subr.bf16.mxu0 %v2939
      %3020 = vmatpush1.bf16.msra.mxu0 %v2938
      %3021 = vmatprep.subr.bf16.mxu0 0
      %3022 = vmatpush2.bf16.msra.mxu0 0
      %3023 = vmatprep.subr.bf16.mxu0 0
      %3024 = vmatpush2.bf16.msra.mxu0 0
      %3025 = vmatprep.subr.bf16.mxu0 0
      %3026 = vmatpush2.bf16.msra.mxu0 0
      %3027 = vmatprep.subr.bf16.mxu0 0
      %3028 = vmatpush2.bf16.msra.mxu0 0
      %3029 = vmatprep.subr.bf16.mxu0 0
      %3030 = vmatpush2.bf16.msra.mxu0 0
      %3031 = vmatprep.subr.bf16.mxu0 0
      %3032 = vmatpush2.bf16.msra.mxu0 0
      %3033 = vmatprep.subr.bf16.mxu0 0
      %3034 = vmatpush2.bf16.msra.mxu0 0
      %3035 = vmatprep.subr.bf16.mxu0 0
      %3036 = vmatpush2.bf16.msra.mxu0 0
      %3037 = vmatprep.mubr.bf16.mxu0 0
      %3038 = vmatmul.mubr.bf16.gmra.mxu0 %v3003
      %v3039 = vpop.f32.mrf.mxu0
      %v3040 = vadd.f32 %v2765, %v3039
      %v3041 = vpop.f32.mrf.mxu0
      %v3042 = vadd.f32 %v2769, %v3041
      %v3043 = vpop.f32.mrf.mxu0
      %v3044 = vadd.f32 %v2765, %v3043
      %v3045 = vpop.f32.mrf.mxu0
      %v3046 = vadd.f32 %v2769, %v3045
      %3047 = vdwg.mxu0
      %3048 = vmatprep.subr.bf16.mxu0 0
      %3049 = vmatpush1.bf16.msra.mxu0 0
      %3050 = vmatprep.subr.bf16.mxu0 0
      %3051 = vmatpush1.bf16.msra.mxu0 0
      %3052 = vmatprep.subr.bf16.mxu0 0
      %3053 = vmatpush1.bf16.msra.mxu0 0
      %3054 = vmatprep.subr.bf16.mxu0 0
      %3055 = vmatpush1.bf16.msra.mxu0 0
      %3056 = vmatprep.subr.bf16.mxu0 0
      %3057 = vmatpush1.bf16.msra.mxu0 0
      %3058 = vmatprep.subr.bf16.mxu0 0
      %3059 = vmatpush1.bf16.msra.mxu0 0
      %3060 = vmatprep.subr.bf16.mxu0 %v2957
      %3061 = vmatpush1.bf16.msra.mxu0 %v2956
      %3062 = vmatprep.subr.bf16.mxu0 %v2941
      %3063 = vmatpush1.bf16.msra.mxu0 %v2940
      %3064 = vmatprep.subr.bf16.mxu0 0
      %3065 = vmatpush2.bf16.msra.mxu0 0
      %3066 = vmatprep.subr.bf16.mxu0 0
      %3067 = vmatpush2.bf16.msra.mxu0 0
      %3068 = vmatprep.subr.bf16.mxu0 0
      %3069 = vmatpush2.bf16.msra.mxu0 0
      %3070 = vmatprep.subr.bf16.mxu0 0
      %3071 = vmatpush2.bf16.msra.mxu0 0
      %3072 = vmatprep.subr.bf16.mxu0 0
      %3073 = vmatpush2.bf16.msra.mxu0 0
      %3074 = vmatprep.subr.bf16.mxu0 0
      %3075 = vmatpush2.bf16.msra.mxu0 0
      %3076 = vmatprep.subr.bf16.mxu0 0
      %3077 = vmatpush2.bf16.msra.mxu0 0
      %3078 = vmatprep.subr.bf16.mxu0 0
      %3079 = vmatpush2.bf16.msra.mxu0 0
      %3080 = vmatprep.mubr.bf16.mxu0 0
      %3081 = vmatmul.mubr.bf16.gmra.mxu0 %v3003
      %v3082 = vpop.f32.mrf.mxu0
      %v3083 = vadd.f32 %v2773, %v3082
      %v3084 = vpop.f32.mrf.mxu0
      %v3085 = vadd.f32 %v2777, %v3084
      %v3086 = vpop.f32.mrf.mxu0
      %v3087 = vadd.f32 %v2773, %v3086
      %v3088 = vpop.f32.mrf.mxu0
      %v3089 = vadd.f32 %v2777, %v3088
      %3090 = vdwg.mxu0
      %3091 = vmatprep.subr.bf16.mxu0 0
      %3092 = vmatpush1.bf16.msra.mxu0 0
      %3093 = vmatprep.subr.bf16.mxu0 0
      %3094 = vmatpush1.bf16.msra.mxu0 0
      %3095 = vmatprep.subr.bf16.mxu0 0
      %3096 = vmatpush1.bf16.msra.mxu0 0
      %3097 = vmatprep.subr.bf16.mxu0 0
      %3098 = vmatpush1.bf16.msra.mxu0 0
      %3099 = vmatprep.subr.bf16.mxu0 0
      %3100 = vmatpush1.bf16.msra.mxu0 0
      %3101 = vmatprep.subr.bf16.mxu0 0
      %3102 = vmatpush1.bf16.msra.mxu0 0
      %3103 = vmatprep.subr.bf16.mxu0 %v2959
      %3104 = vmatpush1.bf16.msra.mxu0 %v2958
      %3105 = vmatprep.subr.bf16.mxu0 %v2943
      %3106 = vmatpush1.bf16.msra.mxu0 %v2942
      %3107 = vmatprep.subr.bf16.mxu0 0
      %3108 = vmatpush2.bf16.msra.mxu0 0
      %3109 = vmatprep.subr.bf16.mxu0 0
      %3110 = vmatpush2.bf16.msra.mxu0 0
      %3111 = vmatprep.subr.bf16.mxu0 0
      %3112 = vmatpush2.bf16.msra.mxu0 0
      %3113 = vmatprep.subr.bf16.mxu0 0
      %3114 = vmatpush2.bf16.msra.mxu0 0
      %3115 = vmatprep.subr.bf16.mxu0 0
      %3116 = vmatpush2.bf16.msra.mxu0 0
      %3117 = vmatprep.subr.bf16.mxu0 0
      %3118 = vmatpush2.bf16.msra.mxu0 0
      %3119 = vmatprep.subr.bf16.mxu0 0
      %3120 = vmatpush2.bf16.msra.mxu0 0
      %3121 = vmatprep.subr.bf16.mxu0 0
      %3122 = vmatpush2.bf16.msra.mxu0 0
      %3123 = vmatprep.mubr.bf16.mxu0 0
      %3124 = vmatmul.mubr.bf16.gmra.mxu0 %v3003
      %v3125 = vpop.f32.mrf.mxu0
      %v3126 = vadd.f32 %v2781, %v3125
      %v3127 = vpop.f32.mrf.mxu0
      %v3128 = vadd.f32 %v2785, %v3127
      %v3129 = vpop.f32.mrf.mxu0
      %v3130 = vadd.f32 %v2781, %v3129
      %v3131 = vpop.f32.mrf.mxu0
      %v3132 = vadd.f32 %v2785, %v3131
      %3133 = vdwg.mxu0
      %3134 = vmatprep.subr.bf16.mxu0 0
      %3135 = vmatpush1.bf16.msra.mxu0 0
      %3136 = vmatprep.subr.bf16.mxu0 0
      %3137 = vmatpush1.bf16.msra.mxu0 0
      %3138 = vmatprep.subr.bf16.mxu0 0
      %3139 = vmatpush1.bf16.msra.mxu0 0
      %3140 = vmatprep.subr.bf16.mxu0 0
      %3141 = vmatpush1.bf16.msra.mxu0 0
      %3142 = vmatprep.subr.bf16.mxu0 0
      %3143 = vmatpush1.bf16.msra.mxu0 0
      %3144 = vmatprep.subr.bf16.mxu0 0
      %3145 = vmatpush1.bf16.msra.mxu0 0
      %3146 = vmatprep.subr.bf16.mxu0 %v2961
      %3147 = vmatpush1.bf16.msra.mxu0 %v2960
      %3148 = vmatprep.subr.bf16.mxu0 %v2945
      %3149 = vmatpush1.bf16.msra.mxu0 %v2944
      %3150 = vmatprep.subr.bf16.mxu0 0
      %3151 = vmatpush2.bf16.msra.mxu0 0
      %3152 = vmatprep.subr.bf16.mxu0 0
      %3153 = vmatpush2.bf16.msra.mxu0 0
      %3154 = vmatprep.subr.bf16.mxu0 0
      %3155 = vmatpush2.bf16.msra.mxu0 0
      %3156 = vmatprep.subr.bf16.mxu0 0
      %3157 = vmatpush2.bf16.msra.mxu0 0
      %3158 = vmatprep.subr.bf16.mxu0 0
      %3159 = vmatpush2.bf16.msra.mxu0 0
      %3160 = vmatprep.subr.bf16.mxu0 0
      %3161 = vmatpush2.bf16.msra.mxu0 0
      %3162 = vmatprep.subr.bf16.mxu0 0
      %3163 = vmatpush2.bf16.msra.mxu0 0
      %3164 = vmatprep.subr.bf16.mxu0 0
      %3165 = vmatpush2.bf16.msra.mxu0 0
      %3166 = vmatprep.mubr.bf16.mxu0 0
      %3167 = vmatmul.mubr.bf16.gmra.mxu0 %v3003
      %v3168 = vpop.f32.mrf.mxu0
      %v3169 = vadd.f32 %v2789, %v3168
      %v3170 = vpop.f32.mrf.mxu0
      %v3171 = vadd.f32 %v2793, %v3170
      %v3172 = vpop.f32.mrf.mxu0
      %v3173 = vadd.f32 %v2789, %v3172
      %v3174 = vpop.f32.mrf.mxu0
      %v3175 = vadd.f32 %v2793, %v3174
      %3176 = vdwg.mxu0
      %3177 = vmatprep.subr.bf16.mxu0 0
      %3178 = vmatpush1.bf16.msra.mxu0 0
      %3179 = vmatprep.subr.bf16.mxu0 0
      %3180 = vmatpush1.bf16.msra.mxu0 0
      %3181 = vmatprep.subr.bf16.mxu0 0
      %3182 = vmatpush1.bf16.msra.mxu0 0
      %3183 = vmatprep.subr.bf16.mxu0 0
      %3184 = vmatpush1.bf16.msra.mxu0 0
      %3185 = vmatprep.subr.bf16.mxu0 0
      %3186 = vmatpush1.bf16.msra.mxu0 0
      %3187 = vmatprep.subr.bf16.mxu0 0
      %3188 = vmatpush1.bf16.msra.mxu0 0
      %3189 = vmatprep.subr.bf16.mxu0 %v2963
      %3190 = vmatpush1.bf16.msra.mxu0 %v2962
      %3191 = vmatprep.subr.bf16.mxu0 %v2947
      %3192 = vmatpush1.bf16.msra.mxu0 %v2946
      %3193 = vmatprep.subr.bf16.mxu0 0
      %3194 = vmatpush2.bf16.msra.mxu0 0
      %3195 = vmatprep.subr.bf16.mxu0 0
      %3196 = vmatpush2.bf16.msra.mxu0 0
      %3197 = vmatprep.subr.bf16.mxu0 0
      %3198 = vmatpush2.bf16.msra.mxu0 0
      %3199 = vmatprep.subr.bf16.mxu0 0
      %3200 = vmatpush2.bf16.msra.mxu0 0
      %3201 = vmatprep.subr.bf16.mxu0 0
      %3202 = vmatpush2.bf16.msra.mxu0 0
      %3203 = vmatprep.subr.bf16.mxu0 0
      %3204 = vmatpush2.bf16.msra.mxu0 0
      %3205 = vmatprep.subr.bf16.mxu0 0
      %3206 = vmatpush2.bf16.msra.mxu0 0
      %3207 = vmatprep.subr.bf16.mxu0 0
      %3208 = vmatpush2.bf16.msra.mxu0 0
      %3209 = vmatprep.mubr.bf16.mxu0 0
      %3210 = vmatmul.mubr.bf16.gmra.mxu0 %v3003
      %v3211 = vpop.f32.mrf.mxu0
      %v3212 = vadd.f32 %v2797, %v3211
      %v3213 = vpop.f32.mrf.mxu0
      %v3214 = vadd.f32 %v2801, %v3213
      %v3215 = vpop.f32.mrf.mxu0
      %v3216 = vadd.f32 %v2797, %v3215
      %v3217 = vpop.f32.mrf.mxu0
      %v3218 = vadd.f32 %v2801, %v3217
      %3219 = vdwg.mxu0
      %3220 = vmatprep.subr.bf16.mxu0 0
      %3221 = vmatpush1.bf16.msra.mxu0 0
      %3222 = vmatprep.subr.bf16.mxu0 0
      %3223 = vmatpush1.bf16.msra.mxu0 0
      %3224 = vmatprep.subr.bf16.mxu0 0
      %3225 = vmatpush1.bf16.msra.mxu0 0
      %3226 = vmatprep.subr.bf16.mxu0 0
      %3227 = vmatpush1.bf16.msra.mxu0 0
      %3228 = vmatprep.subr.bf16.mxu0 0
      %3229 = vmatpush1.bf16.msra.mxu0 0
      %3230 = vmatprep.subr.bf16.mxu0 0
      %3231 = vmatpush1.bf16.msra.mxu0 0
      %3232 = vmatprep.subr.bf16.mxu0 %v2965
      %3233 = vmatpush1.bf16.msra.mxu0 %v2964
      %3234 = vmatprep.subr.bf16.mxu0 %v2949
      %3235 = vmatpush1.bf16.msra.mxu0 %v2948
      %3236 = vmatprep.subr.bf16.mxu0 0
      %3237 = vmatpush2.bf16.msra.mxu0 0
      %3238 = vmatprep.subr.bf16.mxu0 0
      %3239 = vmatpush2.bf16.msra.mxu0 0
      %3240 = vmatprep.subr.bf16.mxu0 0
      %3241 = vmatpush2.bf16.msra.mxu0 0
      %3242 = vmatprep.subr.bf16.mxu0 0
      %3243 = vmatpush2.bf16.msra.mxu0 0
      %3244 = vmatprep.subr.bf16.mxu0 0
      %3245 = vmatpush2.bf16.msra.mxu0 0
      %3246 = vmatprep.subr.bf16.mxu0 0
      %3247 = vmatpush2.bf16.msra.mxu0 0
      %3248 = vmatprep.subr.bf16.mxu0 0
      %3249 = vmatpush2.bf16.msra.mxu0 0
      %3250 = vmatprep.subr.bf16.mxu0 0
      %3251 = vmatpush2.bf16.msra.mxu0 0
      %3252 = vmatprep.mubr.bf16.mxu0 0
      %3253 = vmatmul.mubr.bf16.gmra.mxu0 %v3003
      %v3254 = vpop.f32.mrf.mxu0
      %v3255 = vadd.f32 %v2805, %v3254
      %v3256 = vpop.f32.mrf.mxu0
      %v3257 = vadd.f32 %v2809, %v3256
      %v3258 = vpop.f32.mrf.mxu0
      %v3259 = vadd.f32 %v2805, %v3258
      %v3260 = vpop.f32.mrf.mxu0
      %v3261 = vadd.f32 %v2809, %v3260
      %3262 = vdwg.mxu0
      %3263 = vmatprep.subr.bf16.mxu0 0
      %3264 = vmatpush1.bf16.msra.mxu0 0
      %3265 = vmatprep.subr.bf16.mxu0 0
      %3266 = vmatpush1.bf16.msra.mxu0 0
      %3267 = vmatprep.subr.bf16.mxu0 0
      %3268 = vmatpush1.bf16.msra.mxu0 0
      %3269 = vmatprep.subr.bf16.mxu0 0
      %3270 = vmatpush1.bf16.msra.mxu0 0
      %3271 = vmatprep.subr.bf16.mxu0 0
      %3272 = vmatpush1.bf16.msra.mxu0 0
      %3273 = vmatprep.subr.bf16.mxu0 0
      %3274 = vmatpush1.bf16.msra.mxu0 0
      %3275 = vmatprep.subr.bf16.mxu0 %v2967
      %3276 = vmatpush1.bf16.msra.mxu0 %v2966
      %3277 = vmatprep.subr.bf16.mxu0 %v2951
      %3278 = vmatpush1.bf16.msra.mxu0 %v2950
      %3279 = vmatprep.subr.bf16.mxu0 0
      %3280 = vmatpush2.bf16.msra.mxu0 0
      %3281 = vmatprep.subr.bf16.mxu0 0
      %3282 = vmatpush2.bf16.msra.mxu0 0
      %3283 = vmatprep.subr.bf16.mxu0 0
      %3284 = vmatpush2.bf16.msra.mxu0 0
      %3285 = vmatprep.subr.bf16.mxu0 0
      %3286 = vmatpush2.bf16.msra.mxu0 0
      %3287 = vmatprep.subr.bf16.mxu0 0
      %3288 = vmatpush2.bf16.msra.mxu0 0
      %3289 = vmatprep.subr.bf16.mxu0 0
      %3290 = vmatpush2.bf16.msra.mxu0 0
      %3291 = vmatprep.subr.bf16.mxu0 0
      %3292 = vmatpush2.bf16.msra.mxu0 0
      %3293 = vmatprep.subr.bf16.mxu0 0
      %3294 = vmatpush2.bf16.msra.mxu0 0
      %3295 = vmatprep.mubr.bf16.mxu0 0
      %3296 = vmatmul.mubr.bf16.gmra.mxu0 %v3003
      %v3297 = vpop.f32.mrf.mxu0
      %v3298 = vadd.f32 %v2813, %v3297
      %v3299 = vpop.f32.mrf.mxu0
      %v3300 = vadd.f32 %v2817, %v3299
      %v3301 = vpop.f32.mrf.mxu0
      %v3302 = vadd.f32 %v2813, %v3301
      %v3303 = vpop.f32.mrf.mxu0
      %v3304 = vadd.f32 %v2817, %v3303
      %3305 = vdwg.mxu0
      %3306 = vmatprep.subr.bf16.mxu0 0
      %3307 = vmatpush1.bf16.msra.mxu0 0
      %3308 = vmatprep.subr.bf16.mxu0 0
      %3309 = vmatpush1.bf16.msra.mxu0 0
      %3310 = vmatprep.subr.bf16.mxu0 0
      %3311 = vmatpush1.bf16.msra.mxu0 0
      %3312 = vmatprep.subr.bf16.mxu0 0
      %3313 = vmatpush1.bf16.msra.mxu0 0
      %3314 = vmatprep.subr.bf16.mxu0 0
      %3315 = vmatpush1.bf16.msra.mxu0 0
      %3316 = vmatprep.subr.bf16.mxu0 0
      %3317 = vmatpush1.bf16.msra.mxu0 0
      %3318 = vmatprep.subr.bf16.mxu0 %v2969
      %3319 = vmatpush1.bf16.msra.mxu0 %v2968
      %3320 = vmatprep.subr.bf16.mxu0 %v2953
      %3321 = vmatpush1.bf16.msra.mxu0 %v2952
      %3322 = vmatprep.subr.bf16.mxu0 0
      %3323 = vmatpush2.bf16.msra.mxu0 0
      %3324 = vmatprep.subr.bf16.mxu0 0
      %3325 = vmatpush2.bf16.msra.mxu0 0
      %3326 = vmatprep.subr.bf16.mxu0 0
      %3327 = vmatpush2.bf16.msra.mxu0 0
      %3328 = vmatprep.subr.bf16.mxu0 0
      %3329 = vmatpush2.bf16.msra.mxu0 0
      %3330 = vmatprep.subr.bf16.mxu0 0
      %3331 = vmatpush2.bf16.msra.mxu0 0
      %3332 = vmatprep.subr.bf16.mxu0 0
      %3333 = vmatpush2.bf16.msra.mxu0 0
      %3334 = vmatprep.subr.bf16.mxu0 0
      %3335 = vmatpush2.bf16.msra.mxu0 0
      %3336 = vmatprep.subr.bf16.mxu0 0
      %3337 = vmatpush2.bf16.msra.mxu0 0
      %3338 = vmatprep.mubr.bf16.mxu0 0
      %3339 = vmatmul.mubr.bf16.gmra.mxu0 %v3003
      %v3340 = vpop.f32.mrf.mxu0
      %v3341 = vadd.f32 %v2821, %v3340
      %v3342 = vpop.f32.mrf.mxu0
      %v3343 = vadd.f32 %v2825, %v3342
      %v3344 = vpop.f32.mrf.mxu0
      %v3345 = vadd.f32 %v2821, %v3344
      %v3346 = vpop.f32.mrf.mxu0
      %v3347 = vadd.f32 %v2825, %v3346
      %3348 = vdwg.mxu0
      %v3349 = vmax.f32 %v3040, 0.0
      %v3350 = vmax.f32 %v3042, 0.0
      %v3351 = vmax.f32 %v3083, 0.0
      %v3352 = vmax.f32 %v3085, 0.0
      %v3353 = vmax.f32 %v3126, 0.0
      %v3354 = vmax.f32 %v3128, 0.0
      %v3355 = vmax.f32 %v3169, 0.0
      %v3356 = vmax.f32 %v3171, 0.0
      %v3357 = vmax.f32 %v3212, 0.0
      %v3358 = vmax.f32 %v3214, 0.0
      %v3359 = vmax.f32 %v3255, 0.0
      %v3360 = vmax.f32 %v3257, 0.0
      %v3361 = vmax.f32 %v3298, 0.0
      %v3362 = vmax.f32 %v3300, 0.0
      %v3363 = vmax.f32 %v3341, 0.0
      %v3364 = vmax.f32 %v3343, 0.0
      %v3365 = vmax.f32 %v3044, 0.0
      %v3366 = vmax.f32 %v3046, 0.0
      %v3367 = vmax.f32 %v3087, 0.0
      %v3368 = vmax.f32 %v3089, 0.0
      %v3369 = vmax.f32 %v3130, 0.0
      %v3370 = vmax.f32 %v3132, 0.0
      %v3371 = vmax.f32 %v3173, 0.0
      %v3372 = vmax.f32 %v3175, 0.0
      %v3373 = vmax.f32 %v3216, 0.0
      %v3374 = vmax.f32 %v3218, 0.0
      %v3375 = vmax.f32 %v3259, 0.0
      %v3376 = vmax.f32 %v3261, 0.0
      %v3377 = vmax.f32 %v3302, 0.0
      %v3378 = vmax.f32 %v3304, 0.0
      %v3379 = vmax.f32 %v3345, 0.0
      %v3380 = vmax.f32 %v3347, 0.0
      %v3381 = vpack.c.bf16 %v3365, %v3349
      %v3382 = vpack.c.bf16 %v3366, %v3350
      %v3383 = vpack.c.bf16 %v3367, %v3351
      %v3384 = vpack.c.bf16 %v3368, %v3352
      %v3385 = vpack.c.bf16 %v3369, %v3353
      %v3386 = vpack.c.bf16 %v3370, %v3354
      %v3387 = vpack.c.bf16 %v3371, %v3355
      %v3388 = vpack.c.bf16 %v3372, %v3356
      %v3389 = vpack.c.bf16 %v3373, %v3357
      %v3390 = vpack.c.bf16 %v3374, %v3358
      %v3391 = vpack.c.bf16 %v3375, %v3359
      %v3392 = vpack.c.bf16 %v3376, %v3360
      %v3393 = vpack.c.bf16 %v3377, %v3361
      %v3394 = vpack.c.bf16 %v3378, %v3362
      %v3395 = vpack.c.bf16 %v3379, %v3363
      %v3396 = vpack.c.bf16 %v3380, %v3364
      %v3397 = vld [vmem:[%s771] sm:$0xf]
      %v3398 = vld [vmem:[%s771 + $0x4] sm:$0xf]
      %v3399 = vld [vmem:[%s771 + $0x8] sm:$0xf]
      %v3400 = vld [vmem:[%s771 + $0xc] sm:$0xf]
      %v3401 = vld [vmem:[%s771 + $0x10] sm:$0xf]
      %v3402 = vld [vmem:[%s771 + $0x14] sm:$0xf]
      %v3403 = vld [vmem:[%s771 + $0x18] sm:$0xf]
      %v3404 = vld [vmem:[%s771 + $0x1c] sm:$0xf]
      %v3405 = vld [vmem:[%s771 + $0x20] sm:$0xf]
      %v3406 = vld [vmem:[%s771 + $0x24] sm:$0xf]
      %v3407 = vld [vmem:[%s771 + $0x28] sm:$0xf]
      %v3408 = vld [vmem:[%s771 + $0x2c] sm:$0xf]
      %v3409 = vld [vmem:[%s771 + $0x30] sm:$0xf]
      %v3410 = vld [vmem:[%s771 + $0x34] sm:$0xf]
      %v3411 = vld [vmem:[%s771 + $0x38] sm:$0xf]
      %v3412 = vld [vmem:[%s771 + $0x3c] sm:$0xf]
      %v3413 = vld [vmem:[%s771 + $0x40] sm:$0xf]
      %v3414 = vld [vmem:[%s771 + $0x44] sm:$0xf]
      %v3415 = vld [vmem:[%s771 + $0x48] sm:$0xf]
      %v3416 = vld [vmem:[%s771 + $0x4c] sm:$0xf]
      %v3417 = vld [vmem:[%s771 + $0x50] sm:$0xf]
      %v3418 = vld [vmem:[%s771 + $0x54] sm:$0xf]
      %v3419 = vld [vmem:[%s771 + $0x58] sm:$0xf]
      %v3420 = vld [vmem:[%s771 + $0x5c] sm:$0xf]
      %v3421 = vld [vmem:[%s771 + $0x60] sm:$0xf]
      %v3422 = vld [vmem:[%s771 + $0x64] sm:$0xf]
      %v3423 = vld [vmem:[%s771 + $0x68] sm:$0xf]
      %v3424 = vld [vmem:[%s771 + $0x6c] sm:$0xf]
      %v3425 = vld [vmem:[%s771 + $0x70] sm:$0xf]
      %v3426 = vld [vmem:[%s771 + $0x74] sm:$0xf]
      %v3427 = vld [vmem:[%s771 + $0x78] sm:$0xf]
      %v3428 = vld [vmem:[%s771 + $0x7c] sm:$0xf]
      %v3429 = vld [vmem:[%s771 + $0x80] sm:$0xf]
      %v3430 = vld [vmem:[%s771 + $0x84] sm:$0xf]
      %v3431 = vld [vmem:[%s771 + $0x88] sm:$0xf]
      %v3432 = vld [vmem:[%s771 + $0x8c] sm:$0xf]
      %v3433 = vld [vmem:[%s771 + $0x90] sm:$0xf]
      %v3434 = vld [vmem:[%s771 + $0x94] sm:$0xf]
      %v3435 = vld [vmem:[%s771 + $0x98] sm:$0xf]
      %v3436 = vld [vmem:[%s771 + $0x9c] sm:$0xf]
      %v3437 = vld [vmem:[%s771 + $0xa0] sm:$0xf]
      %v3438 = vld [vmem:[%s771 + $0xa4] sm:$0xf]
      %v3439 = vld [vmem:[%s771 + $0xa8] sm:$0xf]
      %v3440 = vld [vmem:[%s771 + $0xac] sm:$0xf]
      %v3441 = vld [vmem:[%s771 + $0xb0] sm:$0xf]
      %v3442 = vld [vmem:[%s771 + $0xb4] sm:$0xf]
      %v3443 = vld [vmem:[%s771 + $0xb8] sm:$0xf]
      %v3444 = vld [vmem:[%s771 + $0xbc] sm:$0xf]
      %v3445 = vld [vmem:[%s771 + $0xc0] sm:$0xf]
      %v3446 = vld [vmem:[%s771 + $0xc4] sm:$0xf]
      %v3447 = vld [vmem:[%s771 + $0xc8] sm:$0xf]
      %v3448 = vld [vmem:[%s771 + $0xcc] sm:$0xf]
      %v3449 = vld [vmem:[%s771 + $0xd0] sm:$0xf]
      %v3450 = vld [vmem:[%s771 + $0xd4] sm:$0xf]
      %v3451 = vld [vmem:[%s771 + $0xd8] sm:$0xf]
      %v3452 = vld [vmem:[%s771 + $0xdc] sm:$0xf]
      %v3453 = vld [vmem:[%s771 + $0xe0] sm:$0xf]
      %v3454 = vld [vmem:[%s771 + $0xe4] sm:$0xf]
      %v3455 = vld [vmem:[%s771 + $0xe8] sm:$0xf]
      %v3456 = vld [vmem:[%s771 + $0xec] sm:$0xf]
      %v3457 = vld [vmem:[%s771 + $0xf0] sm:$0xf]
      %v3458 = vld [vmem:[%s771 + $0xf4] sm:$0xf]
      %v3459 = vld [vmem:[%s771 + $0xf8] sm:$0xf]
      %v3460 = vld [vmem:[%s771 + $0xfc] sm:$0xf]
      %v3461 = vld [vmem:[%s771 + $0x100] sm:$0xf]
      %v3462 = vld [vmem:[%s771 + $0x104] sm:$0xf]
      %v3463 = vld [vmem:[%s771 + $0x108] sm:$0xf]
      %v3464 = vld [vmem:[%s771 + $0x10c] sm:$0xf]
      %v3465 = vld [vmem:[%s771 + $0x110] sm:$0xf]
      %v3466 = vld [vmem:[%s771 + $0x114] sm:$0xf]
      %v3467 = vld [vmem:[%s771 + $0x118] sm:$0xf]
      %v3468 = vld [vmem:[%s771 + $0x11c] sm:$0xf]
      %v3469 = vld [vmem:[%s771 + $0x120] sm:$0xf]
      %v3470 = vld [vmem:[%s771 + $0x124] sm:$0xf]
      %v3471 = vld [vmem:[%s771 + $0x128] sm:$0xf]
      %v3472 = vld [vmem:[%s771 + $0x12c] sm:$0xf]
      %v3473 = vld [vmem:[%s771 + $0x130] sm:$0xf]
      %v3474 = vld [vmem:[%s771 + $0x134] sm:$0xf]
      %v3475 = vld [vmem:[%s771 + $0x138] sm:$0xf]
      %v3476 = vld [vmem:[%s771 + $0x13c] sm:$0xf]
      %v3477 = vld [vmem:[%s771 + $0x140] sm:$0xf]
      %v3478 = vld [vmem:[%s771 + $0x144] sm:$0xf]
      %v3479 = vld [vmem:[%s771 + $0x148] sm:$0xf]
      %v3480 = vld [vmem:[%s771 + $0x14c] sm:$0xf]
      %v3481 = vld [vmem:[%s771 + $0x150] sm:$0xf]
      %v3482 = vld [vmem:[%s771 + $0x154] sm:$0xf]
      %v3483 = vld [vmem:[%s771 + $0x158] sm:$0xf]
      %v3484 = vld [vmem:[%s771 + $0x15c] sm:$0xf]
      %v3485 = vld [vmem:[%s771 + $0x160] sm:$0xf]
      %v3486 = vld [vmem:[%s771 + $0x164] sm:$0xf]
      %v3487 = vld [vmem:[%s771 + $0x168] sm:$0xf]
      %v3488 = vld [vmem:[%s771 + $0x16c] sm:$0xf]
      %v3489 = vld [vmem:[%s771 + $0x170] sm:$0xf]
      %v3490 = vld [vmem:[%s771 + $0x174] sm:$0xf]
      %v3491 = vld [vmem:[%s771 + $0x178] sm:$0xf]
      %v3492 = vld [vmem:[%s771 + $0x17c] sm:$0xf]
      %v3493 = vld [vmem:[%s771 + $0x180] sm:$0xf]
      %v3494 = vld [vmem:[%s771 + $0x184] sm:$0xf]
      %v3495 = vld [vmem:[%s771 + $0x188] sm:$0xf]
      %v3496 = vld [vmem:[%s771 + $0x18c] sm:$0xf]
      %v3497 = vld [vmem:[%s771 + $0x190] sm:$0xf]
      %v3498 = vld [vmem:[%s771 + $0x194] sm:$0xf]
      %v3499 = vld [vmem:[%s771 + $0x198] sm:$0xf]
      %v3500 = vld [vmem:[%s771 + $0x19c] sm:$0xf]
      %v3501 = vld [vmem:[%s771 + $0x1a0] sm:$0xf]
      %v3502 = vld [vmem:[%s771 + $0x1a4] sm:$0xf]
      %v3503 = vld [vmem:[%s771 + $0x1a8] sm:$0xf]
      %v3504 = vld [vmem:[%s771 + $0x1ac] sm:$0xf]
      %v3505 = vld [vmem:[%s771 + $0x1b0] sm:$0xf]
      %v3506 = vld [vmem:[%s771 + $0x1b4] sm:$0xf]
      %v3507 = vld [vmem:[%s771 + $0x1b8] sm:$0xf]
      %v3508 = vld [vmem:[%s771 + $0x1bc] sm:$0xf]
      %v3509 = vld [vmem:[%s771 + $0x1c0] sm:$0xf]
      %v3510 = vld [vmem:[%s771 + $0x1c4] sm:$0xf]
      %v3511 = vld [vmem:[%s771 + $0x1c8] sm:$0xf]
      %v3512 = vld [vmem:[%s771 + $0x1cc] sm:$0xf]
      %v3513 = vld [vmem:[%s771 + $0x1d0] sm:$0xf]
      %v3514 = vld [vmem:[%s771 + $0x1d4] sm:$0xf]
      %v3515 = vld [vmem:[%s771 + $0x1d8] sm:$0xf]
      %v3516 = vld [vmem:[%s771 + $0x1dc] sm:$0xf]
      %v3517 = vld [vmem:[%s771 + $0x1e0] sm:$0xf]
      %v3518 = vld [vmem:[%s771 + $0x1e4] sm:$0xf]
      %v3519 = vld [vmem:[%s771 + $0x1e8] sm:$0xf]
      %v3520 = vld [vmem:[%s771 + $0x1ec] sm:$0xf]
      %v3521 = vld [vmem:[%s771 + $0x1f0] sm:$0xf]
      %v3522 = vld [vmem:[%s771 + $0x1f4] sm:$0xf]
      %v3523 = vld [vmem:[%s771 + $0x1f8] sm:$0xf]
      %v3524 = vld [vmem:[%s771 + $0x1fc] sm:$0xf]
      %v3525 = vld [vmem:[%s771 + $0x200] sm:$0xf]
      %v3526 = vld [vmem:[%s771 + $0x204] sm:$0xf]
      %v3527 = vld [vmem:[%s771 + $0x208] sm:$0xf]
      %v3528 = vld [vmem:[%s771 + $0x20c] sm:$0xf]
      %v3529 = vld [vmem:[%s771 + $0x210] sm:$0xf]
      %v3530 = vld [vmem:[%s771 + $0x214] sm:$0xf]
      %v3531 = vld [vmem:[%s771 + $0x218] sm:$0xf]
      %v3532 = vld [vmem:[%s771 + $0x21c] sm:$0xf]
      %v3533 = vld [vmem:[%s771 + $0x220] sm:$0xf]
      %v3534 = vld [vmem:[%s771 + $0x224] sm:$0xf]
      %v3535 = vld [vmem:[%s771 + $0x228] sm:$0xf]
      %v3536 = vld [vmem:[%s771 + $0x22c] sm:$0xf]
      %v3537 = vld [vmem:[%s771 + $0x230] sm:$0xf]
      %v3538 = vld [vmem:[%s771 + $0x234] sm:$0xf]
      %v3539 = vld [vmem:[%s771 + $0x238] sm:$0xf]
      %v3540 = vld [vmem:[%s771 + $0x23c] sm:$0xf]
      %v3541 = vld [vmem:[%s771 + $0x240] sm:$0xf]
      %v3542 = vld [vmem:[%s771 + $0x244] sm:$0xf]
      %v3543 = vld [vmem:[%s771 + $0x248] sm:$0xf]
      %v3544 = vld [vmem:[%s771 + $0x24c] sm:$0xf]
      %v3545 = vld [vmem:[%s771 + $0x250] sm:$0xf]
      %v3546 = vld [vmem:[%s771 + $0x254] sm:$0xf]
      %v3547 = vld [vmem:[%s771 + $0x258] sm:$0xf]
      %v3548 = vld [vmem:[%s771 + $0x25c] sm:$0xf]
      %v3549 = vld [vmem:[%s771 + $0x260] sm:$0xf]
      %v3550 = vld [vmem:[%s771 + $0x264] sm:$0xf]
      %v3551 = vld [vmem:[%s771 + $0x268] sm:$0xf]
      %v3552 = vld [vmem:[%s771 + $0x26c] sm:$0xf]
      %v3553 = vld [vmem:[%s771 + $0x270] sm:$0xf]
      %v3554 = vld [vmem:[%s771 + $0x274] sm:$0xf]
      %v3555 = vld [vmem:[%s771 + $0x278] sm:$0xf]
      %v3556 = vld [vmem:[%s771 + $0x27c] sm:$0xf]
      %v3557 = vld [vmem:[%s771 + $0x280] sm:$0xf]
      %v3558 = vld [vmem:[%s771 + $0x284] sm:$0xf]
      %v3559 = vld [vmem:[%s771 + $0x288] sm:$0xf]
      %v3560 = vld [vmem:[%s771 + $0x28c] sm:$0xf]
      %v3561 = vld [vmem:[%s771 + $0x290] sm:$0xf]
      %v3562 = vld [vmem:[%s771 + $0x294] sm:$0xf]
      %v3563 = vld [vmem:[%s771 + $0x298] sm:$0xf]
      %v3564 = vld [vmem:[%s771 + $0x29c] sm:$0xf]
      %v3565 = vld [vmem:[%s771 + $0x2a0] sm:$0xf]
      %v3566 = vld [vmem:[%s771 + $0x2a4] sm:$0xf]
      %v3567 = vld [vmem:[%s771 + $0x2a8] sm:$0xf]
      %v3568 = vld [vmem:[%s771 + $0x2ac] sm:$0xf]
      %v3569 = vld [vmem:[%s771 + $0x2b0] sm:$0xf]
      %v3570 = vld [vmem:[%s771 + $0x2b4] sm:$0xf]
      %v3571 = vld [vmem:[%s771 + $0x2b8] sm:$0xf]
      %v3572 = vld [vmem:[%s771 + $0x2bc] sm:$0xf]
      %v3573 = vld [vmem:[%s771 + $0x2c0] sm:$0xf]
      %v3574 = vld [vmem:[%s771 + $0x2c4] sm:$0xf]
      %v3575 = vld [vmem:[%s771 + $0x2c8] sm:$0xf]
      %v3576 = vld [vmem:[%s771 + $0x2cc] sm:$0xf]
      %v3577 = vld [vmem:[%s771 + $0x2d0] sm:$0xf]
      %v3578 = vld [vmem:[%s771 + $0x2d4] sm:$0xf]
      %v3579 = vld [vmem:[%s771 + $0x2d8] sm:$0xf]
      %v3580 = vld [vmem:[%s771 + $0x2dc] sm:$0xf]
      %v3581 = vld [vmem:[%s771 + $0x2e0] sm:$0xf]
      %v3582 = vld [vmem:[%s771 + $0x2e4] sm:$0xf]
      %v3583 = vld [vmem:[%s771 + $0x2e8] sm:$0xf]
      %v3584 = vld [vmem:[%s771 + $0x2ec] sm:$0xf]
      %v3585 = vld [vmem:[%s771 + $0x2f0] sm:$0xf]
      %v3586 = vld [vmem:[%s771 + $0x2f4] sm:$0xf]
      %v3587 = vld [vmem:[%s771 + $0x2f8] sm:$0xf]
      %v3588 = vld [vmem:[%s771 + $0x2fc] sm:$0xf]
      %v3589 = vld [vmem:[%s771 + $0x300] sm:$0xf]
      %v3590 = vld [vmem:[%s771 + $0x304] sm:$0xf]
      %v3591 = vld [vmem:[%s771 + $0x308] sm:$0xf]
      %v3592 = vld [vmem:[%s771 + $0x30c] sm:$0xf]
      %v3593 = vld [vmem:[%s771 + $0x310] sm:$0xf]
      %v3594 = vld [vmem:[%s771 + $0x314] sm:$0xf]
      %v3595 = vld [vmem:[%s771 + $0x318] sm:$0xf]
      %v3596 = vld [vmem:[%s771 + $0x31c] sm:$0xf]
      %v3597 = vld [vmem:[%s771 + $0x320] sm:$0xf]
      %v3598 = vld [vmem:[%s771 + $0x324] sm:$0xf]
      %v3599 = vld [vmem:[%s771 + $0x328] sm:$0xf]
      %v3600 = vld [vmem:[%s771 + $0x32c] sm:$0xf]
      %v3601 = vld [vmem:[%s771 + $0x330] sm:$0xf]
      %v3602 = vld [vmem:[%s771 + $0x334] sm:$0xf]
      %v3603 = vld [vmem:[%s771 + $0x338] sm:$0xf]
      %v3604 = vld [vmem:[%s771 + $0x33c] sm:$0xf]
      %v3605 = vld [vmem:[%s771 + $0x340] sm:$0xf]
      %v3606 = vld [vmem:[%s771 + $0x344] sm:$0xf]
      %v3607 = vld [vmem:[%s771 + $0x348] sm:$0xf]
      %v3608 = vld [vmem:[%s771 + $0x34c] sm:$0xf]
      %v3609 = vld [vmem:[%s771 + $0x350] sm:$0xf]
      %v3610 = vld [vmem:[%s771 + $0x354] sm:$0xf]
      %v3611 = vld [vmem:[%s771 + $0x358] sm:$0xf]
      %v3612 = vld [vmem:[%s771 + $0x35c] sm:$0xf]
      %v3613 = vld [vmem:[%s771 + $0x360] sm:$0xf]
      %v3614 = vld [vmem:[%s771 + $0x364] sm:$0xf]
      %v3615 = vld [vmem:[%s771 + $0x368] sm:$0xf]
      %v3616 = vld [vmem:[%s771 + $0x36c] sm:$0xf]
      %v3617 = vld [vmem:[%s771 + $0x370] sm:$0xf]
      %v3618 = vld [vmem:[%s771 + $0x374] sm:$0xf]
      %v3619 = vld [vmem:[%s771 + $0x378] sm:$0xf]
      %v3620 = vld [vmem:[%s771 + $0x37c] sm:$0xf]
      %v3621 = vld [vmem:[%s771 + $0x380] sm:$0xf]
      %v3622 = vld [vmem:[%s771 + $0x384] sm:$0xf]
      %v3623 = vld [vmem:[%s771 + $0x388] sm:$0xf]
      %v3624 = vld [vmem:[%s771 + $0x38c] sm:$0xf]
      %v3625 = vld [vmem:[%s771 + $0x390] sm:$0xf]
      %v3626 = vld [vmem:[%s771 + $0x394] sm:$0xf]
      %v3627 = vld [vmem:[%s771 + $0x398] sm:$0xf]
      %v3628 = vld [vmem:[%s771 + $0x39c] sm:$0xf]
      %v3629 = vld [vmem:[%s771 + $0x3a0] sm:$0xf]
      %v3630 = vld [vmem:[%s771 + $0x3a4] sm:$0xf]
      %v3631 = vld [vmem:[%s771 + $0x3a8] sm:$0xf]
      %v3632 = vld [vmem:[%s771 + $0x3ac] sm:$0xf]
      %v3633 = vld [vmem:[%s771 + $0x3b0] sm:$0xf]
      %v3634 = vld [vmem:[%s771 + $0x3b4] sm:$0xf]
      %v3635 = vld [vmem:[%s771 + $0x3b8] sm:$0xf]
      %v3636 = vld [vmem:[%s771 + $0x3bc] sm:$0xf]
      %v3637 = vld [vmem:[%s771 + $0x3c0] sm:$0xf]
      %v3638 = vld [vmem:[%s771 + $0x3c4] sm:$0xf]
      %v3639 = vld [vmem:[%s771 + $0x3c8] sm:$0xf]
      %v3640 = vld [vmem:[%s771 + $0x3cc] sm:$0xf]
      %v3641 = vld [vmem:[%s771 + $0x3d0] sm:$0xf]
      %v3642 = vld [vmem:[%s771 + $0x3d4] sm:$0xf]
      %v3643 = vld [vmem:[%s771 + $0x3d8] sm:$0xf]
      %v3644 = vld [vmem:[%s771 + $0x3dc] sm:$0xf]
      %v3645 = vld [vmem:[%s771 + $0x3e0] sm:$0xf]
      %v3646 = vld [vmem:[%s771 + $0x3e4] sm:$0xf]
      %v3647 = vld [vmem:[%s771 + $0x3e8] sm:$0xf]
      %v3648 = vld [vmem:[%s771 + $0x3ec] sm:$0xf]
      %v3649 = vld [vmem:[%s771 + $0x3f0] sm:$0xf]
      %v3650 = vld [vmem:[%s771 + $0x3f4] sm:$0xf]
      %v3651 = vld [vmem:[%s771 + $0x3f8] sm:$0xf]
      %v3652 = vld [vmem:[%s771 + $0x3fc] sm:$0xf]
      %v3653 = vld [vmem:[%s778] sm:$0x1]
      %v3655 = vlaneseq
      %v3656 = vshrl.u32 %v3655, 7
      %v3657 = vsub.s32 0, %v3656
      %v3658 = vrot.slane %v3653, %v3657
      %v3916 = vunpack.c.l.b16 %v3397
      %v3917 = vunpack.c.l.b16 %v3398
      %v3918 = vunpack.c.l.b16 %v3399
      %v3919 = vunpack.c.l.b16 %v3400
      %v3920 = vunpack.c.l.b16 %v3401
      %v3921 = vunpack.c.l.b16 %v3402
      %v3922 = vunpack.c.l.b16 %v3403
      %v3923 = vunpack.c.l.b16 %v3404
      %v3924 = vunpack.c.l.b16 %v3405
      %v3925 = vunpack.c.l.b16 %v3406
      %v3926 = vunpack.c.l.b16 %v3407
      %v3927 = vunpack.c.l.b16 %v3408
      %v3928 = vunpack.c.l.b16 %v3409
      %v3929 = vunpack.c.l.b16 %v3410
      %v3930 = vunpack.c.l.b16 %v3411
      %v3931 = vunpack.c.l.b16 %v3412
      %v3932 = vunpack.c.l.b16 %v3413
      %v3933 = vunpack.c.l.b16 %v3414
      %v3934 = vunpack.c.l.b16 %v3415
      %v3935 = vunpack.c.l.b16 %v3416
      %v3936 = vunpack.c.l.b16 %v3417
      %v3937 = vunpack.c.l.b16 %v3418
      %v3938 = vunpack.c.l.b16 %v3419
      %v3939 = vunpack.c.l.b16 %v3420
      %v3940 = vunpack.c.l.b16 %v3421
      %v3941 = vunpack.c.l.b16 %v3422
      %v3942 = vunpack.c.l.b16 %v3423
      %v3943 = vunpack.c.l.b16 %v3424
      %v3944 = vunpack.c.l.b16 %v3425
      %v3945 = vunpack.c.l.b16 %v3426
      %v3946 = vunpack.c.l.b16 %v3427
      %v3947 = vunpack.c.l.b16 %v3428
      %v3948 = vunpack.c.l.b16 %v3429
      %v3949 = vunpack.c.l.b16 %v3430
      %v3950 = vunpack.c.l.b16 %v3431
      %v3951 = vunpack.c.l.b16 %v3432
      %v3952 = vunpack.c.l.b16 %v3433
      %v3953 = vunpack.c.l.b16 %v3434
      %v3954 = vunpack.c.l.b16 %v3435
      %v3955 = vunpack.c.l.b16 %v3436
      %v3956 = vunpack.c.l.b16 %v3437
      %v3957 = vunpack.c.l.b16 %v3438
      %v3958 = vunpack.c.l.b16 %v3439
      %v3959 = vunpack.c.l.b16 %v3440
      %v3960 = vunpack.c.l.b16 %v3441
      %v3961 = vunpack.c.l.b16 %v3442
      %v3962 = vunpack.c.l.b16 %v3443
      %v3963 = vunpack.c.l.b16 %v3444
      %v3964 = vunpack.c.l.b16 %v3445
      %v3965 = vunpack.c.l.b16 %v3446
      %v3966 = vunpack.c.l.b16 %v3447
      %v3967 = vunpack.c.l.b16 %v3448
      %v3968 = vunpack.c.l.b16 %v3449
      %v3969 = vunpack.c.l.b16 %v3450
      %v3970 = vunpack.c.l.b16 %v3451
      %v3971 = vunpack.c.l.b16 %v3452
      %v3972 = vunpack.c.l.b16 %v3453
      %v3973 = vunpack.c.l.b16 %v3454
      %v3974 = vunpack.c.l.b16 %v3455
      %v3975 = vunpack.c.l.b16 %v3456
      %v3976 = vunpack.c.l.b16 %v3457
      %v3977 = vunpack.c.l.b16 %v3458
      %v3978 = vunpack.c.l.b16 %v3459
      %v3979 = vunpack.c.l.b16 %v3460
      %v3980 = vunpack.c.l.b16 %v3461
      %v3981 = vunpack.c.l.b16 %v3462
      %v3982 = vunpack.c.l.b16 %v3463
      %v3983 = vunpack.c.l.b16 %v3464
      %v3984 = vunpack.c.l.b16 %v3465
      %v3985 = vunpack.c.l.b16 %v3466
      %v3986 = vunpack.c.l.b16 %v3467
      %v3987 = vunpack.c.l.b16 %v3468
      %v3988 = vunpack.c.l.b16 %v3469
      %v3989 = vunpack.c.l.b16 %v3470
      %v3990 = vunpack.c.l.b16 %v3471
      %v3991 = vunpack.c.l.b16 %v3472
      %v3992 = vunpack.c.l.b16 %v3473
      %v3993 = vunpack.c.l.b16 %v3474
      %v3994 = vunpack.c.l.b16 %v3475
      %v3995 = vunpack.c.l.b16 %v3476
      %v3996 = vunpack.c.l.b16 %v3477
      %v3997 = vunpack.c.l.b16 %v3478
      %v3998 = vunpack.c.l.b16 %v3479
      %v3999 = vunpack.c.l.b16 %v3480
      %v4000 = vunpack.c.l.b16 %v3481
      %v4001 = vunpack.c.l.b16 %v3482
      %v4002 = vunpack.c.l.b16 %v3483
      %v4003 = vunpack.c.l.b16 %v3484
      %v4004 = vunpack.c.l.b16 %v3485
      %v4005 = vunpack.c.l.b16 %v3486
      %v4006 = vunpack.c.l.b16 %v3487
      %v4007 = vunpack.c.l.b16 %v3488
      %v4008 = vunpack.c.l.b16 %v3489
      %v4009 = vunpack.c.l.b16 %v3490
      %v4010 = vunpack.c.l.b16 %v3491
      %v4011 = vunpack.c.l.b16 %v3492
      %v4012 = vunpack.c.l.b16 %v3493
      %v4013 = vunpack.c.l.b16 %v3494
      %v4014 = vunpack.c.l.b16 %v3495
      %v4015 = vunpack.c.l.b16 %v3496
      %v4016 = vunpack.c.l.b16 %v3497
      %v4017 = vunpack.c.l.b16 %v3498
      %v4018 = vunpack.c.l.b16 %v3499
      %v4019 = vunpack.c.l.b16 %v3500
      %v4020 = vunpack.c.l.b16 %v3501
      %v4021 = vunpack.c.l.b16 %v3502
      %v4022 = vunpack.c.l.b16 %v3503
      %v4023 = vunpack.c.l.b16 %v3504
      %v4024 = vunpack.c.l.b16 %v3505
      %v4025 = vunpack.c.l.b16 %v3506
      %v4026 = vunpack.c.l.b16 %v3507
      %v4027 = vunpack.c.l.b16 %v3508
      %v4028 = vunpack.c.l.b16 %v3509
      %v4029 = vunpack.c.l.b16 %v3510
      %v4030 = vunpack.c.l.b16 %v3511
      %v4031 = vunpack.c.l.b16 %v3512
      %v4032 = vunpack.c.l.b16 %v3513
      %v4033 = vunpack.c.l.b16 %v3514
      %v4034 = vunpack.c.l.b16 %v3515
      %v4035 = vunpack.c.l.b16 %v3516
      %v4036 = vunpack.c.l.b16 %v3517
      %v4037 = vunpack.c.l.b16 %v3518
      %v4038 = vunpack.c.l.b16 %v3519
      %v4039 = vunpack.c.l.b16 %v3520
      %v4040 = vunpack.c.l.b16 %v3521
      %v4041 = vunpack.c.l.b16 %v3522
      %v4042 = vunpack.c.l.b16 %v3523
      %v4043 = vunpack.c.l.b16 %v3524
      %v4044 = vunpack.c.l.b16 %v3525
      %v4045 = vunpack.c.l.b16 %v3526
      %v4046 = vunpack.c.l.b16 %v3527
      %v4047 = vunpack.c.l.b16 %v3528
      %v4048 = vunpack.c.l.b16 %v3529
      %v4049 = vunpack.c.l.b16 %v3530
      %v4050 = vunpack.c.l.b16 %v3531
      %v4051 = vunpack.c.l.b16 %v3532
      %v4052 = vunpack.c.l.b16 %v3533
      %v4053 = vunpack.c.l.b16 %v3534
      %v4054 = vunpack.c.l.b16 %v3535
      %v4055 = vunpack.c.l.b16 %v3536
      %v4056 = vunpack.c.l.b16 %v3537
      %v4057 = vunpack.c.l.b16 %v3538
      %v4058 = vunpack.c.l.b16 %v3539
      %v4059 = vunpack.c.l.b16 %v3540
      %v4060 = vunpack.c.l.b16 %v3541
      %v4061 = vunpack.c.l.b16 %v3542
      %v4062 = vunpack.c.l.b16 %v3543
      %v4063 = vunpack.c.l.b16 %v3544
      %v4064 = vunpack.c.l.b16 %v3545
      %v4065 = vunpack.c.l.b16 %v3546
      %v4066 = vunpack.c.l.b16 %v3547
      %v4067 = vunpack.c.l.b16 %v3548
      %v4068 = vunpack.c.l.b16 %v3549
      %v4069 = vunpack.c.l.b16 %v3550
      %v4070 = vunpack.c.l.b16 %v3551
      %v4071 = vunpack.c.l.b16 %v3552
      %v4072 = vunpack.c.l.b16 %v3553
      %v4073 = vunpack.c.l.b16 %v3554
      %v4074 = vunpack.c.l.b16 %v3555
      %v4075 = vunpack.c.l.b16 %v3556
      %v4076 = vunpack.c.l.b16 %v3557
      %v4077 = vunpack.c.l.b16 %v3558
      %v4078 = vunpack.c.l.b16 %v3559
      %v4079 = vunpack.c.l.b16 %v3560
      %v4080 = vunpack.c.l.b16 %v3561
      %v4081 = vunpack.c.l.b16 %v3562
      %v4082 = vunpack.c.l.b16 %v3563
      %v4083 = vunpack.c.l.b16 %v3564
      %v4084 = vunpack.c.l.b16 %v3565
      %v4085 = vunpack.c.l.b16 %v3566
      %v4086 = vunpack.c.l.b16 %v3567
      %v4087 = vunpack.c.l.b16 %v3568
      %v4088 = vunpack.c.l.b16 %v3569
      %v4089 = vunpack.c.l.b16 %v3570
      %v4090 = vunpack.c.l.b16 %v3571
      %v4091 = vunpack.c.l.b16 %v3572
      %v4092 = vunpack.c.l.b16 %v3573
      %v4093 = vunpack.c.l.b16 %v3574
      %v4094 = vunpack.c.l.b16 %v3575
      %v4095 = vunpack.c.l.b16 %v3576
      %v4096 = vunpack.c.l.b16 %v3577
      %v4097 = vunpack.c.l.b16 %v3578
      %v4098 = vunpack.c.l.b16 %v3579
      %v4099 = vunpack.c.l.b16 %v3580
      %v4100 = vunpack.c.l.b16 %v3581
      %v4101 = vunpack.c.l.b16 %v3582
      %v4102 = vunpack.c.l.b16 %v3583
      %v4103 = vunpack.c.l.b16 %v3584
      %v4104 = vunpack.c.l.b16 %v3585
      %v4105 = vunpack.c.l.b16 %v3586
      %v4106 = vunpack.c.l.b16 %v3587
      %v4107 = vunpack.c.l.b16 %v3588
      %v4108 = vunpack.c.l.b16 %v3589
      %v4109 = vunpack.c.l.b16 %v3590
      %v4110 = vunpack.c.l.b16 %v3591
      %v4111 = vunpack.c.l.b16 %v3592
      %v4112 = vunpack.c.l.b16 %v3593
      %v4113 = vunpack.c.l.b16 %v3594
      %v4114 = vunpack.c.l.b16 %v3595
      %v4115 = vunpack.c.l.b16 %v3596
      %v4116 = vunpack.c.l.b16 %v3597
      %v4117 = vunpack.c.l.b16 %v3598
      %v4118 = vunpack.c.l.b16 %v3599
      %v4119 = vunpack.c.l.b16 %v3600
      %v4120 = vunpack.c.l.b16 %v3601
      %v4121 = vunpack.c.l.b16 %v3602
      %v4122 = vunpack.c.l.b16 %v3603
      %v4123 = vunpack.c.l.b16 %v3604
      %v4124 = vunpack.c.l.b16 %v3605
      %v4125 = vunpack.c.l.b16 %v3606
      %v4126 = vunpack.c.l.b16 %v3607
      %v4127 = vunpack.c.l.b16 %v3608
      %v4128 = vunpack.c.l.b16 %v3609
      %v4129 = vunpack.c.l.b16 %v3610
      %v4130 = vunpack.c.l.b16 %v3611
      %v4131 = vunpack.c.l.b16 %v3612
      %v4132 = vunpack.c.l.b16 %v3613
      %v4133 = vunpack.c.l.b16 %v3614
      %v4134 = vunpack.c.l.b16 %v3615
      %v4135 = vunpack.c.l.b16 %v3616
      %v4136 = vunpack.c.l.b16 %v3617
      %v4137 = vunpack.c.l.b16 %v3618
      %v4138 = vunpack.c.l.b16 %v3619
      %v4139 = vunpack.c.l.b16 %v3620
      %v4140 = vunpack.c.l.b16 %v3621
      %v4141 = vunpack.c.l.b16 %v3622
      %v4142 = vunpack.c.l.b16 %v3623
      %v4143 = vunpack.c.l.b16 %v3624
      %v4144 = vunpack.c.l.b16 %v3625
      %v4145 = vunpack.c.l.b16 %v3626
      %v4146 = vunpack.c.l.b16 %v3627
      %v4147 = vunpack.c.l.b16 %v3628
      %v4148 = vunpack.c.l.b16 %v3629
      %v4149 = vunpack.c.l.b16 %v3630
      %v4150 = vunpack.c.l.b16 %v3631
      %v4151 = vunpack.c.l.b16 %v3632
      %v4152 = vunpack.c.l.b16 %v3633
      %v4153 = vunpack.c.l.b16 %v3634
      %v4154 = vunpack.c.l.b16 %v3635
      %v4155 = vunpack.c.l.b16 %v3636
      %v4156 = vunpack.c.l.b16 %v3637
      %v4157 = vunpack.c.l.b16 %v3638
      %v4158 = vunpack.c.l.b16 %v3639
      %v4159 = vunpack.c.l.b16 %v3640
      %v4160 = vunpack.c.l.b16 %v3641
      %v4161 = vunpack.c.l.b16 %v3642
      %v4162 = vunpack.c.l.b16 %v3643
      %v4163 = vunpack.c.l.b16 %v3644
      %v4164 = vunpack.c.l.b16 %v3645
      %v4165 = vunpack.c.l.b16 %v3646
      %v4166 = vunpack.c.l.b16 %v3647
      %v4167 = vunpack.c.l.b16 %v3648
      %v4168 = vunpack.c.l.b16 %v3649
      %v4169 = vunpack.c.l.b16 %v3650
      %v4170 = vunpack.c.l.b16 %v3651
      %v4171 = vunpack.c.l.b16 %v3652
      %v4172 = vpack.c.b16 %v3917, %v3916
      %v4173 = vpack.c.b16 %v3919, %v3918
      %v4174 = vpack.c.b16 %v3921, %v3920
      %v4175 = vpack.c.b16 %v3923, %v3922
      %v4176 = vpack.c.b16 %v3925, %v3924
      %v4177 = vpack.c.b16 %v3927, %v3926
      %v4178 = vpack.c.b16 %v3929, %v3928
      %v4179 = vpack.c.b16 %v3931, %v3930
      %v4180 = vpack.c.b16 %v3933, %v3932
      %v4181 = vpack.c.b16 %v3935, %v3934
      %v4182 = vpack.c.b16 %v3937, %v3936
      %v4183 = vpack.c.b16 %v3939, %v3938
      %v4184 = vpack.c.b16 %v3941, %v3940
      %v4185 = vpack.c.b16 %v3943, %v3942
      %v4186 = vpack.c.b16 %v3945, %v3944
      %v4187 = vpack.c.b16 %v3947, %v3946
      %v4188 = vpack.c.b16 %v3949, %v3948
      %v4189 = vpack.c.b16 %v3951, %v3950
      %v4190 = vpack.c.b16 %v3953, %v3952
      %v4191 = vpack.c.b16 %v3955, %v3954
      %v4192 = vpack.c.b16 %v3957, %v3956
      %v4193 = vpack.c.b16 %v3959, %v3958
      %v4194 = vpack.c.b16 %v3961, %v3960
      %v4195 = vpack.c.b16 %v3963, %v3962
      %v4196 = vpack.c.b16 %v3965, %v3964
      %v4197 = vpack.c.b16 %v3967, %v3966
      %v4198 = vpack.c.b16 %v3969, %v3968
      %v4199 = vpack.c.b16 %v3971, %v3970
      %v4200 = vpack.c.b16 %v3973, %v3972
      %v4201 = vpack.c.b16 %v3975, %v3974
      %v4202 = vpack.c.b16 %v3977, %v3976
      %v4203 = vpack.c.b16 %v3979, %v3978
      %v4204 = vpack.c.b16 %v3981, %v3980
      %v4205 = vpack.c.b16 %v3983, %v3982
      %v4206 = vpack.c.b16 %v3985, %v3984
      %v4207 = vpack.c.b16 %v3987, %v3986
      %v4208 = vpack.c.b16 %v3989, %v3988
      %v4209 = vpack.c.b16 %v3991, %v3990
      %v4210 = vpack.c.b16 %v3993, %v3992
      %v4211 = vpack.c.b16 %v3995, %v3994
      %v4212 = vpack.c.b16 %v3997, %v3996
      %v4213 = vpack.c.b16 %v3999, %v3998
      %v4214 = vpack.c.b16 %v4001, %v4000
      %v4215 = vpack.c.b16 %v4003, %v4002
      %v4216 = vpack.c.b16 %v4005, %v4004
      %v4217 = vpack.c.b16 %v4007, %v4006
      %v4218 = vpack.c.b16 %v4009, %v4008
      %v4219 = vpack.c.b16 %v4011, %v4010
      %v4220 = vpack.c.b16 %v4013, %v4012
      %v4221 = vpack.c.b16 %v4015, %v4014
      %v4222 = vpack.c.b16 %v4017, %v4016
      %v4223 = vpack.c.b16 %v4019, %v4018
      %v4224 = vpack.c.b16 %v4021, %v4020
      %v4225 = vpack.c.b16 %v4023, %v4022
      %v4226 = vpack.c.b16 %v4025, %v4024
      %v4227 = vpack.c.b16 %v4027, %v4026
      %v4228 = vpack.c.b16 %v4029, %v4028
      %v4229 = vpack.c.b16 %v4031, %v4030
      %v4230 = vpack.c.b16 %v4033, %v4032
      %v4231 = vpack.c.b16 %v4035, %v4034
      %v4232 = vpack.c.b16 %v4037, %v4036
      %v4233 = vpack.c.b16 %v4039, %v4038
      %v4234 = vpack.c.b16 %v4041, %v4040
      %v4235 = vpack.c.b16 %v4043, %v4042
      %v4236 = vpack.c.b16 %v4045, %v4044
      %v4237 = vpack.c.b16 %v4047, %v4046
      %v4238 = vpack.c.b16 %v4049, %v4048
      %v4239 = vpack.c.b16 %v4051, %v4050
      %v4240 = vpack.c.b16 %v4053, %v4052
      %v4241 = vpack.c.b16 %v4055, %v4054
      %v4242 = vpack.c.b16 %v4057, %v4056
      %v4243 = vpack.c.b16 %v4059, %v4058
      %v4244 = vpack.c.b16 %v4061, %v4060
      %v4245 = vpack.c.b16 %v4063, %v4062
      %v4246 = vpack.c.b16 %v4065, %v4064
      %v4247 = vpack.c.b16 %v4067, %v4066
      %v4248 = vpack.c.b16 %v4069, %v4068
      %v4249 = vpack.c.b16 %v4071, %v4070
      %v4250 = vpack.c.b16 %v4073, %v4072
      %v4251 = vpack.c.b16 %v4075, %v4074
      %v4252 = vpack.c.b16 %v4077, %v4076
      %v4253 = vpack.c.b16 %v4079, %v4078
      %v4254 = vpack.c.b16 %v4081, %v4080
      %v4255 = vpack.c.b16 %v4083, %v4082
      %v4256 = vpack.c.b16 %v4085, %v4084
      %v4257 = vpack.c.b16 %v4087, %v4086
      %v4258 = vpack.c.b16 %v4089, %v4088
      %v4259 = vpack.c.b16 %v4091, %v4090
      %v4260 = vpack.c.b16 %v4093, %v4092
      %v4261 = vpack.c.b16 %v4095, %v4094
      %v4262 = vpack.c.b16 %v4097, %v4096
      %v4263 = vpack.c.b16 %v4099, %v4098
      %v4264 = vpack.c.b16 %v4101, %v4100
      %v4265 = vpack.c.b16 %v4103, %v4102
      %v4266 = vpack.c.b16 %v4105, %v4104
      %v4267 = vpack.c.b16 %v4107, %v4106
      %v4268 = vpack.c.b16 %v4109, %v4108
      %v4269 = vpack.c.b16 %v4111, %v4110
      %v4270 = vpack.c.b16 %v4113, %v4112
      %v4271 = vpack.c.b16 %v4115, %v4114
      %v4272 = vpack.c.b16 %v4117, %v4116
      %v4273 = vpack.c.b16 %v4119, %v4118
      %v4274 = vpack.c.b16 %v4121, %v4120
      %v4275 = vpack.c.b16 %v4123, %v4122
      %v4276 = vpack.c.b16 %v4125, %v4124
      %v4277 = vpack.c.b16 %v4127, %v4126
      %v4278 = vpack.c.b16 %v4129, %v4128
      %v4279 = vpack.c.b16 %v4131, %v4130
      %v4280 = vpack.c.b16 %v4133, %v4132
      %v4281 = vpack.c.b16 %v4135, %v4134
      %v4282 = vpack.c.b16 %v4137, %v4136
      %v4283 = vpack.c.b16 %v4139, %v4138
      %v4284 = vpack.c.b16 %v4141, %v4140
      %v4285 = vpack.c.b16 %v4143, %v4142
      %v4286 = vpack.c.b16 %v4145, %v4144
      %v4287 = vpack.c.b16 %v4147, %v4146
      %v4288 = vpack.c.b16 %v4149, %v4148
      %v4289 = vpack.c.b16 %v4151, %v4150
      %v4290 = vpack.c.b16 %v4153, %v4152
      %v4291 = vpack.c.b16 %v4155, %v4154
      %v4292 = vpack.c.b16 %v4157, %v4156
      %v4293 = vpack.c.b16 %v4159, %v4158
      %v4294 = vpack.c.b16 %v4161, %v4160
      %v4295 = vpack.c.b16 %v4163, %v4162
      %v4296 = vpack.c.b16 %v4165, %v4164
      %v4297 = vpack.c.b16 %v4167, %v4166
      %v4298 = vpack.c.b16 %v4169, %v4168
      %v4299 = vpack.c.b16 %v4171, %v4170
      %4428 = vmatprep.subr.bf16.mxu0 0
      %4429 = vmatpush1.bf16.msra.mxu0 %v4179
      %4430 = vmatprep.subr.bf16.mxu0 0
      %4431 = vmatpush1.bf16.msra.mxu0 %v4178
      %4432 = vmatprep.subr.bf16.mxu0 0
      %4433 = vmatpush1.bf16.msra.mxu0 %v4177
      %4434 = vmatprep.subr.bf16.mxu0 0
      %4435 = vmatpush1.bf16.msra.mxu0 %v4176
      %4436 = vmatprep.subr.bf16.mxu0 0
      %4437 = vmatpush1.bf16.msra.mxu0 %v4175
      %4438 = vmatprep.subr.bf16.mxu0 0
      %4439 = vmatpush1.bf16.msra.mxu0 %v4174
      %4440 = vmatprep.subr.bf16.mxu0 0
      %4441 = vmatpush1.bf16.msra.mxu0 %v4173
      %4442 = vmatprep.subr.bf16.mxu0 0
      %4443 = vmatpush1.bf16.msra.mxu0 %v4172
      %4444 = vmatprep.subr.bf16.mxu0 0
      %4445 = vmatpush2.bf16.msra.mxu0 %v4187
      %4446 = vmatprep.subr.bf16.mxu0 0
      %4447 = vmatpush2.bf16.msra.mxu0 %v4186
      %4448 = vmatprep.subr.bf16.mxu0 0
      %4449 = vmatpush2.bf16.msra.mxu0 %v4185
      %4450 = vmatprep.subr.bf16.mxu0 0
      %4451 = vmatpush2.bf16.msra.mxu0 %v4184
      %4452 = vmatprep.subr.bf16.mxu0 0
      %4453 = vmatpush2.bf16.msra.mxu0 %v4183
      %4454 = vmatprep.subr.bf16.mxu0 0
      %4455 = vmatpush2.bf16.msra.mxu0 %v4182
      %4456 = vmatprep.subr.bf16.mxu0 0
      %4457 = vmatpush2.bf16.msra.mxu0 %v4181
      %4458 = vmatprep.subr.bf16.mxu0 0
      %4459 = vmatpush2.bf16.msra.mxu0 %v4180
      %4460 = vmatprep.mubr.bf16.mxu0 %v3382
      %4461 = vmatmul.mubr.bf16.gmra.mxu0 %v3381
      %v4462 = vpop.f32.mrf.mxu0
      %v4463 = vadd.f32 %v3658, %v4462
      %v4464 = vpop.f32.mrf.mxu0
      %v4465 = vpop.f32.mrf.mxu0
      %v4466 = vadd.f32 %v3658, %v4465
      %v4467 = vpop.f32.mrf.mxu0
      %4468 = vdwg.mxu0
      %4469 = vmatprep.subr.bf16.mxu0 0
      %4470 = vmatpush1.bf16.msra.mxu0 %v4195
      %4471 = vmatprep.subr.bf16.mxu0 0
      %4472 = vmatpush1.bf16.msra.mxu0 %v4194
      %4473 = vmatprep.subr.bf16.mxu0 0
      %4474 = vmatpush1.bf16.msra.mxu0 %v4193
      %4475 = vmatprep.subr.bf16.mxu0 0
      %4476 = vmatpush1.bf16.msra.mxu0 %v4192
      %4477 = vmatprep.subr.bf16.mxu0 0
      %4478 = vmatpush1.bf16.msra.mxu0 %v4191
      %4479 = vmatprep.subr.bf16.mxu0 0
      %4480 = vmatpush1.bf16.msra.mxu0 %v4190
      %4481 = vmatprep.subr.bf16.mxu0 0
      %4482 = vmatpush1.bf16.msra.mxu0 %v4189
      %4483 = vmatprep.subr.bf16.mxu0 0
      %4484 = vmatpush1.bf16.msra.mxu0 %v4188
      %4485 = vmatprep.subr.bf16.mxu0 0
      %4486 = vmatpush2.bf16.msra.mxu0 %v4203
      %4487 = vmatprep.subr.bf16.mxu0 0
      %4488 = vmatpush2.bf16.msra.mxu0 %v4202
      %4489 = vmatprep.subr.bf16.mxu0 0
      %4490 = vmatpush2.bf16.msra.mxu0 %v4201
      %4491 = vmatprep.subr.bf16.mxu0 0
      %4492 = vmatpush2.bf16.msra.mxu0 %v4200
      %4493 = vmatprep.subr.bf16.mxu0 0
      %4494 = vmatpush2.bf16.msra.mxu0 %v4199
      %4495 = vmatprep.subr.bf16.mxu0 0
      %4496 = vmatpush2.bf16.msra.mxu0 %v4198
      %4497 = vmatprep.subr.bf16.mxu0 0
      %4498 = vmatpush2.bf16.msra.mxu0 %v4197
      %4499 = vmatprep.subr.bf16.mxu0 0
      %4500 = vmatpush2.bf16.msra.mxu0 %v4196
      %4501 = vmatprep.mubr.bf16.mxu0 %v3384
      %4502 = vmatmul.mubr.bf16.gmra.mxu0 %v3383
      %v4503 = vpop.f32.mrf.mxu0
      %v4504 = vadd.f32 %v4463, %v4503
      %v4505 = vpop.f32.mrf.mxu0
      %v4506 = vpop.f32.mrf.mxu0
      %v4507 = vadd.f32 %v4466, %v4506
      %v4508 = vpop.f32.mrf.mxu0
      %4509 = vdwg.mxu0
      %4510 = vmatprep.subr.bf16.mxu0 0
      %4511 = vmatpush1.bf16.msra.mxu0 %v4211
      %4512 = vmatprep.subr.bf16.mxu0 0
      %4513 = vmatpush1.bf16.msra.mxu0 %v4210
      %4514 = vmatprep.subr.bf16.mxu0 0
      %4515 = vmatpush1.bf16.msra.mxu0 %v4209
      %4516 = vmatprep.subr.bf16.mxu0 0
      %4517 = vmatpush1.bf16.msra.mxu0 %v4208
      %4518 = vmatprep.subr.bf16.mxu0 0
      %4519 = vmatpush1.bf16.msra.mxu0 %v4207
      %4520 = vmatprep.subr.bf16.mxu0 0
      %4521 = vmatpush1.bf16.msra.mxu0 %v4206
      %4522 = vmatprep.subr.bf16.mxu0 0
      %4523 = vmatpush1.bf16.msra.mxu0 %v4205
      %4524 = vmatprep.subr.bf16.mxu0 0
      %4525 = vmatpush1.bf16.msra.mxu0 %v4204
      %4526 = vmatprep.subr.bf16.mxu0 0
      %4527 = vmatpush2.bf16.msra.mxu0 %v4219
      %4528 = vmatprep.subr.bf16.mxu0 0
      %4529 = vmatpush2.bf16.msra.mxu0 %v4218
      %4530 = vmatprep.subr.bf16.mxu0 0
      %4531 = vmatpush2.bf16.msra.mxu0 %v4217
      %4532 = vmatprep.subr.bf16.mxu0 0
      %4533 = vmatpush2.bf16.msra.mxu0 %v4216
      %4534 = vmatprep.subr.bf16.mxu0 0
      %4535 = vmatpush2.bf16.msra.mxu0 %v4215
      %4536 = vmatprep.subr.bf16.mxu0 0
      %4537 = vmatpush2.bf16.msra.mxu0 %v4214
      %4538 = vmatprep.subr.bf16.mxu0 0
      %4539 = vmatpush2.bf16.msra.mxu0 %v4213
      %4540 = vmatprep.subr.bf16.mxu0 0
      %4541 = vmatpush2.bf16.msra.mxu0 %v4212
      %4542 = vmatprep.mubr.bf16.mxu0 %v3386
      %4543 = vmatmul.mubr.bf16.gmra.mxu0 %v3385
      %v4544 = vpop.f32.mrf.mxu0
      %v4545 = vadd.f32 %v4504, %v4544
      %v4546 = vpop.f32.mrf.mxu0
      %v4547 = vpop.f32.mrf.mxu0
      %v4548 = vadd.f32 %v4507, %v4547
      %v4549 = vpop.f32.mrf.mxu0
      %4550 = vdwg.mxu0
      %4551 = vmatprep.subr.bf16.mxu0 0
      %4552 = vmatpush1.bf16.msra.mxu0 %v4227
      %4553 = vmatprep.subr.bf16.mxu0 0
      %4554 = vmatpush1.bf16.msra.mxu0 %v4226
      %4555 = vmatprep.subr.bf16.mxu0 0
      %4556 = vmatpush1.bf16.msra.mxu0 %v4225
      %4557 = vmatprep.subr.bf16.mxu0 0
      %4558 = vmatpush1.bf16.msra.mxu0 %v4224
      %4559 = vmatprep.subr.bf16.mxu0 0
      %4560 = vmatpush1.bf16.msra.mxu0 %v4223
      %4561 = vmatprep.subr.bf16.mxu0 0
      %4562 = vmatpush1.bf16.msra.mxu0 %v4222
      %4563 = vmatprep.subr.bf16.mxu0 0
      %4564 = vmatpush1.bf16.msra.mxu0 %v4221
      %4565 = vmatprep.subr.bf16.mxu0 0
      %4566 = vmatpush1.bf16.msra.mxu0 %v4220
      %4567 = vmatprep.subr.bf16.mxu0 0
      %4568 = vmatpush2.bf16.msra.mxu0 %v4235
      %4569 = vmatprep.subr.bf16.mxu0 0
      %4570 = vmatpush2.bf16.msra.mxu0 %v4234
      %4571 = vmatprep.subr.bf16.mxu0 0
      %4572 = vmatpush2.bf16.msra.mxu0 %v4233
      %4573 = vmatprep.subr.bf16.mxu0 0
      %4574 = vmatpush2.bf16.msra.mxu0 %v4232
      %4575 = vmatprep.subr.bf16.mxu0 0
      %4576 = vmatpush2.bf16.msra.mxu0 %v4231
      %4577 = vmatprep.subr.bf16.mxu0 0
      %4578 = vmatpush2.bf16.msra.mxu0 %v4230
      %4579 = vmatprep.subr.bf16.mxu0 0
      %4580 = vmatpush2.bf16.msra.mxu0 %v4229
      %4581 = vmatprep.subr.bf16.mxu0 0
      %4582 = vmatpush2.bf16.msra.mxu0 %v4228
      %4583 = vmatprep.mubr.bf16.mxu0 %v3388
      %4584 = vmatmul.mubr.bf16.gmra.mxu0 %v3387
      %v4585 = vpop.f32.mrf.mxu0
      %v4586 = vadd.f32 %v4545, %v4585
      %v4587 = vpop.f32.mrf.mxu0
      %v4588 = vpop.f32.mrf.mxu0
      %v4589 = vadd.f32 %v4548, %v4588
      %v4590 = vpop.f32.mrf.mxu0
      %4591 = vdwg.mxu0
      %4592 = vmatprep.subr.bf16.mxu0 0
      %4593 = vmatpush1.bf16.msra.mxu0 %v4243
      %4594 = vmatprep.subr.bf16.mxu0 0
      %4595 = vmatpush1.bf16.msra.mxu0 %v4242
      %4596 = vmatprep.subr.bf16.mxu0 0
      %4597 = vmatpush1.bf16.msra.mxu0 %v4241
      %4598 = vmatprep.subr.bf16.mxu0 0
      %4599 = vmatpush1.bf16.msra.mxu0 %v4240
      %4600 = vmatprep.subr.bf16.mxu0 0
      %4601 = vmatpush1.bf16.msra.mxu0 %v4239
      %4602 = vmatprep.subr.bf16.mxu0 0
      %4603 = vmatpush1.bf16.msra.mxu0 %v4238
      %4604 = vmatprep.subr.bf16.mxu0 0
      %4605 = vmatpush1.bf16.msra.mxu0 %v4237
      %4606 = vmatprep.subr.bf16.mxu0 0
      %4607 = vmatpush1.bf16.msra.mxu0 %v4236
      %4608 = vmatprep.subr.bf16.mxu0 0
      %4609 = vmatpush2.bf16.msra.mxu0 %v4251
      %4610 = vmatprep.subr.bf16.mxu0 0
      %4611 = vmatpush2.bf16.msra.mxu0 %v4250
      %4612 = vmatprep.subr.bf16.mxu0 0
      %4613 = vmatpush2.bf16.msra.mxu0 %v4249
      %4614 = vmatprep.subr.bf16.mxu0 0
      %4615 = vmatpush2.bf16.msra.mxu0 %v4248
      %4616 = vmatprep.subr.bf16.mxu0 0
      %4617 = vmatpush2.bf16.msra.mxu0 %v4247
      %4618 = vmatprep.subr.bf16.mxu0 0
      %4619 = vmatpush2.bf16.msra.mxu0 %v4246
      %4620 = vmatprep.subr.bf16.mxu0 0
      %4621 = vmatpush2.bf16.msra.mxu0 %v4245
      %4622 = vmatprep.subr.bf16.mxu0 0
      %4623 = vmatpush2.bf16.msra.mxu0 %v4244
      %4624 = vmatprep.mubr.bf16.mxu0 %v3390
      %4625 = vmatmul.mubr.bf16.gmra.mxu0 %v3389
      %v4626 = vpop.f32.mrf.mxu0
      %v4627 = vadd.f32 %v4586, %v4626
      %v4628 = vpop.f32.mrf.mxu0
      %v4629 = vpop.f32.mrf.mxu0
      %v4630 = vadd.f32 %v4589, %v4629
      %v4631 = vpop.f32.mrf.mxu0
      %4632 = vdwg.mxu0
      %4633 = vmatprep.subr.bf16.mxu0 0
      %4634 = vmatpush1.bf16.msra.mxu0 %v4259
      %4635 = vmatprep.subr.bf16.mxu0 0
      %4636 = vmatpush1.bf16.msra.mxu0 %v4258
      %4637 = vmatprep.subr.bf16.mxu0 0
      %4638 = vmatpush1.bf16.msra.mxu0 %v4257
      %4639 = vmatprep.subr.bf16.mxu0 0
      %4640 = vmatpush1.bf16.msra.mxu0 %v4256
      %4641 = vmatprep.subr.bf16.mxu0 0
      %4642 = vmatpush1.bf16.msra.mxu0 %v4255
      %4643 = vmatprep.subr.bf16.mxu0 0
      %4644 = vmatpush1.bf16.msra.mxu0 %v4254
      %4645 = vmatprep.subr.bf16.mxu0 0
      %4646 = vmatpush1.bf16.msra.mxu0 %v4253
      %4647 = vmatprep.subr.bf16.mxu0 0
      %4648 = vmatpush1.bf16.msra.mxu0 %v4252
      %4649 = vmatprep.subr.bf16.mxu0 0
      %4650 = vmatpush2.bf16.msra.mxu0 %v4267
      %4651 = vmatprep.subr.bf16.mxu0 0
      %4652 = vmatpush2.bf16.msra.mxu0 %v4266
      %4653 = vmatprep.subr.bf16.mxu0 0
      %4654 = vmatpush2.bf16.msra.mxu0 %v4265
      %4655 = vmatprep.subr.bf16.mxu0 0
      %4656 = vmatpush2.bf16.msra.mxu0 %v4264
      %4657 = vmatprep.subr.bf16.mxu0 0
      %4658 = vmatpush2.bf16.msra.mxu0 %v4263
      %4659 = vmatprep.subr.bf16.mxu0 0
      %4660 = vmatpush2.bf16.msra.mxu0 %v4262
      %4661 = vmatprep.subr.bf16.mxu0 0
      %4662 = vmatpush2.bf16.msra.mxu0 %v4261
      %4663 = vmatprep.subr.bf16.mxu0 0
      %4664 = vmatpush2.bf16.msra.mxu0 %v4260
      %4665 = vmatprep.mubr.bf16.mxu0 %v3392
      %4666 = vmatmul.mubr.bf16.gmra.mxu0 %v3391
      %v4667 = vpop.f32.mrf.mxu0
      %v4668 = vadd.f32 %v4627, %v4667
      %v4669 = vpop.f32.mrf.mxu0
      %v4670 = vpop.f32.mrf.mxu0
      %v4671 = vadd.f32 %v4630, %v4670
      %v4672 = vpop.f32.mrf.mxu0
      %4673 = vdwg.mxu0
      %4674 = vmatprep.subr.bf16.mxu0 0
      %4675 = vmatpush1.bf16.msra.mxu0 %v4275
      %4676 = vmatprep.subr.bf16.mxu0 0
      %4677 = vmatpush1.bf16.msra.mxu0 %v4274
      %4678 = vmatprep.subr.bf16.mxu0 0
      %4679 = vmatpush1.bf16.msra.mxu0 %v4273
      %4680 = vmatprep.subr.bf16.mxu0 0
      %4681 = vmatpush1.bf16.msra.mxu0 %v4272
      %4682 = vmatprep.subr.bf16.mxu0 0
      %4683 = vmatpush1.bf16.msra.mxu0 %v4271
      %4684 = vmatprep.subr.bf16.mxu0 0
      %4685 = vmatpush1.bf16.msra.mxu0 %v4270
      %4686 = vmatprep.subr.bf16.mxu0 0
      %4687 = vmatpush1.bf16.msra.mxu0 %v4269
      %4688 = vmatprep.subr.bf16.mxu0 0
      %4689 = vmatpush1.bf16.msra.mxu0 %v4268
      %4690 = vmatprep.subr.bf16.mxu0 0
      %4691 = vmatpush2.bf16.msra.mxu0 %v4283
      %4692 = vmatprep.subr.bf16.mxu0 0
      %4693 = vmatpush2.bf16.msra.mxu0 %v4282
      %4694 = vmatprep.subr.bf16.mxu0 0
      %4695 = vmatpush2.bf16.msra.mxu0 %v4281
      %4696 = vmatprep.subr.bf16.mxu0 0
      %4697 = vmatpush2.bf16.msra.mxu0 %v4280
      %4698 = vmatprep.subr.bf16.mxu0 0
      %4699 = vmatpush2.bf16.msra.mxu0 %v4279
      %4700 = vmatprep.subr.bf16.mxu0 0
      %4701 = vmatpush2.bf16.msra.mxu0 %v4278
      %4702 = vmatprep.subr.bf16.mxu0 0
      %4703 = vmatpush2.bf16.msra.mxu0 %v4277
      %4704 = vmatprep.subr.bf16.mxu0 0
      %4705 = vmatpush2.bf16.msra.mxu0 %v4276
      %4706 = vmatprep.mubr.bf16.mxu0 %v3394
      %4707 = vmatmul.mubr.bf16.gmra.mxu0 %v3393
      %v4708 = vpop.f32.mrf.mxu0
      %v4709 = vadd.f32 %v4668, %v4708
      %v4710 = vpop.f32.mrf.mxu0
      %v4711 = vpop.f32.mrf.mxu0
      %v4712 = vadd.f32 %v4671, %v4711
      %v4713 = vpop.f32.mrf.mxu0
      %4714 = vdwg.mxu0
      %4715 = vmatprep.subr.bf16.mxu0 0
      %4716 = vmatpush1.bf16.msra.mxu0 %v4291
      %4717 = vmatprep.subr.bf16.mxu0 0
      %4718 = vmatpush1.bf16.msra.mxu0 %v4290
      %4719 = vmatprep.subr.bf16.mxu0 0
      %4720 = vmatpush1.bf16.msra.mxu0 %v4289
      %4721 = vmatprep.subr.bf16.mxu0 0
      %4722 = vmatpush1.bf16.msra.mxu0 %v4288
      %4723 = vmatprep.subr.bf16.mxu0 0
      %4724 = vmatpush1.bf16.msra.mxu0 %v4287
      %4725 = vmatprep.subr.bf16.mxu0 0
      %4726 = vmatpush1.bf16.msra.mxu0 %v4286
      %4727 = vmatprep.subr.bf16.mxu0 0
      %4728 = vmatpush1.bf16.msra.mxu0 %v4285
      %4729 = vmatprep.subr.bf16.mxu0 0
      %4730 = vmatpush1.bf16.msra.mxu0 %v4284
      %4731 = vmatprep.subr.bf16.mxu0 0
      %4732 = vmatpush2.bf16.msra.mxu0 %v4299
      %4733 = vmatprep.subr.bf16.mxu0 0
      %4734 = vmatpush2.bf16.msra.mxu0 %v4298
      %4735 = vmatprep.subr.bf16.mxu0 0
      %4736 = vmatpush2.bf16.msra.mxu0 %v4297
      %4737 = vmatprep.subr.bf16.mxu0 0
      %4738 = vmatpush2.bf16.msra.mxu0 %v4296
      %4739 = vmatprep.subr.bf16.mxu0 0
      %4740 = vmatpush2.bf16.msra.mxu0 %v4295
      %4741 = vmatprep.subr.bf16.mxu0 0
      %4742 = vmatpush2.bf16.msra.mxu0 %v4294
      %4743 = vmatprep.subr.bf16.mxu0 0
      %4744 = vmatpush2.bf16.msra.mxu0 %v4293
      %4745 = vmatprep.subr.bf16.mxu0 0
      %4746 = vmatpush2.bf16.msra.mxu0 %v4292
      %4747 = vmatprep.mubr.bf16.mxu0 %v3396
      %4748 = vmatmul.mubr.bf16.gmra.mxu0 %v3395
      %v4749 = vpop.f32.mrf.mxu0
      %v4750 = vadd.f32 %v4709, %v4749
      %v4751 = vpop.f32.mrf.mxu0
      %v4752 = vpop.f32.mrf.mxu0
      %v4753 = vadd.f32 %v4712, %v4752
      %v4754 = vpop.f32.mrf.mxu0
      %4755 = vdwg.mxu0
      %v4756 = vadd.f32 %v2671, %v4750
      %v4757 = vadd.f32 %v2672, %v4753
      %4758 = vst.msk [vmem:[#allocation2] sm:$0xff] %vm809, %v4756
      %4759 = vst.msk [vmem:[#allocation2 + $0x8] sm:$0xff] %vm809, %v4757
      %p4760 = scmp.eq.s32.totalorder %s30, 5
      // Predicated region
      $region81: #{transformer_forward.1} parent=75 // pred_check
        %p4761 = pneg %p4760
      $region82: #{transformer_forward.1} parent=75 // pred_check_branch
        %4763 = sbr.rel (%p4761) target = $region84
      $region83: #{transformer_forward.1} parent=75 // pred_region
        %v4764 = vld [vmem:[%s790] sm:$0x3]
        %v4765 = vsel %vm809, %v4756, 0.0
        %4766 = vadd.xlane.f32.xlu0 %v4765
        %v4767 = vpop.xlane.xlu0 %4766
        %v4768 = vsel %vm809, %v4757, 0.0
        %4769 = vadd.xlane.f32.xlu0 %v4768
        %v4770 = vpop.xlane.xlu0 %4769
        %v4771 = vmul.f32 %v4767, %v816
        %v4772 = vmul.f32 %v4770, %v816
        %v4773 = vsub.f32 %v4756, %v4771
        %v4774 = vsub.f32 %v4757, %v4772
        %v4775 = vmul.f32 %v4773, %v4773
        %v4776 = vmul.f32 %v4774, %v4774
        %v4777 = vsel %vm809, %v4775, 0.0
        %4778 = vadd.xlane.f32.xlu0 %v4777
        %v4779 = vpop.xlane.xlu0 %4778
        %v4780 = vsel %vm809, %v4776, 0.0
        %4781 = vadd.xlane.f32.xlu0 %v4780
        %v4782 = vpop.xlane.xlu0 %4781
        %v4783 = vmul.f32 %v4779, 0.032258064
        %v4784 = vmul.f32 %v4782, 0.032258064
        %v4785 = vrsqrt.pop %v4783
        %v4786 = vmul.f32 %v4783, %v4785
        %vm4787 = vcmp.eq.f32.partialorder %v4783, inf
        %v4788 = vsel %vm4787, %v4783, %v4786
        %vm4789 = vcmp.eq.f32.partialorder %v4783, 0.0
        %v4790 = vand.u32 %v4783, 2147483648
        %v4791 = vsel %vm4789, %v4790, %v4788
        %v4792 = vrsqrt.pop %v4784
        %v4793 = vmul.f32 %v4784, %v4792
        %vm4794 = vcmp.eq.f32.partialorder %v4784, inf
        %v4795 = vsel %vm4794, %v4784, %v4793
        %vm4796 = vcmp.eq.f32.partialorder %v4784, 0.0
        %v4797 = vand.u32 %v4784, 2147483648
        %v4798 = vsel %vm4796, %v4797, %v4795
        %v4799 = vadd.f32 %v4791, 1e-06
        %v4800 = vadd.f32 %v4798, 1e-06
        %v4801 = vrcp.pop %v4799
        %v4802 = vrcp.pop %v4800
        %v4803 = vlaneseq
        %v4804 = vshrl.u32 %v4803, 7
        %v4805 = vsub.s32 0, %v4804
        %v4806 = vrot.slane %v4764, %v4805
        %v4807 = vmul.f32 %v4806, %v4773
        %v4808 = vmul.f32 %v4806, %v4774
        %v4809 = vmul.f32 %v4807, %v4801
        %v4810 = vmul.f32 %v4808, %v4802
        %v4811 = vlaneseq
        %v4812 = vshrl.u32 %v4811, 7
        %v4813 = vsub.s32 1, %v4812
        %v4814 = vrot.slane %v4764, %v4813
        %v4815 = vadd.f32 %v4809, %v4814
        %v4816 = vadd.f32 %v4810, %v4814
        %v4817 = vld [vmem:[%s12] sm:$0xff]
        %v4818 = vld [vmem:[%s12 + $0x8] sm:$0xff]
        %v4819 = vld [vmem:[%s12 + $0x10] sm:$0xff]
        %v4820 = vld [vmem:[%s12 + $0x18] sm:$0xff]
        %v4821 = vld [vmem:[%s13] sm:$0x1]
        %v4823 = vlaneseq
        %v4824 = vshrl.u32 %v4823, 7
        %v4825 = vsub.s32 0, %v4824
        %v4826 = vrot.slane %v4821, %v4825
        %v4829 = vsel %vm809, %v4815, 0
        %v4832 = vsel %vm809, %v4816, 0
        %4834 = vmatprep.subr.mxu0 0.0
        %4835 = vmatpush1.msra.mxu0 0.0
        %4836 = vmatprep.subr.mxu0 0.0
        %4837 = vmatpush1.msra.mxu0 0.0
        %4838 = vmatprep.subr.mxu0 0.0
        %4839 = vmatpush1.msra.mxu0 0.0
        %4840 = vmatprep.subr.mxu0 0.0
        %4841 = vmatpush1.msra.mxu0 0.0
        %4842 = vmatprep.subr.mxu0 0.0
        %4843 = vmatpush1.msra.mxu0 0.0
        %4844 = vmatprep.subr.mxu0 0.0
        %4845 = vmatpush1.msra.mxu0 0.0
        %4846 = vmatprep.subr.mxu0 0.0
        %4847 = vmatpush1.msra.mxu0 0.0
        %4848 = vmatprep.subr.mxu0 0.0
        %4849 = vmatpush1.msra.mxu0 0.0
        %4850 = vmatprep.subr.mxu0 0.0
        %4851 = vmatpush1.msra.mxu0 0.0
        %4852 = vmatprep.subr.mxu0 0.0
        %4853 = vmatpush1.msra.mxu0 0.0
        %4854 = vmatprep.subr.mxu0 0.0
        %4855 = vmatpush1.msra.mxu0 0.0
        %4856 = vmatprep.subr.mxu0 0.0
        %4857 = vmatpush1.msra.mxu0 0.0
        %4858 = vmatprep.subr.mxu0 0.0
        %4859 = vmatpush1.msra.mxu0 %v4820
        %4860 = vmatprep.subr.mxu0 0.0
        %4861 = vmatpush1.msra.mxu0 %v4819
        %4862 = vmatprep.subr.mxu0 0.0
        %4863 = vmatpush1.msra.mxu0 %v4818
        %4864 = vmatprep.subr.mxu0 0.0
        %4865 = vmatpush1.msra.mxu0 %v4817
        %4866 = vmatprep.subr.mxu0 0.0
        %4867 = vmatpush2.msra.mxu0 0.0
        %4868 = vmatprep.subr.mxu0 0.0
        %4869 = vmatpush2.msra.mxu0 0.0
        %4870 = vmatprep.subr.mxu0 0.0
        %4871 = vmatpush2.msra.mxu0 0.0
        %4872 = vmatprep.subr.mxu0 0.0
        %4873 = vmatpush2.msra.mxu0 0.0
        %4874 = vmatprep.subr.mxu0 0.0
        %4875 = vmatpush2.msra.mxu0 0.0
        %4876 = vmatprep.subr.mxu0 0.0
        %4877 = vmatpush2.msra.mxu0 0.0
        %4878 = vmatprep.subr.mxu0 0.0
        %4879 = vmatpush2.msra.mxu0 0.0
        %4880 = vmatprep.subr.mxu0 0.0
        %4881 = vmatpush2.msra.mxu0 0.0
        %4882 = vmatprep.subr.mxu0 0.0
        %4883 = vmatpush2.msra.mxu0 0.0
        %4884 = vmatprep.subr.mxu0 0.0
        %4885 = vmatpush2.msra.mxu0 0.0
        %4886 = vmatprep.subr.mxu0 0.0
        %4887 = vmatpush2.msra.mxu0 0.0
        %4888 = vmatprep.subr.mxu0 0.0
        %4889 = vmatpush2.msra.mxu0 0.0
        %4890 = vmatprep.subr.mxu0 0.0
        %4891 = vmatpush2.msra.mxu0 0.0
        %4892 = vmatprep.subr.mxu0 0.0
        %4893 = vmatpush2.msra.mxu0 0.0
        %4894 = vmatprep.subr.mxu0 0.0
        %4895 = vmatpush2.msra.mxu0 0.0
        %4896 = vmatprep.subr.mxu0 0.0
        %4897 = vmatpush2.msra.mxu0 0.0
        %4898 = vmatprep.mubr.f32.mxu0 0.0
        %4899 = vmatmul.mubr.f32.gmra.mxu0 %v4829
        %v4900 = vpop.f32.mrf.mxu0
        %v4901 = vadd.f32 %v4826, %v4900
        %v4902 = vpop.f32.mrf.mxu0
        %4903 = vmatprep.mubr.f32.mxu0 0.0
        %4904 = vmatmul.mubr.f32.gmra.mxu0 %v4832
        %v4905 = vpop.f32.mrf.mxu0
        %v4906 = vadd.f32 %v4826, %v4905
        %v4907 = vpop.f32.mrf.mxu0
        %4908 = vdwg.mxu0
        %4909 = vst [vmem:[%s795] sm:$0xff] %v4901
        %4910 = vst [vmem:[%s795 + $0x8] sm:$0xff] %v4906
      $region84: #{transformer_forward.1} parent=75 // pred_fallthru
        _
      %p4911 = scmp.lt.s32.totalorder %s29, 1
      %s4912 = scalar_select %p4911, %s29, 1
      %s4913 = smul.addr %s4912, 2
      %s4914 = smul.addr %s4913, 8
      %s4915 = scalar_lea.vmem %s14, %s4914
      // Predicated region
      $region85: #{transformer_forward.1} parent=75 // pred_check
        %p4916 = pneg %p427
      $region86: #{transformer_forward.1} parent=75 // pred_check_branch
        %4918 = sbr.rel (%p4916) target = $region88
      $region87: #{transformer_forward.1} parent=75 // pred_region
        _
      $region88: #{transformer_forward.1} parent=75 // pred_fallthru
        _
    $region76: #{transformer_forward.1} parent=5 // pred_fallthru
      _
    %p4919 = scmp.le.s32.totalorder 2, %s20
    // Predicated region
    $region89: #{transformer_forward.1} parent=5 // pred_check
      %p4920 = pneg %p4919
    $region90: #{transformer_forward.1} parent=5 // pred_check_branch
      %4922 = sbr.rel (%p4920) target = $region92
    $region91: #{transformer_forward.1} parent=5 // pred_region
      %s4923 = ssub.s32 %s20, 2
      // Predicated region
      $region93: #{transformer_forward.1} parent=91 // pred_check
        %p4924 = pneg %p433
      $region94: #{transformer_forward.1} parent=91 // pred_check_branch
        %4926 = sbr.rel (%p4924) target = $region96
      $region95: #{transformer_forward.1} parent=91 // pred_region
        %p4927 = scmp.lt.s32.totalorder %s31, 1
        %s4928 = scalar_select %p4927, %s31, 1
        %s4929 = smul.addr %s4928, 2
        %s4930 = smul.addr %s4929, 8
        %s4931 = scalar_lea.vmem %s14, %s4930
      $region96: #{transformer_forward.1} parent=91 // pred_fallthru
        _
    $region92: #{transformer_forward.1} parent=5 // pred_fallthru
      _
  $region6: #{transformer_forward.1} parent=0 // loop_footer
    %s24 = sadd.s32 1, %s20
  $region7: #{transformer_forward.1} parent=0 // loop_footer_branch
    %19 = sbr.rel target = $region3
  $region8: #{transformer_forward.1} parent=0 // loop_exit
    _

</llo_original>
